<compile_context>
chip_gen: v5e
topology: v5e:2x2
jax: 0.10.0
libtpu: 0.0.40
codegen_flags: <defaults>
</compile_context>

<pallas_src>
import math
from functools import partial

import jax
import jax.numpy as jnp
from jax.experimental import pallas as pl
from jax.experimental.pallas import tpu as pltpu

_LANE = 128
_MAX_TM = 1024
_MAX_TK = 2048
_VMEM_BUDGET = 12 * 1024 * 1024   # conservative: fits v5e's 16 MiB default scoped VMEM


def _round_up(x, m):
    return ((x + m - 1) // m) * m


# ---------------------------------------------------------------------------
# Pallas kernel: tiled matmul, f32 accumulation, fused shift (+ optional ReLU).
# The BatchNorm scale is pre-folded into the weight columns by the caller.
# ---------------------------------------------------------------------------
def _mm_shift_kernel(x_ref, w_ref, b_ref, o_ref, acc_ref, *, relu):
    @pl.when(pl.program_id(1) == 0)
    def _():
        acc_ref[...] = jnp.zeros_like(acc_ref)

    acc_ref[...] += jnp.dot(x_ref[...], w_ref[...],
                            preferred_element_type=jnp.float32)

    @pl.when(pl.program_id(1) == pl.num_programs(1) - 1)
    def _():
        y = acc_ref[...] + b_ref[...]
        if relu:
            y = jnp.maximum(y, 0.0)
        o_ref[...] = y.astype(o_ref.dtype)


@partial(jax.jit, static_argnames=("relu", "out_dtype"))
def fused_matmul_shift(x, w, shift, *, relu=False, out_dtype=jnp.bfloat16):
    """y = maybe_relu(x @ w + shift).  x:(M,K) bf16, w:(K,Cp) bf16, shift:(Cp,) f32.
    Cp is a multiple of 128 (caller pads output channels -> lane-dense stores)."""
    M, K = x.shape
    Kw, Cp = w.shape
    assert K == Kw and Cp % _LANE == 0

    # K tiling (only kicks in for the big feature=512 configuration).
    if K > _MAX_TK:
        tk = 1024
        Kp = _round_up(K, tk)
        if Kp != K:  # zero-pad the reduction axis so every K block is full
            x = jnp.pad(x, ((0, 0), (0, Kp - K)))
            w = jnp.pad(w, ((0, Kp - K), (0, 0)))
        K = Kp
    else:
        tk = K

    # M tile: as large as possible within a conservative VMEM budget.
    tm = min(_MAX_TM, _round_up(M, 32))
    while tm > 32:
        vmem = (2 * tm * tk * 2        # double-buffered bf16 x tile
                + 2 * tk * Cp * 2      # double-buffered bf16 w tile
                + 2 * tm * Cp * 4      # double-buffered output tile
                + tm * Cp * 4)         # f32 accumulator scratch
        if vmem <= _VMEM_BUDGET:
            break
        tm = max(32, _round_up(tm // 2, 32))

    grid = (pl.cdiv(M, tm), K // tk)   # ragged last M block handled by Pallas
    out = pl.pallas_call(
        partial(_mm_shift_kernel, relu=relu),
        out_shape=jax.ShapeDtypeStruct((M, Cp), out_dtype),
        grid=grid,
        in_specs=[
            pl.BlockSpec((tm, tk), lambda mi, ki: (mi, ki)),
            pl.BlockSpec((tk, Cp), lambda mi, ki: (ki, 0)),
            pl.BlockSpec((1, Cp), lambda mi, ki: (0, 0)),
        ],
        out_specs=pl.BlockSpec((tm, Cp), lambda mi, ki: (mi, 0)),
        scratch_shapes=[pltpu.VMEM((tm, Cp), jnp.float32)],
        compiler_params=pltpu.CompilerParams(
            dimension_semantics=("parallel", "arbitrary")),
    )(x, w, shift.reshape(1, Cp))
    return out


# ---------------------------------------------------------------------------
# Conv3d / ConvTranspose3d via channel-last im2col + Pallas matmul
# ---------------------------------------------------------------------------
def conv3d(x, w, stride=(1, 1, 1), dilation=(1, 1, 1), padding=(0, 0, 0),
           bias=None, bn=None, relu=False, out_dtype=None):
    """PyTorch-semantics Conv3d on a channel-last (N,D,H,W,C) activation.
    w: (Cout, Cin, kD, kH, kW) (PyTorch layout).  Eval-mode BN + bias + ReLU fused."""
    N, D, H, W, C = x.shape
    Cout, Cin, kD, kH, kW = w.shape
    assert Cin == C
    if out_dtype is None:
        out_dtype = x.dtype
    pd, ph, pw = padding
    sd, sh, sw = stride
    dd, dh, dw = dilation
    xp = x if (pd, ph, pw) == (0, 0, 0) else jnp.pad(
        x, ((0, 0), (pd, pd), (ph, ph), (pw, pw), (0, 0)))
    Dp, Hp, Wp = D + 2 * pd, H + 2 * ph, W + 2 * pw
    Do = (Dp - dd * (kD - 1) - 1) // sd + 1
    Ho = (Hp - dh * (kH - 1) - 1) // sh + 1
    Wo = (Wp - dw * (kW - 1) - 1) // sw + 1

    taps = kD * kH * kW
    slices = []
    for kd in range(kD):
        for kh in range(kH):
            for kw_ in range(kW):
                d0, h0, w0 = kd * dd, kh * dh, kw_ * dw
                slices.append(xp[:,
                                 d0:d0 + (Do - 1) * sd + 1:sd,
                                 h0:h0 + (Ho - 1) * sh + 1:sh,
                                 w0:w0 + (Wo - 1) * sw + 1:sw, :])
    patches = slices[0] if taps == 1 else jnp.concatenate(slices, axis=-1)
    Ktot = taps * C
    pm = patches.reshape(N * Do * Ho * Wo, Ktot).astype(jnp.bfloat16)

    # Weight -> (taps*C, Cout), rows ordered tap-major / channel-minor to match pm.
    wm = jnp.transpose(w, (2, 3, 4, 1, 0)).reshape(Ktot, Cout).astype(jnp.float32)

    eps = 1e-5
    if bn is not None:
        scale = bn["gamma"] / jnp.sqrt(bn["var"] + eps)
        shift = bn["beta"] - bn["mean"] * scale
        if bias is not None:
            shift = shift + bias * scale
        wm = wm * scale[None, :]          # fold BN scale into weight columns
    else:
        shift = (bias.astype(jnp.float32) if bias is not None
                 else jnp.zeros((Cout,), jnp.float32))

    Cp = _round_up(Cout, _LANE)           # lane-dense output channels
    if Cp != Cout:
        wm = jnp.pad(wm, ((0, 0), (0, Cp - Cout)))
        shift = jnp.pad(shift, ((0, Cp - Cout),))
    wm = wm.astype(jnp.bfloat16)

    out2d = fused_matmul_shift(pm, wm, shift, relu=relu, out_dtype=out_dtype)
    out = out2d.reshape(N, Do, Ho, Wo, Cp)
    if Cp != Cout:
        out = out[..., :Cout]
    return out


def convtranspose3d(x, w, bias, bn=None, relu=False, stride=2, padding=1,
                    output_padding=1, out_dtype=None):
    """PyTorch ConvTranspose3d (k=3, s=2, p=1, out_pad=1), channel-last activations.
    w: (Cin, Cout, kD, kH, kW)."""
    # TODO(synk): a sub-pixel (phase-decomposed) formulation would avoid the ~8x
    # zero-dilated im2col; kept as zero-dilation + conv for clarity/correctness.
    N, D, H, W, C = x.shape
    Cin, Cout, kD, kH, kW = w.shape
    assert Cin == C
    Dd, Hd, Wd = (D - 1) * stride + 1, (H - 1) * stride + 1, (W - 1) * stride + 1
    xd = jnp.zeros((N, Dd, Hd, Wd, C), x.dtype)
    xd = xd.at[:, ::stride, ::stride, ::stride, :].set(x)
    lo = kD - 1 - padding
    hi = lo + output_padding
    xd = jnp.pad(xd, ((0, 0), (lo, hi), (lo, hi), (lo, hi), (0, 0)))
    wt = jnp.flip(jnp.transpose(w, (1, 0, 2, 3, 4)), axis=(2, 3, 4))  # (Cout,Cin,k,k,k)
    return conv3d(xd, wt, bias=bias, bn=bn, relu=relu, out_dtype=out_dtype)


# ---------------------------------------------------------------------------
# Plain-JAX glue ops (channel-last): pooling / interpolation / grid_sample
# ---------------------------------------------------------------------------
def avgpool3d(x, k):
    """AvgPool3d with stride == kernel, no padding (all uses in this module)."""
    N, D, H, W, C = x.shape
    kd, kh, kw = k
    x = x.reshape(N, D // kd, kd, H // kh, kh, W // kw, kw, C)
    return x.mean(axis=(2, 4, 6))


def interp_nearest(x, size):
    """F.interpolate(mode='nearest'): src = floor(dst * in/out)."""
    N, D, H, W, C = x.shape
    Do, Ho, Wo = size
    x = jnp.take(x, (jnp.arange(Do) * D) // Do, axis=1)
    x = jnp.take(x, (jnp.arange(Ho) * H) // Ho, axis=2)
    x = jnp.take(x, (jnp.arange(Wo) * W) // Wo, axis=3)
    return x


def _lin_interp_axis(x, out_len, axis):
    in_len = x.shape[axis]
    if in_len == out_len:
        return x
    if out_len == 1:
        pos = jnp.zeros((1,), jnp.float32)
    else:
        pos = jnp.arange(out_len, dtype=jnp.float32) * ((in_len - 1) / (out_len - 1))
    lo = jnp.clip(jnp.floor(pos).astype(jnp.int32), 0, in_len - 1)
    hi = jnp.clip(lo + 1, 0, in_len - 1)
    frac = pos - lo.astype(jnp.float32)
    xlo = jnp.take(x, lo, axis=axis).astype(jnp.float32)
    xhi = jnp.take(x, hi, axis=axis).astype(jnp.float32)
    shape = [1] * x.ndim
    shape[axis] = out_len
    frac = frac.reshape(shape)
    return xlo * (1.0 - frac) + xhi * frac


def interp_trilinear_ac(x, size):
    """F.interpolate(mode='trilinear', align_corners=True) — separable per-axis."""
    dt = x.dtype
    y = _lin_interp_axis(x, size[0], 1)
    y = _lin_interp_axis(y, size[1], 2)
    y = _lin_interp_axis(y, size[2], 3)
    return y.astype(dt)


def grid_sample_3d(x, grid):
    """F.grid_sample (5-D trilinear, align_corners=True, padding_mode='zeros').
    x: channel-last (N,D,H,W,C); grid: (N,Do,Ho,Wo,3) with (x->W, y->H, z->D)."""
    N, D, H, W, C = x.shape
    grid = grid.astype(jnp.float32)
    gx = (grid[..., 0] + 1.0) * 0.5 * (W - 1)
    gy = (grid[..., 1] + 1.0) * 0.5 * (H - 1)
    gz = (grid[..., 2] + 1.0) * 0.5 * (D - 1)
    x0 = jnp.floor(gx); x1 = x0 + 1.0
    y0 = jnp.floor(gy); y1 = y0 + 1.0
    z0 = jnp.floor(gz); z1 = z0 + 1.0
    wx1 = gx - x0; wx0 = 1.0 - wx1
    wy1 = gy - y0; wy0 = 1.0 - wy1
    wz1 = gz - z0; wz0 = 1.0 - wz1
    xf = x.astype(jnp.float32)
    b = jnp.arange(N).reshape(N, 1, 1, 1)

    def sample(zi, yi, xi):
        inb = ((zi >= 0) & (zi <= D - 1) & (yi >= 0) & (yi <= H - 1) &
               (xi >= 0) & (xi <= W - 1))
        zc = jnp.clip(zi, 0, D - 1).astype(jnp.int32)
        yc = jnp.clip(yi, 0, H - 1).astype(jnp.int32)
        xc = jnp.clip(xi, 0, W - 1).astype(jnp.int32)
        v = xf[b, zc, yc, xc]  # (N, Do, Ho, Wo, C)
        return v * inb[..., None].astype(jnp.float32)

    out = (sample(z0, y0, x0) * (wz0 * wy0 * wx0)[..., None] +
           sample(z0, y0, x1) * (wz0 * wy0 * wx1)[..., None] +
           sample(z0, y1, x0) * (wz0 * wy1 * wx0)[..., None] +
           sample(z0, y1, x1) * (wz0 * wy1 * wx1)[..., None] +
           sample(z1, y0, x0) * (wz1 * wy0 * wx0)[..., None] +
           sample(z1, y0, x1) * (wz1 * wy0 * wx1)[..., None] +
           sample(z1, y1, x0) * (wz1 * wy1 * wx0)[..., None] +
           sample(z1, y1, x1) * (wz1 * wy1 * wx1)[..., None])
    return out.astype(x.dtype)


def flow_warp(x, flow, size):
    """STAGE3.flow_warp semantics (identity grid with channels (d, w, h) + flow/norm)."""
    out_h, out_w, out_d = size
    N = x.shape[0]
    norm = jnp.array([out_d, out_w, out_h], dtype=jnp.float32)
    h_lin = jnp.linspace(-1.0, 1.0, out_h)
    w_lin = jnp.linspace(-1.0, 1.0, out_w)
    d_lin = jnp.linspace(-1.0, 1.0, out_d)
    h_grid = jnp.broadcast_to(h_lin[:, None, None], (out_h, out_w, out_d))
    w_grid = jnp.broadcast_to(w_lin[None, :, None], (out_h, out_w, out_d))
    d_grid = jnp.broadcast_to(d_lin[None, None, :], (out_h, out_w, out_d))
    grid = jnp.stack([d_grid, w_grid, h_grid], axis=-1)
    grid = jnp.broadcast_to(grid[None], (N, out_h, out_w, out_d, 3))
    grid = grid + flow.astype(jnp.float32) / norm   # flow is already channel-last
    return grid_sample_3d(x, grid)


# ---------------------------------------------------------------------------
# Deterministic parameter construction
# ---------------------------------------------------------------------------
class ParamGen:
    def __init__(self, seed=0):
        self._key = jax.random.PRNGKey(seed)
        self._count = 0

    def _next(self):
        self._count += 1
        return jax.random.fold_in(self._key, self._count)

    def conv(self, cin, cout, k):
        fan_in = cin * k[0] * k[1] * k[2]
        std = math.sqrt(2.0 / fan_in)
        return std * jax.random.normal(self._next(), (cout, cin, *k), jnp.float32)

    def convT(self, cin, cout, k):
        fan_in = cin * k[0] * k[1] * k[2]
        std = math.sqrt(2.0 / fan_in)
        return std * jax.random.normal(self._next(), (cin, cout, *k), jnp.float32)

    def bias(self, c):
        return 0.01 * jax.random.normal(self._next(), (c,), jnp.float32)

    def bn(self, c):
        k = self._next()
        return dict(
            gamma=1.0 + 0.1 * jax.random.normal(jax.random.fold_in(k, 0), (c,), jnp.float32),
            beta=0.1 * jax.random.normal(jax.random.fold_in(k, 1), (c,), jnp.float32),
            mean=0.05 * jax.random.normal(jax.random.fold_in(k, 2), (c,), jnp.float32),
            var=1.0 + 0.1 * jnp.abs(jax.random.normal(jax.random.fold_in(k, 3), (c,), jnp.float32)),
        )


def make_bottleneck(pg, inplanes, planes, stride=1, dilation=(1, 1, 1),
                    expansion=4, downsample_out=None):
    p = {"stride": stride, "dilation": dilation, "expansion": expansion}
    p["conv1"] = pg.conv(inplanes, planes, (1, 1, 1)); p["bn1"] = pg.bn(planes)
    p["conv2"] = pg.conv(planes, planes, (1, 1, 3)); p["bn2"] = pg.bn(planes)
    p["conv3"] = pg.conv(planes, planes, (1, 3, 1)); p["bn3"] = pg.bn(planes)
    p["conv4"] = pg.conv(planes, planes, (3, 1, 1)); p["bn4"] = pg.bn(planes)
    p["conv5"] = pg.conv(planes, planes * expansion, (1, 1, 1)); p["bn5"] = pg.bn(planes * expansion)
    if downsample_out is not None:
        p["downsample"] = dict(conv=pg.conv(inplanes, downsample_out, (1, 1, 1)),
                               bn=pg.bn(downsample_out))
    if stride != 1:
        for name in ("downsample2", "downsample3", "downsample4"):
            p[name] = dict(conv=pg.conv(planes, planes, (1, 1, 1)), bn=pg.bn(planes))
    return p


def make_stage2_params(pg, class_num, feature):
    f4, f2 = feature // 4, feature // 2
    p = {}
    p["semantic_layer1"] = [
        make_bottleneck(pg, feature, f4, stride=2, expansion=4, downsample_out=feature),
        make_bottleneck(pg, feature, f4, dilation=(1, 1, 1)),
        make_bottleneck(pg, feature, f4, dilation=(2, 2, 2)),
        make_bottleneck(pg, feature, f4, dilation=(3, 3, 3)),
    ]
    p["semantic_layer2"] = [
        make_bottleneck(pg, feature, f4, stride=2, expansion=8, downsample_out=feature * 2),
        make_bottleneck(pg, feature * 2, f2, dilation=(1, 1, 1)),
        make_bottleneck(pg, feature * 2, f2, dilation=(2, 2, 2)),
        make_bottleneck(pg, feature * 2, f2, dilation=(3, 3, 3)),
    ]
    p["cls0"] = dict(w=pg.convT(feature * 2, feature, (3, 3, 3)), b=pg.bias(feature), bn=pg.bn(feature))
    p["cls1"] = dict(w=pg.convT(feature, feature, (3, 3, 3)), b=pg.bias(feature), bn=pg.bn(feature))
    # classify_semantic[2], classify_semantic[3] are unused in STAGE2.forward — omitted.
    p["oper_tsdf"] = [dict(conv=pg.conv(1, 3, (3, 3, 3)), bn=pg.bn(3)),
                      dict(conv=pg.conv(3, 64, (3, 3, 3)), bn=pg.bn(64)),
                      dict(conv=pg.conv(64, feature, (3, 3, 3)), bn=pg.bn(feature))]
    p["oper_raw"] = [dict(conv=pg.conv(12, 3, (3, 3, 3)), bn=pg.bn(3)),
                     dict(conv=pg.conv(3, 64, (3, 3, 3)), bn=pg.bn(64)),
                     dict(conv=pg.conv(64, feature, (3, 3, 3)), bn=pg.bn(feature))]
    return p


def make_stage3_params(pg, class_num, feature):
    f4 = feature // 4
    p = {}
    p["down"] = dict(conv=pg.conv(feature, feature, (3, 3, 3)), bn=pg.bn(feature))
    p["flow_make"] = pg.conv(feature, 3, (3, 3, 3))
    p["sketch_refine_conv"] = pg.conv(feature, feature, (3, 3, 3))
    p["sketch_refine_bns"] = [make_bottleneck(pg, feature, f4, dilation=(1, 1, 1)),
                              make_bottleneck(pg, feature, f4, dilation=(2, 2, 2))]
    p["refine_seg"] = [make_bottleneck(pg, feature, f4, dilation=(1, 1, 1)),
                       make_bottleneck(pg, feature, f4, dilation=(2, 2, 2)),
                       make_bottleneck(pg, feature, f4, dilation=(3, 3, 3))]
    p["final_out"] = dict(w=pg.conv(feature, class_num, (1, 1, 1)), b=pg.bias(class_num))
    p["body_out"] = make_bottleneck(pg, feature, f4, dilation=(1, 1, 1))
    p["sketch_out"] = pg.conv(feature, 2, (3, 3, 3))
    return p


def make_network_params(seed, class_num, feature):
    pg = ParamGen(seed)
    return {"stage2": make_stage2_params(pg, class_num, feature),
            "stage3": make_stage3_params(pg, class_num, feature)}


# ---------------------------------------------------------------------------
# Forward passes (activations are channel-last bf16 internally)
# ---------------------------------------------------------------------------
def bottleneck_forward(x, p):
    stride = p["stride"]
    d0, d1, d2 = p["dilation"]
    residual = x
    out1 = conv3d(x, p["conv1"], bn=p["bn1"], relu=True)
    out2 = conv3d(out1, p["conv2"], stride=(1, 1, stride), dilation=(1, 1, d0),
                  padding=(0, 0, d0), bn=p["bn2"])
    out2_relu = jnp.maximum(out2, 0.0)
    out3 = conv3d(out2_relu, p["conv3"], stride=(1, stride, 1), dilation=(1, d1, 1),
                  padding=(0, d1, 0), bn=p["bn3"])
    if stride != 1:
        out2 = conv3d(avgpool3d(out2, (1, stride, 1)), p["downsample2"]["conv"],
                      bn=p["downsample2"]["bn"])
    out3 = out3 + out2
    out3_relu = jnp.maximum(out3, 0.0)
    out4 = conv3d(out3_relu, p["conv4"], stride=(stride, 1, 1), dilation=(d2, 1, 1),
                  padding=(d2, 0, 0), bn=p["bn4"])
    if stride != 1:
        out2 = conv3d(avgpool3d(out2, (stride, 1, 1)), p["downsample3"]["conv"],
                      bn=p["downsample3"]["bn"])
        out3 = conv3d(avgpool3d(out3, (stride, 1, 1)), p["downsample4"]["conv"],
                      bn=p["downsample4"]["bn"])
    out4 = out4 + out2 + out3
    out4_relu = jnp.maximum(out4, 0.0)
    out5 = conv3d(out4_relu, p["conv5"], bn=p["bn5"])
    if "downsample" in p:
        residual = conv3d(avgpool3d(x, (2, 2, 2)), p["downsample"]["conv"],
                          bn=p["downsample"]["bn"])
    return jnp.maximum(out5 + residual, 0.0)


def _oper_forward(x, layers):
    for lyr in layers:
        x = conv3d(x, lyr["conv"], padding=(1, 1, 1), bn=lyr["bn"], relu=True)
    return x


def stage2_forward(p, raw, tsdf):
    # The reference hard-codes interpolate sizes [30,18,30]/[60,36,60], which equal
    # (input//2, input) for its canonical 60x36x60 input; derived here from the
    # input so the identical forward runs at smaller demo sizes.
    full_size = raw.shape[1:4]
    mid_size = tuple(s // 2 for s in full_size)
    edge_raw = _oper_forward(raw, p["oper_raw"])
    edge_tsdf = _oper_forward(tsdf, p["oper_tsdf"])
    seg_fea = edge_tsdf + edge_raw
    h = seg_fea
    for bp in p["semantic_layer1"]:
        h = bottleneck_forward(h, bp)
    semantic1 = h + interp_nearest(seg_fea, mid_size)
    h = semantic1
    for bp in p["semantic_layer2"]:
        h = bottleneck_forward(h, bp)
    semantic2 = h
    up_sem1 = convtranspose3d(semantic2, p["cls0"]["w"], p["cls0"]["b"],
                              bn=p["cls0"]["bn"], relu=True)
    up_sem1 = up_sem1 + semantic1
    up_sem2 = convtranspose3d(up_sem1, p["cls1"]["w"], p["cls1"]["b"],
                              bn=p["cls1"]["bn"], relu=True)
    up_sem2 = up_sem2 + interp_trilinear_ac(up_sem1, full_size)
    return up_sem2


def stage3_forward(p, x):
    size = x.shape[1:4]
    # seperate_sketch_body
    seg_down = conv3d(x, p["down"]["conv"], stride=(2, 2, 2), padding=(1, 1, 1),
                      bn=p["down"]["bn"], relu=True)
    seg_down = interp_trilinear_ac(seg_down, size)
    flow = conv3d(seg_down, p["flow_make"], padding=(1, 1, 1))
    seg_flow_warp = flow_warp(x, flow, size)
    pred_sketch = x - seg_flow_warp
    body, sketch = seg_flow_warp, pred_sketch

    sketch = conv3d(sketch, p["sketch_refine_conv"], padding=(1, 1, 1))
    for bp in p["sketch_refine_bns"]:
        sketch = bottleneck_forward(sketch, bp)
    seg_out = sketch + body
    h = seg_out
    for bp in p["refine_seg"]:
        h = bottleneck_forward(h, bp)
    # Dropout3d(0.1) is the identity in eval mode.
    seg_final = conv3d(h, p["final_out"]["w"], bias=p["final_out"]["b"],
                       out_dtype=jnp.float32)
    seg_body = bottleneck_forward(body, p["body_out"])
    sketch_out = conv3d(sketch, p["sketch_out"], padding=(1, 1, 1),
                        out_dtype=jnp.float32)
    return seg_final, seg_body, sketch_out


def network_warp_forward(params, img, depth_mapping_3d, tsdf, sketch_gt, seg_2d):
    # img, depth_mapping_3d, sketch_gt are unused by Network_warp.forward (matches PyTorch).
    to_cl = lambda t: jnp.transpose(t, (0, 2, 3, 4, 1)).astype(jnp.bfloat16)   # NCDHW -> NDHWC
    to_cf = lambda t: jnp.transpose(t, (0, 4, 1, 2, 3)).astype(jnp.float32)    # NDHWC -> NCDHW
    up_sem2 = stage2_forward(params["stage2"], to_cl(seg_2d), to_cl(tsdf))
    seg_final, seg_body, pred_sketch = stage3_forward(params["stage3"], up_sem2)
    return {"pred_sketch_refine": to_cf(pred_sketch),
            "pred_semantic": to_cf(seg_final),
            "pred_body": to_cf(seg_body)}


# ---------------------------------------------------------------------------
if __name__ == "__main__":
    # The reference module's hard-coded interpolate sizes correspond to a
    # 60x36x60 input volume; for a fast self-contained demo we run the same
    # forward at a proportionally smaller 16x8x16 volume (divisible by 4).
    N = 1
    FEATURE = 16     # 'feature' (512 in the original config)
    CLASS_NUM = 12
    D, H, W = 16, 8, 16

    key = jax.random.PRNGKey(0)
    k1, k2, k3 = jax.random.split(key, 3)
    seg_2d = jax.random.normal(k1, (N, 12, D, H, W), jnp.float32)   # 'raw' input to STAGE2
    tsdf = jax.random.normal(k2, (N, 1, D, H, W), jnp.float32)
    img = jax.random.normal(k3, (N, 3, 8, 8), jnp.float32)          # unused in forward
    depth_mapping_3d = jnp.zeros((N, D * H * W), jnp.int32)         # unused in forward
    sketch_gt = jnp.zeros((N, 1, D, H, W), jnp.float32)             # unused in forward

    params = make_network_params(0, CLASS_NUM, FEATURE)

    results = network_warp_forward(params, img, depth_mapping_3d, tsdf, sketch_gt, seg_2d)
    for v in results.values():
        jax.block_until_ready(v)

    assert results["pred_semantic"].shape == (N, CLASS_NUM, D, H, W)
    assert results["pred_body"].shape == (N, FEATURE, D, H, W)
    assert results["pred_sketch_refine"].shape == (N, 2, D, H, W)
    print("KERNEL_OK")
</pallas_src>

<mosaic_0001>
module attributes {stable_mosaic.version = 11 : i64} {
  func.func @_mm_shift_kernel(%arg0: i32, %arg1: i32, %arg2: memref<1024x324xbf16, #tpu.memory_space<vmem>>, %arg3: memref<324x128xbf16, #tpu.memory_space<vmem>>, %arg4: memref<1x128xf32, #tpu.memory_space<vmem>>, %arg5: memref<1024x128xbf16, #tpu.memory_space<vmem>>, %arg6: memref<1024x128xf32, #tpu.memory_space<vmem>>) attributes {dimension_semantics = [#tpu.dimension_semantics<parallel>, #tpu.dimension_semantics<arbitrary>], iteration_bounds = array<i64: 2, 1>, scalar_prefetch = 0 : i64, scratch_operands = 1 : i64, tpu.core_type = #tpu.core_type<tc>, window_params = [{transform_indices = @transform_0, window_bounds = array<i64: 1024, 324>}, {transform_indices = @transform_1, window_bounds = array<i64: 324, 128>}, {pipeline_mode = #tpu.pipeline_mode<synchronous>, transform_indices = @transform_2, window_bounds = array<i64: 1, 128>}, {transform_indices = @transform_3, window_bounds = array<i64: 1024, 128>}]} {
    %c0_i32 = arith.constant 0 : i32
    %0 = arith.cmpi eq, %arg1, %c0_i32 : i32
    %1 = arith.extui %0 : i1 to i32
    %c0_i32_0 = arith.constant 0 : i32
    %2 = arith.cmpi ne, %1, %c0_i32_0 : i32
    scf.if %2 {
      %cst_10 = arith.constant 0.000000e+00 : f32
      %12 = vector.broadcast %cst_10 : f32 to vector<1024x128xf32>
      %c0_11 = arith.constant 0 : index
      %c0_12 = arith.constant 0 : index
      %13 = vector.load %arg6[%c0_11, %c0_12] : memref<1024x128xf32, #tpu.memory_space<vmem>>, vector<1024x128xf32>
      tpu.vector_store %arg6[%c0_11, %c0_12], %12 {strides = array<i32>} : memref<1024x128xf32, #tpu.memory_space<vmem>>, vector<1024x128xf32>,
    } else {
    }
    %c0 = arith.constant 0 : index
    %c0_1 = arith.constant 0 : index
    %3 = vector.load %arg6[%c0, %c0_1] : memref<1024x128xf32, #tpu.memory_space<vmem>>, vector<1024x128xf32>
    %c0_2 = arith.constant 0 : index
    %c0_3 = arith.constant 0 : index
    %4 = vector.load %arg2[%c0_2, %c0_3] : memref<1024x324xbf16, #tpu.memory_space<vmem>>, vector<1024x324xbf16>
    %c0_4 = arith.constant 0 : index
    %c0_5 = arith.constant 0 : index
    %5 = vector.load %arg3[%c0_4, %c0_5] : memref<324x128xbf16, #tpu.memory_space<vmem>>, vector<324x128xbf16>
    %cst = arith.constant dense<0.000000e+00> : vector<1024x128xf32>
    %6 = tpu.matmul %4, %5, %cst {dimension_numbers = #tpu.dot_dimension_numbers<[1], [0], [0], [1], [0, 0, 1, 1], [], []>} : vector<1024x324xbf16>, vector<324x128xbf16>, vector<1024x128xf32> -> vector<1024x128xf32>
    %7 = arith.addf %3, %6 : vector<1024x128xf32>
    %c0_6 = arith.constant 0 : index
    %c0_7 = arith.constant 0 : index
    %8 = vector.load %arg6[%c0_6, %c0_7] : memref<1024x128xf32, #tpu.memory_space<vmem>>, vector<1024x128xf32>
    tpu.vector_store %arg6[%c0_6, %c0_7], %7 {strides = array<i32>} : memref<1024x128xf32, #tpu.memory_space<vmem>>, vector<1024x128xf32>,
    %c0_i32_8 = arith.constant 0 : i32
    %9 = arith.cmpi eq, %arg1, %c0_i32_8 : i32
    %10 = arith.extui %9 : i1 to i32
    %c0_i32_9 = arith.constant 0 : i32
    %11 = arith.cmpi ne, %10, %c0_i32_9 : i32
    scf.if %11 {
      %c0_10 = arith.constant 0 : index
      %c0_11 = arith.constant 0 : index
      %12 = vector.load %arg6[%c0_10, %c0_11] : memref<1024x128xf32, #tpu.memory_space<vmem>>, vector<1024x128xf32>
      %c0_12 = arith.constant 0 : index
      %c0_13 = arith.constant 0 : index
      %13 = vector.load %arg4[%c0_12, %c0_13] : memref<1x128xf32, #tpu.memory_space<vmem>>, vector<1x128xf32>
      %14 = vector.broadcast %13 : vector<1x128xf32> to vector<1024x128xf32>
      %15 = arith.addf %12, %14 : vector<1024x128xf32>
      %cst_14 = arith.constant 0.000000e+00 : f32
      %16 = vector.broadcast %cst_14 : f32 to vector<1024x128xf32>
      %17 = arith.maximumf %15, %16 : vector<1024x128xf32>
      %18 = arith.truncf %17 : vector<1024x128xf32> to vector<1024x128xbf16>
      %c0_15 = arith.constant 0 : index
      %c0_16 = arith.constant 0 : index
      %19 = vector.load %arg5[%c0_15, %c0_16] : memref<1024x128xbf16, #tpu.memory_space<vmem>>, vector<1024x128xbf16>
      tpu.vector_store %arg5[%c0_15, %c0_16], %18 {strides = array<i32>} : memref<1024x128xbf16, #tpu.memory_space<vmem>>, vector<1024x128xbf16>,
    } else {
    }
    return
  }
  func.func @transform_0(%arg0: i32, %arg1: i32) -> (i32, i32) {
    %c0_i32 = arith.constant 0 : i32
    return %arg0, %arg1 : i32, i32
  }
  func.func @transform_1(%arg0: i32, %arg1: i32) -> (i32, i32) {
    %c0_i32 = arith.constant 0 : i32
    %c0_i32_0 = arith.constant 0 : i32
    return %arg1, %c0_i32 : i32, i32
  }
  func.func @transform_2(%arg0: i32, %arg1: i32) -> (i32, i32) {
    %c0_i32 = arith.constant 0 : i32
    %c0_i32_0 = arith.constant 0 : i32
    %c0_i32_1 = arith.constant 0 : i32
    return %c0_i32, %c0_i32_0 : i32, i32
  }
  func.func @transform_3(%arg0: i32, %arg1: i32) -> (i32, i32) {
    %c0_i32 = arith.constant 0 : i32
    %c0_i32_0 = arith.constant 0 : i32
    return %arg0, %c0_i32 : i32, i32
  }
}

</mosaic_0001>

<llo_original>
// kernel: fused_matmul_shift.1
$region0: #{fused_matmul_shift.1}
  #allocation0 [shape = 'u32[]', space=smem, size = 0x4, offset = 0x4, fixed_abs, tag = 'smem constant byte address 0x4 - core index']
  #allocation1 [shape = 'u32[72,128]{1,0:T(1,128)}', space=vmem, size = 0x9000, scoped, tag = 'internal scratch']
  #allocation2 [shape = 'f32[1024,128]{1,0:T(8,128)}', space=vmem, size = 0x80000, scoped, tag = 'scratch operand']
  %s0 = inlined_call_operand.vmem [shape: bf16[2048,324], index: 0, kind: input, shape index: {}]
  %s1 = inlined_call_operand.vmem [shape: bf16[324,128], index: 1, kind: input, shape index: {}]
  %s2 = inlined_call_operand.vmem [shape: f32[1,128], index: 2, kind: input, shape index: {}]
  %s3 = inlined_call_operand.hbm [shape: bf16[2048,128], index: 3, kind: output, shape index: {}]
  %s4 = sld [smem:[#allocation0]]
  $region53: #{fused_matmul_shift.1} parent=0
    _
  %s6 = ssub.s32 1, %s4
  %s7 = scalar_select 0, %s6, %s4
  $region1: #{fused_matmul_shift.1} parent=0
    #allocation3 [shape = 'u8[524288]{0}', space=vmem, size = 0x80000, scoped, tag = 'output window, operand 0']
    #allocation4 [shape = 's32[2]{0}', space=sflag, size = 0x8, scoped, tag = 'scoped memory for fused_matmul_shift.1']
    %8 = vsyncpa [#allocation4], 0
    %s9 = scalar_lea.sflag [#allocation4], 1
    %10 = vsyncpa %s9, 0
    loop: start=0, step=1, limit=4
    $region2: #{fused_matmul_shift.1} parent=1 // loop_pre_header
      _
    $region3: #{fused_matmul_shift.1} parent=1 // loop_header
      %s12 = sphi 0, %s16
      %p13 = scmp.ge.s32.totalorder %s12, 4
      %s19 = sphi 0, %s31
      %s20 = sphi 0, %s27
      %s21 = sphi 0, %s19
      %s22 = sphi 0, %s20
      %s23 = sphi 0, %s21
      %s24 = sphi 0, %s22
      %s36 = sphi 0, %s38
      %s39 = sphi 0, %s36
      %s40 = sphi 0, %s39
      %s56 = sphi 0, %s40
      %s62 = sphi 0, %s64
      %s65 = sphi 0, %s62
      %s66 = sphi 0, %s65
      %s82 = sphi 0, %s66
      %s86 = sphi 0, %s86
      %s88 = sphi 0, %s86
      %s89 = sphi 0, %s88
      %s103 = sphi 0, %s89
      %s109 = sphi 0, %s111
      %s112 = sphi 0, %s109
      %s113 = sphi 0, %s112
      %s129 = sphi 0, %s113
    $region4: #{fused_matmul_shift.1} parent=1 // loop_header_branch
      %15 = sbr.rel (%p13) target = $region8
    $region5: #{fused_matmul_shift.1} parent=1 // loop_body
      %s17 = ssub.s32 %s12, 1
      %s18 = ssub.s32 %s12, 2
      %s25 = sadd.s32 1, %s20
      %p26 = scmp.ge.s32.totalorder %s25, 1
      %s27 = scalar_select %p26, 0, %s25
      %s28 = sadd.s32 1, %s19
      %s29 = scalar_select %p26, %s28, %s19
      %p30 = scmp.ge.s32.totalorder %s29, 2
      %s31 = scalar_select %p30, 0, %s29
      %s32 = ssub.s32 %s19, %s31
      %s33 = ssub.s32 %s20, %s27
      %s34 = sor.u32 %s32, %s33
      %p35 = scmp.eq.s32.totalorder %s34, 0
      %s37 = sadd.s32 %s36, 1
      %s38 = scalar_select %p35, %s36, %s37
      %p41 = pneg %p35
      %p42 = scmp.eq.s32.totalorder %s12, 1
      %p43 = por %p41, %p42
      %p44 = scmp.ne.s32.totalorder %s36, %s39
      %p45 = scmp.eq.s32.totalorder %s12, 0
      %p46 = por %p44, %p45
      %p47 = scmp.ne.s32.totalorder %s36, %s39
      %p48 = scmp.eq.s32.totalorder %s17, 1
      %p49 = por %p47, %p48
      %p50 = scmp.ne.s32.totalorder %s39, %s40
      %p51 = scmp.eq.s32.totalorder %s17, 0
      %p52 = por %p50, %p51
      %p53 = scmp.ne.s32.totalorder %s39, %s40
      %p54 = scmp.eq.s32.totalorder %s18, 1
      %p55 = por %p53, %p54
      %p57 = scmp.ne.s32.totalorder %s40, %s56
      %p58 = scmp.eq.s32.totalorder %s18, 0
      %p59 = por %p57, %p58
      %s60 = ssub.s32 %s20, %s27
      %p61 = scmp.eq.s32.totalorder %s60, 0
      %s63 = sadd.s32 %s62, 1
      %s64 = scalar_select %p61, %s62, %s63
      %p67 = pneg %p61
      %p68 = scmp.eq.s32.totalorder %s12, 1
      %p69 = por %p67, %p68
      %p70 = scmp.ne.s32.totalorder %s62, %s65
      %p71 = scmp.eq.s32.totalorder %s12, 0
      %p72 = por %p70, %p71
      %p73 = scmp.ne.s32.totalorder %s62, %s65
      %p74 = scmp.eq.s32.totalorder %s17, 1
      %p75 = por %p73, %p74
      %p76 = scmp.ne.s32.totalorder %s65, %s66
      %p77 = scmp.eq.s32.totalorder %s17, 0
      %p78 = por %p76, %p77
      %p79 = scmp.ne.s32.totalorder %s65, %s66
      %p80 = scmp.eq.s32.totalorder %s18, 1
      %p81 = por %p79, %p80
      %p83 = scmp.ne.s32.totalorder %s66, %s82
      %p84 = scmp.eq.s32.totalorder %s18, 0
      %p85 = por %p83, %p84
      %s87 = sadd.s32 %s86, 1
      %p90 = scmp.eq.s32.totalorder %s12, 1
      %p91 = scmp.ne.s32.totalorder %s86, %s88
      %p92 = scmp.eq.s32.totalorder %s12, 0
      %p93 = por %p91, %p92
      %p94 = scmp.ne.s32.totalorder %s86, %s88
      %p95 = scmp.eq.s32.totalorder %s17, 1
      %p96 = por %p94, %p95
      %p97 = scmp.ne.s32.totalorder %s88, %s89
      %p98 = scmp.eq.s32.totalorder %s17, 0
      %p99 = por %p97, %p98
      %p100 = scmp.ne.s32.totalorder %s88, %s89
      %p101 = scmp.eq.s32.totalorder %s18, 1
      %p102 = por %p100, %p101
      %p104 = scmp.ne.s32.totalorder %s89, %s103
      %p105 = scmp.eq.s32.totalorder %s18, 0
      %p106 = por %p104, %p105
      %s107 = ssub.s32 %s19, %s31
      %p108 = scmp.eq.s32.totalorder %s107, 0
      %s110 = sadd.s32 %s109, 1
      %s111 = scalar_select %p108, %s109, %s110
      %p114 = pneg %p108
      %p115 = scmp.eq.s32.totalorder %s12, 1
      %p116 = por %p114, %p115
      %p117 = scmp.ne.s32.totalorder %s109, %s112
      %p118 = scmp.eq.s32.totalorder %s12, 0
      %p119 = por %p117, %p118
      %p120 = scmp.ne.s32.totalorder %s109, %s112
      %p121 = scmp.eq.s32.totalorder %s17, 1
      %p122 = por %p120, %p121
      %p123 = scmp.ne.s32.totalorder %s112, %s113
      %p124 = scmp.eq.s32.totalorder %s17, 0
      %p125 = por %p123, %p124
      %p126 = scmp.ne.s32.totalorder %s112, %s113
      %p127 = scmp.eq.s32.totalorder %s18, 1
      %p128 = por %p126, %p127
      %p130 = scmp.ne.s32.totalorder %s113, %s129
      %p131 = scmp.eq.s32.totalorder %s18, 0
      %p132 = por %p130, %p131
      %p133 = scmp.le.s32.totalorder 1, %s12
      %p134 = scmp.lt.s32.totalorder %s12, 3
      %p135 = pnand %p133, %p134
      %p136 = pneg %p135
      // Predicated region
      $region9: #{fused_matmul_shift.1} parent=5 // pred_check
        _
      $region10: #{fused_matmul_shift.1} parent=5 // pred_check_branch
        %138 = sbr.rel (%p135) target = $region12
      $region11: #{fused_matmul_shift.1} parent=5 // pred_region
        %s139 = ssub.s32 %s12, 1
        // Predicated region
        $region13: #{fused_matmul_shift.1} parent=11 // pred_check
          %p140 = pneg %p78
        $region14: #{fused_matmul_shift.1} parent=11 // pred_check_branch
          %142 = sbr.rel (%p140) target = $region16
        $region15: #{fused_matmul_shift.1} parent=11 // pred_region
          %s143 = smul.u32 41, %s22
          %p144 = scmp.lt.s32.totalorder %s143, 40
          %s145 = scalar_select %p144, %s143, 40
          %s146 = smul.addr %s145, 4
          %s147 = scalar_lea.vmem %s1, %s146
          %s148 = smul.u32 41, %s22
        $region16: #{fused_matmul_shift.1} parent=11 // pred_fallthru
          _
        // Predicated region
        $region17: #{fused_matmul_shift.1} parent=11 // pred_check
          %p149 = pneg %p99
        $region18: #{fused_matmul_shift.1} parent=11 // pred_check_branch
          %151 = sbr.rel (%p149) target = $region20
        $region19: #{fused_matmul_shift.1} parent=11 // pred_region
          _
        $region20: #{fused_matmul_shift.1} parent=11 // pred_fallthru
          _
      $region12: #{fused_matmul_shift.1} parent=5 // pred_fallthru
        _
      %p152 = scmp.lt.s32.totalorder %s12, 2
      // Predicated region
      $region21: #{fused_matmul_shift.1} parent=5 // pred_check
        %p153 = pneg %p152
      $region22: #{fused_matmul_shift.1} parent=5 // pred_check_branch
        %155 = sbr.rel (%p153) target = $region24
      $region23: #{fused_matmul_shift.1} parent=5 // pred_region
        // Predicated region
        $region25: #{fused_matmul_shift.1} parent=23 // pred_check
          %p156 = pneg %p46
        $region26: #{fused_matmul_shift.1} parent=23 // pred_check_branch
          %158 = sbr.rel (%p156) target = $region28
        $region27: #{fused_matmul_shift.1} parent=23 // pred_region
          %s159 = smul.u32 128, %s19
          %s160 = smul.u32 3, %s20
          %p161 = scmp.lt.s32.totalorder %s159, 255
          %s162 = scalar_select %p161, %s159, 255
          %p163 = scmp.lt.s32.totalorder %s160, 2
          %s164 = scalar_select %p163, %s160, 2
          %s165 = smul.addr %s162, 3
          %s166 = sadd.s32 %s164, %s165
          %s167 = smul.addr %s166, 4
          %s168 = scalar_lea.vmem %s0, %s167
          %s169 = smul.u32 128, %s19
          %s170 = smul.u32 3, %s20
        $region28: #{fused_matmul_shift.1} parent=23 // pred_fallthru
          _
      $region24: #{fused_matmul_shift.1} parent=5 // pred_fallthru
        _
      %p171 = scmp.le.s32.totalorder 1, %s12
      %p172 = scmp.lt.s32.totalorder %s12, 3
      %p173 = pnand %p171, %p172
      %p174 = pneg %p173
      // Predicated region
      $region29: #{fused_matmul_shift.1} parent=5 // pred_check
        _
      $region30: #{fused_matmul_shift.1} parent=5 // pred_check_branch
        %176 = sbr.rel (%p173) target = $region32
      $region31: #{fused_matmul_shift.1} parent=5 // pred_region
        %s177 = ssub.s32 %s12, 1
        %s178 = smul.u32 128, %s21
        %s179 = smul.u32 3, %s22
        %p180 = scmp.lt.s32.totalorder %s178, 255
        %s181 = scalar_select %p180, %s178, 255
        %p182 = scmp.lt.s32.totalorder %s179, 2
        %s183 = scalar_select %p182, %s179, 2
        %s184 = smul.addr %s181, 3
        %s185 = sadd.s32 %s183, %s184
        %s186 = smul.addr %s185, 4
        %s187 = scalar_lea.vmem %s0, %s186
        %p188 = pneg %p52
        %p189 = pneg %p49
        %s190 = smul.u32 41, %s22
        %p191 = scmp.lt.s32.totalorder %s190, 40
        %s192 = scalar_select %p191, %s190, 40
        %s193 = smul.addr %s192, 4
        %s194 = scalar_lea.vmem %s1, %s193
        %p195 = pneg %p78
        %p196 = pneg %p75
        %p197 = pneg %p99
        %p198 = pneg %p96
        %p199 = pneg %p125
        %p200 = pneg %p122
        %s201 = sand.u32 %s112, 1
        %s202 = scalar_lea.sflag [#allocation4], %s201
        %s203 = sand.u32 %s112, 1
        %s204 = smul.addr %s203, 512
        %s205 = scalar_lea.vmem [#allocation3], %s204
        %s206 = smul.u32 128, %s21
        %s207 = smul.u32 3, %s22
        %p208 = scmp.lt.s32.totalorder %s206, 255
        %s209 = scalar_select %p208, %s206, 255
        %p210 = scmp.lt.s32.totalorder %s207, 2
        %s211 = scalar_select %p210, %s207, 2
        %s212 = smul.addr %s209, 3
        %s213 = sadd.s32 %s211, %s212
        %s214 = smul.addr %s213, 4
        %s215 = scalar_lea.vmem %s0, %s214
        %s216 = smul.u32 128, %s21
        %s217 = smul.u32 3, %s22
        %s218 = smul.u32 41, %s22
        %p219 = scmp.lt.s32.totalorder %s218, 40
        %s220 = scalar_select %p219, %s218, 40
        %s221 = smul.addr %s220, 4
        %s222 = scalar_lea.vmem %s1, %s221
        %s223 = smul.u32 41, %s22
        %s224 = smul.u32 128, %s21
        %p226 = scmp.eq.s32.totalorder %s22, 0
        // Predicated region
        $region33: #{fused_matmul_shift.1} parent=31 // pred_check
          %p227 = pneg %p226
        $region34: #{fused_matmul_shift.1} parent=31 // pred_check_branch
          %229 = sbr.rel (%p227) target = $region36
        $region35: #{fused_matmul_shift.1} parent=31 // pred_region
          %230 = vst [vmem:[#allocation2] sm:$0xff] 0.0
          %231 = vst [vmem:[#allocation2 + $0x8] sm:$0xff] 0.0
          %232 = vst [vmem:[#allocation2 + $0x10] sm:$0xff] 0.0
          %233 = vst [vmem:[#allocation2 + $0x18] sm:$0xff] 0.0
          %234 = vst [vmem:[#allocation2 + $0x20] sm:$0xff] 0.0
          %235 = vst [vmem:[#allocation2 + $0x28] sm:$0xff] 0.0
          %236 = vst [vmem:[#allocation2 + $0x30] sm:$0xff] 0.0
          %237 = vst [vmem:[#allocation2 + $0x38] sm:$0xff] 0.0
          %238 = vst [vmem:[#allocation2 + $0x40] sm:$0xff] 0.0
          %239 = vst [vmem:[#allocation2 + $0x48] sm:$0xff] 0.0
          %240 = vst [vmem:[#allocation2 + $0x50] sm:$0xff] 0.0
          %241 = vst [vmem:[#allocation2 + $0x58] sm:$0xff] 0.0
          %242 = vst [vmem:[#allocation2 + $0x60] sm:$0xff] 0.0
          %243 = vst [vmem:[#allocation2 + $0x68] sm:$0xff] 0.0
          %244 = vst [vmem:[#allocation2 + $0x70] sm:$0xff] 0.0
          %245 = vst [vmem:[#allocation2 + $0x78] sm:$0xff] 0.0
          %246 = vst [vmem:[#allocation2 + $0x80] sm:$0xff] 0.0
          %247 = vst [vmem:[#allocation2 + $0x88] sm:$0xff] 0.0
          %248 = vst [vmem:[#allocation2 + $0x90] sm:$0xff] 0.0
          %249 = vst [vmem:[#allocation2 + $0x98] sm:$0xff] 0.0
          %250 = vst [vmem:[#allocation2 + $0xa0] sm:$0xff] 0.0
          %251 = vst [vmem:[#allocation2 + $0xa8] sm:$0xff] 0.0
          %252 = vst [vmem:[#allocation2 + $0xb0] sm:$0xff] 0.0
          %253 = vst [vmem:[#allocation2 + $0xb8] sm:$0xff] 0.0
          %254 = vst [vmem:[#allocation2 + $0xc0] sm:$0xff] 0.0
          %255 = vst [vmem:[#allocation2 + $0xc8] sm:$0xff] 0.0
          %256 = vst [vmem:[#allocation2 + $0xd0] sm:$0xff] 0.0
          %257 = vst [vmem:[#allocation2 + $0xd8] sm:$0xff] 0.0
          %258 = vst [vmem:[#allocation2 + $0xe0] sm:$0xff] 0.0
          %259 = vst [vmem:[#allocation2 + $0xe8] sm:$0xff] 0.0
          %260 = vst [vmem:[#allocation2 + $0xf0] sm:$0xff] 0.0
          %261 = vst [vmem:[#allocation2 + $0xf8] sm:$0xff] 0.0
          %262 = vst [vmem:[#allocation2 + $0x100] sm:$0xff] 0.0
          %263 = vst [vmem:[#allocation2 + $0x108] sm:$0xff] 0.0
          %264 = vst [vmem:[#allocation2 + $0x110] sm:$0xff] 0.0
          %265 = vst [vmem:[#allocation2 + $0x118] sm:$0xff] 0.0
          %266 = vst [vmem:[#allocation2 + $0x120] sm:$0xff] 0.0
          %267 = vst [vmem:[#allocation2 + $0x128] sm:$0xff] 0.0
          %268 = vst [vmem:[#allocation2 + $0x130] sm:$0xff] 0.0
          %269 = vst [vmem:[#allocation2 + $0x138] sm:$0xff] 0.0
          %270 = vst [vmem:[#allocation2 + $0x140] sm:$0xff] 0.0
          %271 = vst [vmem:[#allocation2 + $0x148] sm:$0xff] 0.0
          %272 = vst [vmem:[#allocation2 + $0x150] sm:$0xff] 0.0
          %273 = vst [vmem:[#allocation2 + $0x158] sm:$0xff] 0.0
          %274 = vst [vmem:[#allocation2 + $0x160] sm:$0xff] 0.0
          %275 = vst [vmem:[#allocation2 + $0x168] sm:$0xff] 0.0
          %276 = vst [vmem:[#allocation2 + $0x170] sm:$0xff] 0.0
          %277 = vst [vmem:[#allocation2 + $0x178] sm:$0xff] 0.0
          %278 = vst [vmem:[#allocation2 + $0x180] sm:$0xff] 0.0
          %279 = vst [vmem:[#allocation2 + $0x188] sm:$0xff] 0.0
          %280 = vst [vmem:[#allocation2 + $0x190] sm:$0xff] 0.0
          %281 = vst [vmem:[#allocation2 + $0x198] sm:$0xff] 0.0
          %282 = vst [vmem:[#allocation2 + $0x1a0] sm:$0xff] 0.0
          %283 = vst [vmem:[#allocation2 + $0x1a8] sm:$0xff] 0.0
          %284 = vst [vmem:[#allocation2 + $0x1b0] sm:$0xff] 0.0
          %285 = vst [vmem:[#allocation2 + $0x1b8] sm:$0xff] 0.0
          %286 = vst [vmem:[#allocation2 + $0x1c0] sm:$0xff] 0.0
          %287 = vst [vmem:[#allocation2 + $0x1c8] sm:$0xff] 0.0
          %288 = vst [vmem:[#allocation2 + $0x1d0] sm:$0xff] 0.0
          %289 = vst [vmem:[#allocation2 + $0x1d8] sm:$0xff] 0.0
          %290 = vst [vmem:[#allocation2 + $0x1e0] sm:$0xff] 0.0
          %291 = vst [vmem:[#allocation2 + $0x1e8] sm:$0xff] 0.0
          %292 = vst [vmem:[#allocation2 + $0x1f0] sm:$0xff] 0.0
          %293 = vst [vmem:[#allocation2 + $0x1f8] sm:$0xff] 0.0
          %294 = vst [vmem:[#allocation2 + $0x200] sm:$0xff] 0.0
          %295 = vst [vmem:[#allocation2 + $0x208] sm:$0xff] 0.0
          %296 = vst [vmem:[#allocation2 + $0x210] sm:$0xff] 0.0
          %297 = vst [vmem:[#allocation2 + $0x218] sm:$0xff] 0.0
          %298 = vst [vmem:[#allocation2 + $0x220] sm:$0xff] 0.0
          %299 = vst [vmem:[#allocation2 + $0x228] sm:$0xff] 0.0
          %300 = vst [vmem:[#allocation2 + $0x230] sm:$0xff] 0.0
          %301 = vst [vmem:[#allocation2 + $0x238] sm:$0xff] 0.0
          %302 = vst [vmem:[#allocation2 + $0x240] sm:$0xff] 0.0
          %303 = vst [vmem:[#allocation2 + $0x248] sm:$0xff] 0.0
          %304 = vst [vmem:[#allocation2 + $0x250] sm:$0xff] 0.0
          %305 = vst [vmem:[#allocation2 + $0x258] sm:$0xff] 0.0
          %306 = vst [vmem:[#allocation2 + $0x260] sm:$0xff] 0.0
          %307 = vst [vmem:[#allocation2 + $0x268] sm:$0xff] 0.0
          %308 = vst [vmem:[#allocation2 + $0x270] sm:$0xff] 0.0
          %309 = vst [vmem:[#allocation2 + $0x278] sm:$0xff] 0.0
          %310 = vst [vmem:[#allocation2 + $0x280] sm:$0xff] 0.0
          %311 = vst [vmem:[#allocation2 + $0x288] sm:$0xff] 0.0
          %312 = vst [vmem:[#allocation2 + $0x290] sm:$0xff] 0.0
          %313 = vst [vmem:[#allocation2 + $0x298] sm:$0xff] 0.0
          %314 = vst [vmem:[#allocation2 + $0x2a0] sm:$0xff] 0.0
          %315 = vst [vmem:[#allocation2 + $0x2a8] sm:$0xff] 0.0
          %316 = vst [vmem:[#allocation2 + $0x2b0] sm:$0xff] 0.0
          %317 = vst [vmem:[#allocation2 + $0x2b8] sm:$0xff] 0.0
          %318 = vst [vmem:[#allocation2 + $0x2c0] sm:$0xff] 0.0
          %319 = vst [vmem:[#allocation2 + $0x2c8] sm:$0xff] 0.0
          %320 = vst [vmem:[#allocation2 + $0x2d0] sm:$0xff] 0.0
          %321 = vst [vmem:[#allocation2 + $0x2d8] sm:$0xff] 0.0
          %322 = vst [vmem:[#allocation2 + $0x2e0] sm:$0xff] 0.0
          %323 = vst [vmem:[#allocation2 + $0x2e8] sm:$0xff] 0.0
          %324 = vst [vmem:[#allocation2 + $0x2f0] sm:$0xff] 0.0
          %325 = vst [vmem:[#allocation2 + $0x2f8] sm:$0xff] 0.0
          %326 = vst [vmem:[#allocation2 + $0x300] sm:$0xff] 0.0
          %327 = vst [vmem:[#allocation2 + $0x308] sm:$0xff] 0.0
          %328 = vst [vmem:[#allocation2 + $0x310] sm:$0xff] 0.0
          %329 = vst [vmem:[#allocation2 + $0x318] sm:$0xff] 0.0
          %330 = vst [vmem:[#allocation2 + $0x320] sm:$0xff] 0.0
          %331 = vst [vmem:[#allocation2 + $0x328] sm:$0xff] 0.0
          %332 = vst [vmem:[#allocation2 + $0x330] sm:$0xff] 0.0
          %333 = vst [vmem:[#allocation2 + $0x338] sm:$0xff] 0.0
          %334 = vst [vmem:[#allocation2 + $0x340] sm:$0xff] 0.0
          %335 = vst [vmem:[#allocation2 + $0x348] sm:$0xff] 0.0
          %336 = vst [vmem:[#allocation2 + $0x350] sm:$0xff] 0.0
          %337 = vst [vmem:[#allocation2 + $0x358] sm:$0xff] 0.0
          %338 = vst [vmem:[#allocation2 + $0x360] sm:$0xff] 0.0
          %339 = vst [vmem:[#allocation2 + $0x368] sm:$0xff] 0.0
          %340 = vst [vmem:[#allocation2 + $0x370] sm:$0xff] 0.0
          %341 = vst [vmem:[#allocation2 + $0x378] sm:$0xff] 0.0
          %342 = vst [vmem:[#allocation2 + $0x380] sm:$0xff] 0.0
          %343 = vst [vmem:[#allocation2 + $0x388] sm:$0xff] 0.0
          %344 = vst [vmem:[#allocation2 + $0x390] sm:$0xff] 0.0
          %345 = vst [vmem:[#allocation2 + $0x398] sm:$0xff] 0.0
          %346 = vst [vmem:[#allocation2 + $0x3a0] sm:$0xff] 0.0
          %347 = vst [vmem:[#allocation2 + $0x3a8] sm:$0xff] 0.0
          %348 = vst [vmem:[#allocation2 + $0x3b0] sm:$0xff] 0.0
          %349 = vst [vmem:[#allocation2 + $0x3b8] sm:$0xff] 0.0
          %350 = vst [vmem:[#allocation2 + $0x3c0] sm:$0xff] 0.0
          %351 = vst [vmem:[#allocation2 + $0x3c8] sm:$0xff] 0.0
          %352 = vst [vmem:[#allocation2 + $0x3d0] sm:$0xff] 0.0
          %353 = vst [vmem:[#allocation2 + $0x3d8] sm:$0xff] 0.0
          %354 = vst [vmem:[#allocation2 + $0x3e0] sm:$0xff] 0.0
          %355 = vst [vmem:[#allocation2 + $0x3e8] sm:$0xff] 0.0
          %356 = vst [vmem:[#allocation2 + $0x3f0] sm:$0xff] 0.0
          %357 = vst [vmem:[#allocation2 + $0x3f8] sm:$0xff] 0.0
        $region36: #{fused_matmul_shift.1} parent=31 // pred_fallthru
          _
        %v358 = vld [vmem:[#allocation2] sm:$0xff]
        %v359 = vld [vmem:[#allocation2 + $0x8] sm:$0xff]
        %v360 = vld [vmem:[#allocation2 + $0x10] sm:$0xff]
        %v361 = vld [vmem:[#allocation2 + $0x18] sm:$0xff]
        %v362 = vld [vmem:[#allocation2 + $0x20] sm:$0xff]
        %v363 = vld [vmem:[#allocation2 + $0x28] sm:$0xff]
        %v364 = vld [vmem:[#allocation2 + $0x30] sm:$0xff]
        %v365 = vld [vmem:[#allocation2 + $0x38] sm:$0xff]
        %v366 = vld [vmem:[#allocation2 + $0x40] sm:$0xff]
        %v367 = vld [vmem:[#allocation2 + $0x48] sm:$0xff]
        %v368 = vld [vmem:[#allocation2 + $0x50] sm:$0xff]
        %v369 = vld [vmem:[#allocation2 + $0x58] sm:$0xff]
        %v370 = vld [vmem:[#allocation2 + $0x60] sm:$0xff]
        %v371 = vld [vmem:[#allocation2 + $0x68] sm:$0xff]
        %v372 = vld [vmem:[#allocation2 + $0x70] sm:$0xff]
        %v373 = vld [vmem:[#allocation2 + $0x78] sm:$0xff]
        %v374 = vld [vmem:[#allocation2 + $0x80] sm:$0xff]
        %v375 = vld [vmem:[#allocation2 + $0x88] sm:$0xff]
        %v376 = vld [vmem:[#allocation2 + $0x90] sm:$0xff]
        %v377 = vld [vmem:[#allocation2 + $0x98] sm:$0xff]
        %v378 = vld [vmem:[#allocation2 + $0xa0] sm:$0xff]
        %v379 = vld [vmem:[#allocation2 + $0xa8] sm:$0xff]
        %v380 = vld [vmem:[#allocation2 + $0xb0] sm:$0xff]
        %v381 = vld [vmem:[#allocation2 + $0xb8] sm:$0xff]
        %v382 = vld [vmem:[#allocation2 + $0xc0] sm:$0xff]
        %v383 = vld [vmem:[#allocation2 + $0xc8] sm:$0xff]
        %v384 = vld [vmem:[#allocation2 + $0xd0] sm:$0xff]
        %v385 = vld [vmem:[#allocation2 + $0xd8] sm:$0xff]
        %v386 = vld [vmem:[#allocation2 + $0xe0] sm:$0xff]
        %v387 = vld [vmem:[#allocation2 + $0xe8] sm:$0xff]
        %v388 = vld [vmem:[#allocation2 + $0xf0] sm:$0xff]
        %v389 = vld [vmem:[#allocation2 + $0xf8] sm:$0xff]
        %v390 = vld [vmem:[#allocation2 + $0x100] sm:$0xff]
        %v391 = vld [vmem:[#allocation2 + $0x108] sm:$0xff]
        %v392 = vld [vmem:[#allocation2 + $0x110] sm:$0xff]
        %v393 = vld [vmem:[#allocation2 + $0x118] sm:$0xff]
        %v394 = vld [vmem:[#allocation2 + $0x120] sm:$0xff]
        %v395 = vld [vmem:[#allocation2 + $0x128] sm:$0xff]
        %v396 = vld [vmem:[#allocation2 + $0x130] sm:$0xff]
        %v397 = vld [vmem:[#allocation2 + $0x138] sm:$0xff]
        %v398 = vld [vmem:[#allocation2 + $0x140] sm:$0xff]
        %v399 = vld [vmem:[#allocation2 + $0x148] sm:$0xff]
        %v400 = vld [vmem:[#allocation2 + $0x150] sm:$0xff]
        %v401 = vld [vmem:[#allocation2 + $0x158] sm:$0xff]
        %v402 = vld [vmem:[#allocation2 + $0x160] sm:$0xff]
        %v403 = vld [vmem:[#allocation2 + $0x168] sm:$0xff]
        %v404 = vld [vmem:[#allocation2 + $0x170] sm:$0xff]
        %v405 = vld [vmem:[#allocation2 + $0x178] sm:$0xff]
        %v406 = vld [vmem:[#allocation2 + $0x180] sm:$0xff]
        %v407 = vld [vmem:[#allocation2 + $0x188] sm:$0xff]
        %v408 = vld [vmem:[#allocation2 + $0x190] sm:$0xff]
        %v409 = vld [vmem:[#allocation2 + $0x198] sm:$0xff]
        %v410 = vld [vmem:[#allocation2 + $0x1a0] sm:$0xff]
        %v411 = vld [vmem:[#allocation2 + $0x1a8] sm:$0xff]
        %v412 = vld [vmem:[#allocation2 + $0x1b0] sm:$0xff]
        %v413 = vld [vmem:[#allocation2 + $0x1b8] sm:$0xff]
        %v414 = vld [vmem:[#allocation2 + $0x1c0] sm:$0xff]
        %v415 = vld [vmem:[#allocation2 + $0x1c8] sm:$0xff]
        %v416 = vld [vmem:[#allocation2 + $0x1d0] sm:$0xff]
        %v417 = vld [vmem:[#allocation2 + $0x1d8] sm:$0xff]
        %v418 = vld [vmem:[#allocation2 + $0x1e0] sm:$0xff]
        %v419 = vld [vmem:[#allocation2 + $0x1e8] sm:$0xff]
        %v420 = vld [vmem:[#allocation2 + $0x1f0] sm:$0xff]
        %v421 = vld [vmem:[#allocation2 + $0x1f8] sm:$0xff]
        %v422 = vld [vmem:[#allocation2 + $0x200] sm:$0xff]
        %v423 = vld [vmem:[#allocation2 + $0x208] sm:$0xff]
        %v424 = vld [vmem:[#allocation2 + $0x210] sm:$0xff]
        %v425 = vld [vmem:[#allocation2 + $0x218] sm:$0xff]
        %v426 = vld [vmem:[#allocation2 + $0x220] sm:$0xff]
        %v427 = vld [vmem:[#allocation2 + $0x228] sm:$0xff]
        %v428 = vld [vmem:[#allocation2 + $0x230] sm:$0xff]
        %v429 = vld [vmem:[#allocation2 + $0x238] sm:$0xff]
        %v430 = vld [vmem:[#allocation2 + $0x240] sm:$0xff]
        %v431 = vld [vmem:[#allocation2 + $0x248] sm:$0xff]
        %v432 = vld [vmem:[#allocation2 + $0x250] sm:$0xff]
        %v433 = vld [vmem:[#allocation2 + $0x258] sm:$0xff]
        %v434 = vld [vmem:[#allocation2 + $0x260] sm:$0xff]
        %v435 = vld [vmem:[#allocation2 + $0x268] sm:$0xff]
        %v436 = vld [vmem:[#allocation2 + $0x270] sm:$0xff]
        %v437 = vld [vmem:[#allocation2 + $0x278] sm:$0xff]
        %v438 = vld [vmem:[#allocation2 + $0x280] sm:$0xff]
        %v439 = vld [vmem:[#allocation2 + $0x288] sm:$0xff]
        %v440 = vld [vmem:[#allocation2 + $0x290] sm:$0xff]
        %v441 = vld [vmem:[#allocation2 + $0x298] sm:$0xff]
        %v442 = vld [vmem:[#allocation2 + $0x2a0] sm:$0xff]
        %v443 = vld [vmem:[#allocation2 + $0x2a8] sm:$0xff]
        %v444 = vld [vmem:[#allocation2 + $0x2b0] sm:$0xff]
        %v445 = vld [vmem:[#allocation2 + $0x2b8] sm:$0xff]
        %v446 = vld [vmem:[#allocation2 + $0x2c0] sm:$0xff]
        %v447 = vld [vmem:[#allocation2 + $0x2c8] sm:$0xff]
        %v448 = vld [vmem:[#allocation2 + $0x2d0] sm:$0xff]
        %v449 = vld [vmem:[#allocation2 + $0x2d8] sm:$0xff]
        %v450 = vld [vmem:[#allocation2 + $0x2e0] sm:$0xff]
        %v451 = vld [vmem:[#allocation2 + $0x2e8] sm:$0xff]
        %v452 = vld [vmem:[#allocation2 + $0x2f0] sm:$0xff]
        %v453 = vld [vmem:[#allocation2 + $0x2f8] sm:$0xff]
        %v454 = vld [vmem:[#allocation2 + $0x300] sm:$0xff]
        %v455 = vld [vmem:[#allocation2 + $0x308] sm:$0xff]
        %v456 = vld [vmem:[#allocation2 + $0x310] sm:$0xff]
        %v457 = vld [vmem:[#allocation2 + $0x318] sm:$0xff]
        %v458 = vld [vmem:[#allocation2 + $0x320] sm:$0xff]
        %v459 = vld [vmem:[#allocation2 + $0x328] sm:$0xff]
        %v460 = vld [vmem:[#allocation2 + $0x330] sm:$0xff]
        %v461 = vld [vmem:[#allocation2 + $0x338] sm:$0xff]
        %v462 = vld [vmem:[#allocation2 + $0x340] sm:$0xff]
        %v463 = vld [vmem:[#allocation2 + $0x348] sm:$0xff]
        %v464 = vld [vmem:[#allocation2 + $0x350] sm:$0xff]
        %v465 = vld [vmem:[#allocation2 + $0x358] sm:$0xff]
        %v466 = vld [vmem:[#allocation2 + $0x360] sm:$0xff]
        %v467 = vld [vmem:[#allocation2 + $0x368] sm:$0xff]
        %v468 = vld [vmem:[#allocation2 + $0x370] sm:$0xff]
        %v469 = vld [vmem:[#allocation2 + $0x378] sm:$0xff]
        %v470 = vld [vmem:[#allocation2 + $0x380] sm:$0xff]
        %v471 = vld [vmem:[#allocation2 + $0x388] sm:$0xff]
        %v472 = vld [vmem:[#allocation2 + $0x390] sm:$0xff]
        %v473 = vld [vmem:[#allocation2 + $0x398] sm:$0xff]
        %v474 = vld [vmem:[#allocation2 + $0x3a0] sm:$0xff]
        %v475 = vld [vmem:[#allocation2 + $0x3a8] sm:$0xff]
        %v476 = vld [vmem:[#allocation2 + $0x3b0] sm:$0xff]
        %v477 = vld [vmem:[#allocation2 + $0x3b8] sm:$0xff]
        %v478 = vld [vmem:[#allocation2 + $0x3c0] sm:$0xff]
        %v479 = vld [vmem:[#allocation2 + $0x3c8] sm:$0xff]
        %v480 = vld [vmem:[#allocation2 + $0x3d0] sm:$0xff]
        %v481 = vld [vmem:[#allocation2 + $0x3d8] sm:$0xff]
        %v482 = vld [vmem:[#allocation2 + $0x3e0] sm:$0xff]
        %v483 = vld [vmem:[#allocation2 + $0x3e8] sm:$0xff]
        %v484 = vld [vmem:[#allocation2 + $0x3f0] sm:$0xff]
        %v485 = vld [vmem:[#allocation2 + $0x3f8] sm:$0xff]
        %v486 = vld [vmem:[%s215] sm:$0xff]
        %v487 = vld [vmem:[%s215 + $0x8] sm:$0xf]
        %v488 = vld [vmem:[%s215 + $0xc] sm:$0xff]
        %v489 = vld [vmem:[%s215 + $0x14] sm:$0xf]
        %v490 = vld [vmem:[%s215 + $0x18] sm:$0xff]
        %v491 = vld [vmem:[%s215 + $0x20] sm:$0xf]
        %v492 = vld [vmem:[%s215 + $0x24] sm:$0xff]
        %v493 = vld [vmem:[%s215 + $0x2c] sm:$0xf]
        %v494 = vld [vmem:[%s215 + $0x30] sm:$0xff]
        %v495 = vld [vmem:[%s215 + $0x38] sm:$0xf]
        %v496 = vld [vmem:[%s215 + $0x3c] sm:$0xff]
        %v497 = vld [vmem:[%s215 + $0x44] sm:$0xf]
        %v498 = vld [vmem:[%s215 + $0x48] sm:$0xff]
        %v499 = vld [vmem:[%s215 + $0x50] sm:$0xf]
        %v500 = vld [vmem:[%s215 + $0x54] sm:$0xff]
        %v501 = vld [vmem:[%s215 + $0x5c] sm:$0xf]
        %v502 = vld [vmem:[%s215 + $0x60] sm:$0xff]
        %v503 = vld [vmem:[%s215 + $0x68] sm:$0xf]
        %v504 = vld [vmem:[%s215 + $0x6c] sm:$0xff]
        %v505 = vld [vmem:[%s215 + $0x74] sm:$0xf]
        %v506 = vld [vmem:[%s215 + $0x78] sm:$0xff]
        %v507 = vld [vmem:[%s215 + $0x80] sm:$0xf]
        %v508 = vld [vmem:[%s215 + $0x84] sm:$0xff]
        %v509 = vld [vmem:[%s215 + $0x8c] sm:$0xf]
        %v510 = vld [vmem:[%s215 + $0x90] sm:$0xff]
        %v511 = vld [vmem:[%s215 + $0x98] sm:$0xf]
        %v512 = vld [vmem:[%s215 + $0x9c] sm:$0xff]
        %v513 = vld [vmem:[%s215 + $0xa4] sm:$0xf]
        %v514 = vld [vmem:[%s215 + $0xa8] sm:$0xff]
        %v515 = vld [vmem:[%s215 + $0xb0] sm:$0xf]
        %v516 = vld [vmem:[%s215 + $0xb4] sm:$0xff]
        %v517 = vld [vmem:[%s215 + $0xbc] sm:$0xf]
        %v518 = vld [vmem:[%s215 + $0xc0] sm:$0xff]
        %v519 = vld [vmem:[%s215 + $0xc8] sm:$0xf]
        %v520 = vld [vmem:[%s215 + $0xcc] sm:$0xff]
        %v521 = vld [vmem:[%s215 + $0xd4] sm:$0xf]
        %v522 = vld [vmem:[%s215 + $0xd8] sm:$0xff]
        %v523 = vld [vmem:[%s215 + $0xe0] sm:$0xf]
        %v524 = vld [vmem:[%s215 + $0xe4] sm:$0xff]
        %v525 = vld [vmem:[%s215 + $0xec] sm:$0xf]
        %v526 = vld [vmem:[%s215 + $0xf0] sm:$0xff]
        %v527 = vld [vmem:[%s215 + $0xf8] sm:$0xf]
        %v528 = vld [vmem:[%s215 + $0xfc] sm:$0xff]
        %v529 = vld [vmem:[%s215 + $0x104] sm:$0xf]
        %v530 = vld [vmem:[%s215 + $0x108] sm:$0xff]
        %v531 = vld [vmem:[%s215 + $0x110] sm:$0xf]
        %v532 = vld [vmem:[%s215 + $0x114] sm:$0xff]
        %v533 = vld [vmem:[%s215 + $0x11c] sm:$0xf]
        %v534 = vld [vmem:[%s215 + $0x120] sm:$0xff]
        %v535 = vld [vmem:[%s215 + $0x128] sm:$0xf]
        %v536 = vld [vmem:[%s215 + $0x12c] sm:$0xff]
        %v537 = vld [vmem:[%s215 + $0x134] sm:$0xf]
        %v538 = vld [vmem:[%s215 + $0x138] sm:$0xff]
        %v539 = vld [vmem:[%s215 + $0x140] sm:$0xf]
        %v540 = vld [vmem:[%s215 + $0x144] sm:$0xff]
        %v541 = vld [vmem:[%s215 + $0x14c] sm:$0xf]
        %v542 = vld [vmem:[%s215 + $0x150] sm:$0xff]
        %v543 = vld [vmem:[%s215 + $0x158] sm:$0xf]
        %v544 = vld [vmem:[%s215 + $0x15c] sm:$0xff]
        %v545 = vld [vmem:[%s215 + $0x164] sm:$0xf]
        %v546 = vld [vmem:[%s215 + $0x168] sm:$0xff]
        %v547 = vld [vmem:[%s215 + $0x170] sm:$0xf]
        %v548 = vld [vmem:[%s215 + $0x174] sm:$0xff]
        %v549 = vld [vmem:[%s215 + $0x17c] sm:$0xf]
        %v550 = vld [vmem:[%s215 + $0x180] sm:$0xff]
        %v551 = vld [vmem:[%s215 + $0x188] sm:$0xf]
        %v552 = vld [vmem:[%s215 + $0x18c] sm:$0xff]
        %v553 = vld [vmem:[%s215 + $0x194] sm:$0xf]
        %v554 = vld [vmem:[%s215 + $0x198] sm:$0xff]
        %v555 = vld [vmem:[%s215 + $0x1a0] sm:$0xf]
        %v556 = vld [vmem:[%s215 + $0x1a4] sm:$0xff]
        %v557 = vld [vmem:[%s215 + $0x1ac] sm:$0xf]
        %v558 = vld [vmem:[%s215 + $0x1b0] sm:$0xff]
        %v559 = vld [vmem:[%s215 + $0x1b8] sm:$0xf]
        %v560 = vld [vmem:[%s215 + $0x1bc] sm:$0xff]
        %v561 = vld [vmem:[%s215 + $0x1c4] sm:$0xf]
        %v562 = vld [vmem:[%s215 + $0x1c8] sm:$0xff]
        %v563 = vld [vmem:[%s215 + $0x1d0] sm:$0xf]
        %v564 = vld [vmem:[%s215 + $0x1d4] sm:$0xff]
        %v565 = vld [vmem:[%s215 + $0x1dc] sm:$0xf]
        %v566 = vld [vmem:[%s215 + $0x1e0] sm:$0xff]
        %v567 = vld [vmem:[%s215 + $0x1e8] sm:$0xf]
        %v568 = vld [vmem:[%s215 + $0x1ec] sm:$0xff]
        %v569 = vld [vmem:[%s215 + $0x1f4] sm:$0xf]
        %v570 = vld [vmem:[%s215 + $0x1f8] sm:$0xff]
        %v571 = vld [vmem:[%s215 + $0x200] sm:$0xf]
        %v572 = vld [vmem:[%s215 + $0x204] sm:$0xff]
        %v573 = vld [vmem:[%s215 + $0x20c] sm:$0xf]
        %v574 = vld [vmem:[%s215 + $0x210] sm:$0xff]
        %v575 = vld [vmem:[%s215 + $0x218] sm:$0xf]
        %v576 = vld [vmem:[%s215 + $0x21c] sm:$0xff]
        %v577 = vld [vmem:[%s215 + $0x224] sm:$0xf]
        %v578 = vld [vmem:[%s215 + $0x228] sm:$0xff]
        %v579 = vld [vmem:[%s215 + $0x230] sm:$0xf]
        %v580 = vld [vmem:[%s215 + $0x234] sm:$0xff]
        %v581 = vld [vmem:[%s215 + $0x23c] sm:$0xf]
        %v582 = vld [vmem:[%s215 + $0x240] sm:$0xff]
        %v583 = vld [vmem:[%s215 + $0x248] sm:$0xf]
        %v584 = vld [vmem:[%s215 + $0x24c] sm:$0xff]
        %v585 = vld [vmem:[%s215 + $0x254] sm:$0xf]
        %v586 = vld [vmem:[%s215 + $0x258] sm:$0xff]
        %v587 = vld [vmem:[%s215 + $0x260] sm:$0xf]
        %v588 = vld [vmem:[%s215 + $0x264] sm:$0xff]
        %v589 = vld [vmem:[%s215 + $0x26c] sm:$0xf]
        %v590 = vld [vmem:[%s215 + $0x270] sm:$0xff]
        %v591 = vld [vmem:[%s215 + $0x278] sm:$0xf]
        %v592 = vld [vmem:[%s215 + $0x27c] sm:$0xff]
        %v593 = vld [vmem:[%s215 + $0x284] sm:$0xf]
        %v594 = vld [vmem:[%s215 + $0x288] sm:$0xff]
        %v595 = vld [vmem:[%s215 + $0x290] sm:$0xf]
        %v596 = vld [vmem:[%s215 + $0x294] sm:$0xff]
        %v597 = vld [vmem:[%s215 + $0x29c] sm:$0xf]
        %v598 = vld [vmem:[%s215 + $0x2a0] sm:$0xff]
        %v599 = vld [vmem:[%s215 + $0x2a8] sm:$0xf]
        %v600 = vld [vmem:[%s215 + $0x2ac] sm:$0xff]
        %v601 = vld [vmem:[%s215 + $0x2b4] sm:$0xf]
        %v602 = vld [vmem:[%s215 + $0x2b8] sm:$0xff]
        %v603 = vld [vmem:[%s215 + $0x2c0] sm:$0xf]
        %v604 = vld [vmem:[%s215 + $0x2c4] sm:$0xff]
        %v605 = vld [vmem:[%s215 + $0x2cc] sm:$0xf]
        %v606 = vld [vmem:[%s215 + $0x2d0] sm:$0xff]
        %v607 = vld [vmem:[%s215 + $0x2d8] sm:$0xf]
        %v608 = vld [vmem:[%s215 + $0x2dc] sm:$0xff]
        %v609 = vld [vmem:[%s215 + $0x2e4] sm:$0xf]
        %v610 = vld [vmem:[%s215 + $0x2e8] sm:$0xff]
        %v611 = vld [vmem:[%s215 + $0x2f0] sm:$0xf]
        %v612 = vld [vmem:[%s215 + $0x2f4] sm:$0xff]
        %v613 = vld [vmem:[%s215 + $0x2fc] sm:$0xf]
        %v614 = vld [vmem:[%s215 + $0x300] sm:$0xff]
        %v615 = vld [vmem:[%s215 + $0x308] sm:$0xf]
        %v616 = vld [vmem:[%s215 + $0x30c] sm:$0xff]
        %v617 = vld [vmem:[%s215 + $0x314] sm:$0xf]
        %v618 = vld [vmem:[%s215 + $0x318] sm:$0xff]
        %v619 = vld [vmem:[%s215 + $0x320] sm:$0xf]
        %v620 = vld [vmem:[%s215 + $0x324] sm:$0xff]
        %v621 = vld [vmem:[%s215 + $0x32c] sm:$0xf]
        %v622 = vld [vmem:[%s215 + $0x330] sm:$0xff]
        %v623 = vld [vmem:[%s215 + $0x338] sm:$0xf]
        %v624 = vld [vmem:[%s215 + $0x33c] sm:$0xff]
        %v625 = vld [vmem:[%s215 + $0x344] sm:$0xf]
        %v626 = vld [vmem:[%s215 + $0x348] sm:$0xff]
        %v627 = vld [vmem:[%s215 + $0x350] sm:$0xf]
        %v628 = vld [vmem:[%s215 + $0x354] sm:$0xff]
        %v629 = vld [vmem:[%s215 + $0x35c] sm:$0xf]
        %v630 = vld [vmem:[%s215 + $0x360] sm:$0xff]
        %v631 = vld [vmem:[%s215 + $0x368] sm:$0xf]
        %v632 = vld [vmem:[%s215 + $0x36c] sm:$0xff]
        %v633 = vld [vmem:[%s215 + $0x374] sm:$0xf]
        %v634 = vld [vmem:[%s215 + $0x378] sm:$0xff]
        %v635 = vld [vmem:[%s215 + $0x380] sm:$0xf]
        %v636 = vld [vmem:[%s215 + $0x384] sm:$0xff]
        %v637 = vld [vmem:[%s215 + $0x38c] sm:$0xf]
        %v638 = vld [vmem:[%s215 + $0x390] sm:$0xff]
        %v639 = vld [vmem:[%s215 + $0x398] sm:$0xf]
        %v640 = vld [vmem:[%s215 + $0x39c] sm:$0xff]
        %v641 = vld [vmem:[%s215 + $0x3a4] sm:$0xf]
        %v642 = vld [vmem:[%s215 + $0x3a8] sm:$0xff]
        %v643 = vld [vmem:[%s215 + $0x3b0] sm:$0xf]
        %v644 = vld [vmem:[%s215 + $0x3b4] sm:$0xff]
        %v645 = vld [vmem:[%s215 + $0x3bc] sm:$0xf]
        %v646 = vld [vmem:[%s215 + $0x3c0] sm:$0xff]
        %v647 = vld [vmem:[%s215 + $0x3c8] sm:$0xf]
        %v648 = vld [vmem:[%s215 + $0x3cc] sm:$0xff]
        %v649 = vld [vmem:[%s215 + $0x3d4] sm:$0xf]
        %v650 = vld [vmem:[%s215 + $0x3d8] sm:$0xff]
        %v651 = vld [vmem:[%s215 + $0x3e0] sm:$0xf]
        %v652 = vld [vmem:[%s215 + $0x3e4] sm:$0xff]
        %v653 = vld [vmem:[%s215 + $0x3ec] sm:$0xf]
        %v654 = vld [vmem:[%s215 + $0x3f0] sm:$0xff]
        %v655 = vld [vmem:[%s215 + $0x3f8] sm:$0xf]
        %v656 = vld [vmem:[%s215 + $0x3fc] sm:$0xff]
        %v657 = vld [vmem:[%s215 + $0x404] sm:$0xf]
        %v658 = vld [vmem:[%s215 + $0x408] sm:$0xff]
        %v659 = vld [vmem:[%s215 + $0x410] sm:$0xf]
        %v660 = vld [vmem:[%s215 + $0x414] sm:$0xff]
        %v661 = vld [vmem:[%s215 + $0x41c] sm:$0xf]
        %v662 = vld [vmem:[%s215 + $0x420] sm:$0xff]
        %v663 = vld [vmem:[%s215 + $0x428] sm:$0xf]
        %v664 = vld [vmem:[%s215 + $0x42c] sm:$0xff]
        %v665 = vld [vmem:[%s215 + $0x434] sm:$0xf]
        %v666 = vld [vmem:[%s215 + $0x438] sm:$0xff]
        %v667 = vld [vmem:[%s215 + $0x440] sm:$0xf]
        %v668 = vld [vmem:[%s215 + $0x444] sm:$0xff]
        %v669 = vld [vmem:[%s215 + $0x44c] sm:$0xf]
        %v670 = vld [vmem:[%s215 + $0x450] sm:$0xff]
        %v671 = vld [vmem:[%s215 + $0x458] sm:$0xf]
        %v672 = vld [vmem:[%s215 + $0x45c] sm:$0xff]
        %v673 = vld [vmem:[%s215 + $0x464] sm:$0xf]
        %v674 = vld [vmem:[%s215 + $0x468] sm:$0xff]
        %v675 = vld [vmem:[%s215 + $0x470] sm:$0xf]
        %v676 = vld [vmem:[%s215 + $0x474] sm:$0xff]
        %v677 = vld [vmem:[%s215 + $0x47c] sm:$0xf]
        %v678 = vld [vmem:[%s215 + $0x480] sm:$0xff]
        %v679 = vld [vmem:[%s215 + $0x488] sm:$0xf]
        %v680 = vld [vmem:[%s215 + $0x48c] sm:$0xff]
        %v681 = vld [vmem:[%s215 + $0x494] sm:$0xf]
        %v682 = vld [vmem:[%s215 + $0x498] sm:$0xff]
        %v683 = vld [vmem:[%s215 + $0x4a0] sm:$0xf]
        %v684 = vld [vmem:[%s215 + $0x4a4] sm:$0xff]
        %v685 = vld [vmem:[%s215 + $0x4ac] sm:$0xf]
        %v686 = vld [vmem:[%s215 + $0x4b0] sm:$0xff]
        %v687 = vld [vmem:[%s215 + $0x4b8] sm:$0xf]
        %v688 = vld [vmem:[%s215 + $0x4bc] sm:$0xff]
        %v689 = vld [vmem:[%s215 + $0x4c4] sm:$0xf]
        %v690 = vld [vmem:[%s215 + $0x4c8] sm:$0xff]
        %v691 = vld [vmem:[%s215 + $0x4d0] sm:$0xf]
        %v692 = vld [vmem:[%s215 + $0x4d4] sm:$0xff]
        %v693 = vld [vmem:[%s215 + $0x4dc] sm:$0xf]
        %v694 = vld [vmem:[%s215 + $0x4e0] sm:$0xff]
        %v695 = vld [vmem:[%s215 + $0x4e8] sm:$0xf]
        %v696 = vld [vmem:[%s215 + $0x4ec] sm:$0xff]
        %v697 = vld [vmem:[%s215 + $0x4f4] sm:$0xf]
        %v698 = vld [vmem:[%s215 + $0x4f8] sm:$0xff]
        %v699 = vld [vmem:[%s215 + $0x500] sm:$0xf]
        %v700 = vld [vmem:[%s215 + $0x504] sm:$0xff]
        %v701 = vld [vmem:[%s215 + $0x50c] sm:$0xf]
        %v702 = vld [vmem:[%s215 + $0x510] sm:$0xff]
        %v703 = vld [vmem:[%s215 + $0x518] sm:$0xf]
        %v704 = vld [vmem:[%s215 + $0x51c] sm:$0xff]
        %v705 = vld [vmem:[%s215 + $0x524] sm:$0xf]
        %v706 = vld [vmem:[%s215 + $0x528] sm:$0xff]
        %v707 = vld [vmem:[%s215 + $0x530] sm:$0xf]
        %v708 = vld [vmem:[%s215 + $0x534] sm:$0xff]
        %v709 = vld [vmem:[%s215 + $0x53c] sm:$0xf]
        %v710 = vld [vmem:[%s215 + $0x540] sm:$0xff]
        %v711 = vld [vmem:[%s215 + $0x548] sm:$0xf]
        %v712 = vld [vmem:[%s215 + $0x54c] sm:$0xff]
        %v713 = vld [vmem:[%s215 + $0x554] sm:$0xf]
        %v714 = vld [vmem:[%s215 + $0x558] sm:$0xff]
        %v715 = vld [vmem:[%s215 + $0x560] sm:$0xf]
        %v716 = vld [vmem:[%s215 + $0x564] sm:$0xff]
        %v717 = vld [vmem:[%s215 + $0x56c] sm:$0xf]
        %v718 = vld [vmem:[%s215 + $0x570] sm:$0xff]
        %v719 = vld [vmem:[%s215 + $0x578] sm:$0xf]
        %v720 = vld [vmem:[%s215 + $0x57c] sm:$0xff]
        %v721 = vld [vmem:[%s215 + $0x584] sm:$0xf]
        %v722 = vld [vmem:[%s215 + $0x588] sm:$0xff]
        %v723 = vld [vmem:[%s215 + $0x590] sm:$0xf]
        %v724 = vld [vmem:[%s215 + $0x594] sm:$0xff]
        %v725 = vld [vmem:[%s215 + $0x59c] sm:$0xf]
        %v726 = vld [vmem:[%s215 + $0x5a0] sm:$0xff]
        %v727 = vld [vmem:[%s215 + $0x5a8] sm:$0xf]
        %v728 = vld [vmem:[%s215 + $0x5ac] sm:$0xff]
        %v729 = vld [vmem:[%s215 + $0x5b4] sm:$0xf]
        %v730 = vld [vmem:[%s215 + $0x5b8] sm:$0xff]
        %v731 = vld [vmem:[%s215 + $0x5c0] sm:$0xf]
        %v732 = vld [vmem:[%s215 + $0x5c4] sm:$0xff]
        %v733 = vld [vmem:[%s215 + $0x5cc] sm:$0xf]
        %v734 = vld [vmem:[%s215 + $0x5d0] sm:$0xff]
        %v735 = vld [vmem:[%s215 + $0x5d8] sm:$0xf]
        %v736 = vld [vmem:[%s215 + $0x5dc] sm:$0xff]
        %v737 = vld [vmem:[%s215 + $0x5e4] sm:$0xf]
        %v738 = vld [vmem:[%s215 + $0x5e8] sm:$0xff]
        %v739 = vld [vmem:[%s215 + $0x5f0] sm:$0xf]
        %v740 = vld [vmem:[%s215 + $0x5f4] sm:$0xff]
        %v741 = vld [vmem:[%s215 + $0x5fc] sm:$0xf]
        %v742 = vld [vmem:[%s222] sm:$0xf]
        %v743 = vld [vmem:[%s222 + $0x4] sm:$0xf]
        %v744 = vld [vmem:[%s222 + $0x8] sm:$0xf]
        %v745 = vld [vmem:[%s222 + $0xc] sm:$0xf]
        %v746 = vld [vmem:[%s222 + $0x10] sm:$0xf]
        %v747 = vld [vmem:[%s222 + $0x14] sm:$0xf]
        %v748 = vld [vmem:[%s222 + $0x18] sm:$0xf]
        %v749 = vld [vmem:[%s222 + $0x1c] sm:$0xf]
        %v750 = vld [vmem:[%s222 + $0x20] sm:$0xf]
        %v751 = vld [vmem:[%s222 + $0x24] sm:$0xf]
        %v752 = vld [vmem:[%s222 + $0x28] sm:$0xf]
        %v753 = vld [vmem:[%s222 + $0x2c] sm:$0xf]
        %v754 = vld [vmem:[%s222 + $0x30] sm:$0xf]
        %v755 = vld [vmem:[%s222 + $0x34] sm:$0xf]
        %v756 = vld [vmem:[%s222 + $0x38] sm:$0xf]
        %v757 = vld [vmem:[%s222 + $0x3c] sm:$0xf]
        %v758 = vld [vmem:[%s222 + $0x40] sm:$0xf]
        %v759 = vld [vmem:[%s222 + $0x44] sm:$0xf]
        %v760 = vld [vmem:[%s222 + $0x48] sm:$0xf]
        %v761 = vld [vmem:[%s222 + $0x4c] sm:$0xf]
        %v762 = vld [vmem:[%s222 + $0x50] sm:$0xf]
        %v763 = vld [vmem:[%s222 + $0x54] sm:$0xf]
        %v764 = vld [vmem:[%s222 + $0x58] sm:$0xf]
        %v765 = vld [vmem:[%s222 + $0x5c] sm:$0xf]
        %v766 = vld [vmem:[%s222 + $0x60] sm:$0xf]
        %v767 = vld [vmem:[%s222 + $0x64] sm:$0xf]
        %v768 = vld [vmem:[%s222 + $0x68] sm:$0xf]
        %v769 = vld [vmem:[%s222 + $0x6c] sm:$0xf]
        %v770 = vld [vmem:[%s222 + $0x70] sm:$0xf]
        %v771 = vld [vmem:[%s222 + $0x74] sm:$0xf]
        %v772 = vld [vmem:[%s222 + $0x78] sm:$0xf]
        %v773 = vld [vmem:[%s222 + $0x7c] sm:$0xf]
        %v774 = vld [vmem:[%s222 + $0x80] sm:$0xf]
        %v775 = vld [vmem:[%s222 + $0x84] sm:$0xf]
        %v776 = vld [vmem:[%s222 + $0x88] sm:$0xf]
        %v777 = vld [vmem:[%s222 + $0x8c] sm:$0xf]
        %v778 = vld [vmem:[%s222 + $0x90] sm:$0xf]
        %v779 = vld [vmem:[%s222 + $0x94] sm:$0xf]
        %v780 = vld [vmem:[%s222 + $0x98] sm:$0xf]
        %v781 = vld [vmem:[%s222 + $0x9c] sm:$0xf]
        %v782 = vld [vmem:[%s222 + $0xa0] sm:$0x3]
        %v1039 = vunpack.c.l.b16 %v486
        %v1040 = vunpack.c.h.b16 %v486
        %v1041 = vunpack.c.l.b16 %v487
        %v1042 = vunpack.c.l.b16 %v488
        %v1043 = vunpack.c.h.b16 %v488
        %v1044 = vunpack.c.l.b16 %v489
        %v1045 = vunpack.c.l.b16 %v490
        %v1046 = vunpack.c.h.b16 %v490
        %v1047 = vunpack.c.l.b16 %v491
        %v1048 = vunpack.c.l.b16 %v492
        %v1049 = vunpack.c.h.b16 %v492
        %v1050 = vunpack.c.l.b16 %v493
        %v1051 = vunpack.c.l.b16 %v494
        %v1052 = vunpack.c.h.b16 %v494
        %v1053 = vunpack.c.l.b16 %v495
        %v1054 = vunpack.c.l.b16 %v496
        %v1055 = vunpack.c.h.b16 %v496
        %v1056 = vunpack.c.l.b16 %v497
        %v1057 = vunpack.c.l.b16 %v498
        %v1058 = vunpack.c.h.b16 %v498
        %v1059 = vunpack.c.l.b16 %v499
        %v1060 = vunpack.c.l.b16 %v500
        %v1061 = vunpack.c.h.b16 %v500
        %v1062 = vunpack.c.l.b16 %v501
        %v1063 = vunpack.c.l.b16 %v502
        %v1064 = vunpack.c.h.b16 %v502
        %v1065 = vunpack.c.l.b16 %v503
        %v1066 = vunpack.c.l.b16 %v504
        %v1067 = vunpack.c.h.b16 %v504
        %v1068 = vunpack.c.l.b16 %v505
        %v1069 = vunpack.c.l.b16 %v506
        %v1070 = vunpack.c.h.b16 %v506
        %v1071 = vunpack.c.l.b16 %v507
        %v1072 = vunpack.c.l.b16 %v508
        %v1073 = vunpack.c.h.b16 %v508
        %v1074 = vunpack.c.l.b16 %v509
        %v1075 = vunpack.c.l.b16 %v510
        %v1076 = vunpack.c.h.b16 %v510
        %v1077 = vunpack.c.l.b16 %v511
        %v1078 = vunpack.c.l.b16 %v512
        %v1079 = vunpack.c.h.b16 %v512
        %v1080 = vunpack.c.l.b16 %v513
        %v1081 = vunpack.c.l.b16 %v514
        %v1082 = vunpack.c.h.b16 %v514
        %v1083 = vunpack.c.l.b16 %v515
        %v1084 = vunpack.c.l.b16 %v516
        %v1085 = vunpack.c.h.b16 %v516
        %v1086 = vunpack.c.l.b16 %v517
        %v1087 = vunpack.c.l.b16 %v518
        %v1088 = vunpack.c.h.b16 %v518
        %v1089 = vunpack.c.l.b16 %v519
        %v1090 = vunpack.c.l.b16 %v520
        %v1091 = vunpack.c.h.b16 %v520
        %v1092 = vunpack.c.l.b16 %v521
        %v1093 = vunpack.c.l.b16 %v522
        %v1094 = vunpack.c.h.b16 %v522
        %v1095 = vunpack.c.l.b16 %v523
        %v1096 = vunpack.c.l.b16 %v524
        %v1097 = vunpack.c.h.b16 %v524
        %v1098 = vunpack.c.l.b16 %v525
        %v1099 = vunpack.c.l.b16 %v526
        %v1100 = vunpack.c.h.b16 %v526
        %v1101 = vunpack.c.l.b16 %v527
        %v1102 = vunpack.c.l.b16 %v528
        %v1103 = vunpack.c.h.b16 %v528
        %v1104 = vunpack.c.l.b16 %v529
        %v1105 = vunpack.c.l.b16 %v530
        %v1106 = vunpack.c.h.b16 %v530
        %v1107 = vunpack.c.l.b16 %v531
        %v1108 = vunpack.c.l.b16 %v532
        %v1109 = vunpack.c.h.b16 %v532
        %v1110 = vunpack.c.l.b16 %v533
        %v1111 = vunpack.c.l.b16 %v534
        %v1112 = vunpack.c.h.b16 %v534
        %v1113 = vunpack.c.l.b16 %v535
        %v1114 = vunpack.c.l.b16 %v536
        %v1115 = vunpack.c.h.b16 %v536
        %v1116 = vunpack.c.l.b16 %v537
        %v1117 = vunpack.c.l.b16 %v538
        %v1118 = vunpack.c.h.b16 %v538
        %v1119 = vunpack.c.l.b16 %v539
        %v1120 = vunpack.c.l.b16 %v540
        %v1121 = vunpack.c.h.b16 %v540
        %v1122 = vunpack.c.l.b16 %v541
        %v1123 = vunpack.c.l.b16 %v542
        %v1124 = vunpack.c.h.b16 %v542
        %v1125 = vunpack.c.l.b16 %v543
        %v1126 = vunpack.c.l.b16 %v544
        %v1127 = vunpack.c.h.b16 %v544
        %v1128 = vunpack.c.l.b16 %v545
        %v1129 = vunpack.c.l.b16 %v546
        %v1130 = vunpack.c.h.b16 %v546
        %v1131 = vunpack.c.l.b16 %v547
        %v1132 = vunpack.c.l.b16 %v548
        %v1133 = vunpack.c.h.b16 %v548
        %v1134 = vunpack.c.l.b16 %v549
        %v1135 = vunpack.c.l.b16 %v550
        %v1136 = vunpack.c.h.b16 %v550
        %v1137 = vunpack.c.l.b16 %v551
        %v1138 = vunpack.c.l.b16 %v552
        %v1139 = vunpack.c.h.b16 %v552
        %v1140 = vunpack.c.l.b16 %v553
        %v1141 = vunpack.c.l.b16 %v554
        %v1142 = vunpack.c.h.b16 %v554
        %v1143 = vunpack.c.l.b16 %v555
        %v1144 = vunpack.c.l.b16 %v556
        %v1145 = vunpack.c.h.b16 %v556
        %v1146 = vunpack.c.l.b16 %v557
        %v1147 = vunpack.c.l.b16 %v558
        %v1148 = vunpack.c.h.b16 %v558
        %v1149 = vunpack.c.l.b16 %v559
        %v1150 = vunpack.c.l.b16 %v560
        %v1151 = vunpack.c.h.b16 %v560
        %v1152 = vunpack.c.l.b16 %v561
        %v1153 = vunpack.c.l.b16 %v562
        %v1154 = vunpack.c.h.b16 %v562
        %v1155 = vunpack.c.l.b16 %v563
        %v1156 = vunpack.c.l.b16 %v564
        %v1157 = vunpack.c.h.b16 %v564
        %v1158 = vunpack.c.l.b16 %v565
        %v1159 = vunpack.c.l.b16 %v566
        %v1160 = vunpack.c.h.b16 %v566
        %v1161 = vunpack.c.l.b16 %v567
        %v1162 = vunpack.c.l.b16 %v568
        %v1163 = vunpack.c.h.b16 %v568
        %v1164 = vunpack.c.l.b16 %v569
        %v1165 = vunpack.c.l.b16 %v570
        %v1166 = vunpack.c.h.b16 %v570
        %v1167 = vunpack.c.l.b16 %v571
        %v1168 = vunpack.c.l.b16 %v572
        %v1169 = vunpack.c.h.b16 %v572
        %v1170 = vunpack.c.l.b16 %v573
        %v1171 = vunpack.c.l.b16 %v574
        %v1172 = vunpack.c.h.b16 %v574
        %v1173 = vunpack.c.l.b16 %v575
        %v1174 = vunpack.c.l.b16 %v576
        %v1175 = vunpack.c.h.b16 %v576
        %v1176 = vunpack.c.l.b16 %v577
        %v1177 = vunpack.c.l.b16 %v578
        %v1178 = vunpack.c.h.b16 %v578
        %v1179 = vunpack.c.l.b16 %v579
        %v1180 = vunpack.c.l.b16 %v580
        %v1181 = vunpack.c.h.b16 %v580
        %v1182 = vunpack.c.l.b16 %v581
        %v1183 = vunpack.c.l.b16 %v582
        %v1184 = vunpack.c.h.b16 %v582
        %v1185 = vunpack.c.l.b16 %v583
        %v1186 = vunpack.c.l.b16 %v584
        %v1187 = vunpack.c.h.b16 %v584
        %v1188 = vunpack.c.l.b16 %v585
        %v1189 = vunpack.c.l.b16 %v586
        %v1190 = vunpack.c.h.b16 %v586
        %v1191 = vunpack.c.l.b16 %v587
        %v1192 = vunpack.c.l.b16 %v588
        %v1193 = vunpack.c.h.b16 %v588
        %v1194 = vunpack.c.l.b16 %v589
        %v1195 = vunpack.c.l.b16 %v590
        %v1196 = vunpack.c.h.b16 %v590
        %v1197 = vunpack.c.l.b16 %v591
        %v1198 = vunpack.c.l.b16 %v592
        %v1199 = vunpack.c.h.b16 %v592
        %v1200 = vunpack.c.l.b16 %v593
        %v1201 = vunpack.c.l.b16 %v594
        %v1202 = vunpack.c.h.b16 %v594
        %v1203 = vunpack.c.l.b16 %v595
        %v1204 = vunpack.c.l.b16 %v596
        %v1205 = vunpack.c.h.b16 %v596
        %v1206 = vunpack.c.l.b16 %v597
        %v1207 = vunpack.c.l.b16 %v598
        %v1208 = vunpack.c.h.b16 %v598
        %v1209 = vunpack.c.l.b16 %v599
        %v1210 = vunpack.c.l.b16 %v600
        %v1211 = vunpack.c.h.b16 %v600
        %v1212 = vunpack.c.l.b16 %v601
        %v1213 = vunpack.c.l.b16 %v602
        %v1214 = vunpack.c.h.b16 %v602
        %v1215 = vunpack.c.l.b16 %v603
        %v1216 = vunpack.c.l.b16 %v604
        %v1217 = vunpack.c.h.b16 %v604
        %v1218 = vunpack.c.l.b16 %v605
        %v1219 = vunpack.c.l.b16 %v606
        %v1220 = vunpack.c.h.b16 %v606
        %v1221 = vunpack.c.l.b16 %v607
        %v1222 = vunpack.c.l.b16 %v608
        %v1223 = vunpack.c.h.b16 %v608
        %v1224 = vunpack.c.l.b16 %v609
        %v1225 = vunpack.c.l.b16 %v610
        %v1226 = vunpack.c.h.b16 %v610
        %v1227 = vunpack.c.l.b16 %v611
        %v1228 = vunpack.c.l.b16 %v612
        %v1229 = vunpack.c.h.b16 %v612
        %v1230 = vunpack.c.l.b16 %v613
        %v1231 = vunpack.c.l.b16 %v614
        %v1232 = vunpack.c.h.b16 %v614
        %v1233 = vunpack.c.l.b16 %v615
        %v1234 = vunpack.c.l.b16 %v616
        %v1235 = vunpack.c.h.b16 %v616
        %v1236 = vunpack.c.l.b16 %v617
        %v1237 = vunpack.c.l.b16 %v618
        %v1238 = vunpack.c.h.b16 %v618
        %v1239 = vunpack.c.l.b16 %v619
        %v1240 = vunpack.c.l.b16 %v620
        %v1241 = vunpack.c.h.b16 %v620
        %v1242 = vunpack.c.l.b16 %v621
        %v1243 = vunpack.c.l.b16 %v622
        %v1244 = vunpack.c.h.b16 %v622
        %v1245 = vunpack.c.l.b16 %v623
        %v1246 = vunpack.c.l.b16 %v624
        %v1247 = vunpack.c.h.b16 %v624
        %v1248 = vunpack.c.l.b16 %v625
        %v1249 = vunpack.c.l.b16 %v626
        %v1250 = vunpack.c.h.b16 %v626
        %v1251 = vunpack.c.l.b16 %v627
        %v1252 = vunpack.c.l.b16 %v628
        %v1253 = vunpack.c.h.b16 %v628
        %v1254 = vunpack.c.l.b16 %v629
        %v1255 = vunpack.c.l.b16 %v630
        %v1256 = vunpack.c.h.b16 %v630
        %v1257 = vunpack.c.l.b16 %v631
        %v1258 = vunpack.c.l.b16 %v632
        %v1259 = vunpack.c.h.b16 %v632
        %v1260 = vunpack.c.l.b16 %v633
        %v1261 = vunpack.c.l.b16 %v634
        %v1262 = vunpack.c.h.b16 %v634
        %v1263 = vunpack.c.l.b16 %v635
        %v1264 = vunpack.c.l.b16 %v636
        %v1265 = vunpack.c.h.b16 %v636
        %v1266 = vunpack.c.l.b16 %v637
        %v1267 = vunpack.c.l.b16 %v638
        %v1268 = vunpack.c.h.b16 %v638
        %v1269 = vunpack.c.l.b16 %v639
        %v1270 = vunpack.c.l.b16 %v640
        %v1271 = vunpack.c.h.b16 %v640
        %v1272 = vunpack.c.l.b16 %v641
        %v1273 = vunpack.c.l.b16 %v642
        %v1274 = vunpack.c.h.b16 %v642
        %v1275 = vunpack.c.l.b16 %v643
        %v1276 = vunpack.c.l.b16 %v644
        %v1277 = vunpack.c.h.b16 %v644
        %v1278 = vunpack.c.l.b16 %v645
        %v1279 = vunpack.c.l.b16 %v646
        %v1280 = vunpack.c.h.b16 %v646
        %v1281 = vunpack.c.l.b16 %v647
        %v1282 = vunpack.c.l.b16 %v648
        %v1283 = vunpack.c.h.b16 %v648
        %v1284 = vunpack.c.l.b16 %v649
        %v1285 = vunpack.c.l.b16 %v650
        %v1286 = vunpack.c.h.b16 %v650
        %v1287 = vunpack.c.l.b16 %v651
        %v1288 = vunpack.c.l.b16 %v652
        %v1289 = vunpack.c.h.b16 %v652
        %v1290 = vunpack.c.l.b16 %v653
        %v1291 = vunpack.c.l.b16 %v654
        %v1292 = vunpack.c.h.b16 %v654
        %v1293 = vunpack.c.l.b16 %v655
        %v1294 = vunpack.c.l.b16 %v656
        %v1295 = vunpack.c.h.b16 %v656
        %v1296 = vunpack.c.l.b16 %v657
        %v1297 = vunpack.c.l.b16 %v658
        %v1298 = vunpack.c.h.b16 %v658
        %v1299 = vunpack.c.l.b16 %v659
        %v1300 = vunpack.c.l.b16 %v660
        %v1301 = vunpack.c.h.b16 %v660
        %v1302 = vunpack.c.l.b16 %v661
        %v1303 = vunpack.c.l.b16 %v662
        %v1304 = vunpack.c.h.b16 %v662
        %v1305 = vunpack.c.l.b16 %v663
        %v1306 = vunpack.c.l.b16 %v664
        %v1307 = vunpack.c.h.b16 %v664
        %v1308 = vunpack.c.l.b16 %v665
        %v1309 = vunpack.c.l.b16 %v666
        %v1310 = vunpack.c.h.b16 %v666
        %v1311 = vunpack.c.l.b16 %v667
        %v1312 = vunpack.c.l.b16 %v668
        %v1313 = vunpack.c.h.b16 %v668
        %v1314 = vunpack.c.l.b16 %v669
        %v1315 = vunpack.c.l.b16 %v670
        %v1316 = vunpack.c.h.b16 %v670
        %v1317 = vunpack.c.l.b16 %v671
        %v1318 = vunpack.c.l.b16 %v672
        %v1319 = vunpack.c.h.b16 %v672
        %v1320 = vunpack.c.l.b16 %v673
        %v1321 = vunpack.c.l.b16 %v674
        %v1322 = vunpack.c.h.b16 %v674
        %v1323 = vunpack.c.l.b16 %v675
        %v1324 = vunpack.c.l.b16 %v676
        %v1325 = vunpack.c.h.b16 %v676
        %v1326 = vunpack.c.l.b16 %v677
        %v1327 = vunpack.c.l.b16 %v678
        %v1328 = vunpack.c.h.b16 %v678
        %v1329 = vunpack.c.l.b16 %v679
        %v1330 = vunpack.c.l.b16 %v680
        %v1331 = vunpack.c.h.b16 %v680
        %v1332 = vunpack.c.l.b16 %v681
        %v1333 = vunpack.c.l.b16 %v682
        %v1334 = vunpack.c.h.b16 %v682
        %v1335 = vunpack.c.l.b16 %v683
        %v1336 = vunpack.c.l.b16 %v684
        %v1337 = vunpack.c.h.b16 %v684
        %v1338 = vunpack.c.l.b16 %v685
        %v1339 = vunpack.c.l.b16 %v686
        %v1340 = vunpack.c.h.b16 %v686
        %v1341 = vunpack.c.l.b16 %v687
        %v1342 = vunpack.c.l.b16 %v688
        %v1343 = vunpack.c.h.b16 %v688
        %v1344 = vunpack.c.l.b16 %v689
        %v1345 = vunpack.c.l.b16 %v690
        %v1346 = vunpack.c.h.b16 %v690
        %v1347 = vunpack.c.l.b16 %v691
        %v1348 = vunpack.c.l.b16 %v692
        %v1349 = vunpack.c.h.b16 %v692
        %v1350 = vunpack.c.l.b16 %v693
        %v1351 = vunpack.c.l.b16 %v694
        %v1352 = vunpack.c.h.b16 %v694
        %v1353 = vunpack.c.l.b16 %v695
        %v1354 = vunpack.c.l.b16 %v696
        %v1355 = vunpack.c.h.b16 %v696
        %v1356 = vunpack.c.l.b16 %v697
        %v1357 = vunpack.c.l.b16 %v698
        %v1358 = vunpack.c.h.b16 %v698
        %v1359 = vunpack.c.l.b16 %v699
        %v1360 = vunpack.c.l.b16 %v700
        %v1361 = vunpack.c.h.b16 %v700
        %v1362 = vunpack.c.l.b16 %v701
        %v1363 = vunpack.c.l.b16 %v702
        %v1364 = vunpack.c.h.b16 %v702
        %v1365 = vunpack.c.l.b16 %v703
        %v1366 = vunpack.c.l.b16 %v704
        %v1367 = vunpack.c.h.b16 %v704
        %v1368 = vunpack.c.l.b16 %v705
        %v1369 = vunpack.c.l.b16 %v706
        %v1370 = vunpack.c.h.b16 %v706
        %v1371 = vunpack.c.l.b16 %v707
        %v1372 = vunpack.c.l.b16 %v708
        %v1373 = vunpack.c.h.b16 %v708
        %v1374 = vunpack.c.l.b16 %v709
        %v1375 = vunpack.c.l.b16 %v710
        %v1376 = vunpack.c.h.b16 %v710
        %v1377 = vunpack.c.l.b16 %v711
        %v1378 = vunpack.c.l.b16 %v712
        %v1379 = vunpack.c.h.b16 %v712
        %v1380 = vunpack.c.l.b16 %v713
        %v1381 = vunpack.c.l.b16 %v714
        %v1382 = vunpack.c.h.b16 %v714
        %v1383 = vunpack.c.l.b16 %v715
        %v1384 = vunpack.c.l.b16 %v716
        %v1385 = vunpack.c.h.b16 %v716
        %v1386 = vunpack.c.l.b16 %v717
        %v1387 = vunpack.c.l.b16 %v718
        %v1388 = vunpack.c.h.b16 %v718
        %v1389 = vunpack.c.l.b16 %v719
        %v1390 = vunpack.c.l.b16 %v720
        %v1391 = vunpack.c.h.b16 %v720
        %v1392 = vunpack.c.l.b16 %v721
        %v1393 = vunpack.c.l.b16 %v722
        %v1394 = vunpack.c.h.b16 %v722
        %v1395 = vunpack.c.l.b16 %v723
        %v1396 = vunpack.c.l.b16 %v724
        %v1397 = vunpack.c.h.b16 %v724
        %v1398 = vunpack.c.l.b16 %v725
        %v1399 = vunpack.c.l.b16 %v726
        %v1400 = vunpack.c.h.b16 %v726
        %v1401 = vunpack.c.l.b16 %v727
        %v1402 = vunpack.c.l.b16 %v728
        %v1403 = vunpack.c.h.b16 %v728
        %v1404 = vunpack.c.l.b16 %v729
        %v1405 = vunpack.c.l.b16 %v730
        %v1406 = vunpack.c.h.b16 %v730
        %v1407 = vunpack.c.l.b16 %v731
        %v1408 = vunpack.c.l.b16 %v732
        %v1409 = vunpack.c.h.b16 %v732
        %v1410 = vunpack.c.l.b16 %v733
        %v1411 = vunpack.c.l.b16 %v734
        %v1412 = vunpack.c.h.b16 %v734
        %v1413 = vunpack.c.l.b16 %v735
        %v1414 = vunpack.c.l.b16 %v736
        %v1415 = vunpack.c.h.b16 %v736
        %v1416 = vunpack.c.l.b16 %v737
        %v1417 = vunpack.c.l.b16 %v738
        %v1418 = vunpack.c.h.b16 %v738
        %v1419 = vunpack.c.l.b16 %v739
        %v1420 = vunpack.c.l.b16 %v740
        %v1421 = vunpack.c.h.b16 %v740
        %v1422 = vunpack.c.l.b16 %v741
        %v1423 = vpack.c.b16 %v1042, %v1039
        %v1424 = vpack.c.b16 %v1043, %v1040
        %v1425 = vpack.c.b16 %v1044, %v1041
        %v1426 = vpack.c.b16 %v1048, %v1045
        %v1427 = vpack.c.b16 %v1049, %v1046
        %v1428 = vpack.c.b16 %v1050, %v1047
        %v1429 = vpack.c.b16 %v1054, %v1051
        %v1430 = vpack.c.b16 %v1055, %v1052
        %v1431 = vpack.c.b16 %v1056, %v1053
        %v1432 = vpack.c.b16 %v1060, %v1057
        %v1433 = vpack.c.b16 %v1061, %v1058
        %v1434 = vpack.c.b16 %v1062, %v1059
        %v1435 = vpack.c.b16 %v1066, %v1063
        %v1436 = vpack.c.b16 %v1067, %v1064
        %v1437 = vpack.c.b16 %v1068, %v1065
        %v1438 = vpack.c.b16 %v1072, %v1069
        %v1439 = vpack.c.b16 %v1073, %v1070
        %v1440 = vpack.c.b16 %v1074, %v1071
        %v1441 = vpack.c.b16 %v1078, %v1075
        %v1442 = vpack.c.b16 %v1079, %v1076
        %v1443 = vpack.c.b16 %v1080, %v1077
        %v1444 = vpack.c.b16 %v1084, %v1081
        %v1445 = vpack.c.b16 %v1085, %v1082
        %v1446 = vpack.c.b16 %v1086, %v1083
        %v1447 = vpack.c.b16 %v1090, %v1087
        %v1448 = vpack.c.b16 %v1091, %v1088
        %v1449 = vpack.c.b16 %v1092, %v1089
        %v1450 = vpack.c.b16 %v1096, %v1093
        %v1451 = vpack.c.b16 %v1097, %v1094
        %v1452 = vpack.c.b16 %v1098, %v1095
        %v1453 = vpack.c.b16 %v1102, %v1099
        %v1454 = vpack.c.b16 %v1103, %v1100
        %v1455 = vpack.c.b16 %v1104, %v1101
        %v1456 = vpack.c.b16 %v1108, %v1105
        %v1457 = vpack.c.b16 %v1109, %v1106
        %v1458 = vpack.c.b16 %v1110, %v1107
        %v1459 = vpack.c.b16 %v1114, %v1111
        %v1460 = vpack.c.b16 %v1115, %v1112
        %v1461 = vpack.c.b16 %v1116, %v1113
        %v1462 = vpack.c.b16 %v1120, %v1117
        %v1463 = vpack.c.b16 %v1121, %v1118
        %v1464 = vpack.c.b16 %v1122, %v1119
        %v1465 = vpack.c.b16 %v1126, %v1123
        %v1466 = vpack.c.b16 %v1127, %v1124
        %v1467 = vpack.c.b16 %v1128, %v1125
        %v1468 = vpack.c.b16 %v1132, %v1129
        %v1469 = vpack.c.b16 %v1133, %v1130
        %v1470 = vpack.c.b16 %v1134, %v1131
        %v1471 = vpack.c.b16 %v1138, %v1135
        %v1472 = vpack.c.b16 %v1139, %v1136
        %v1473 = vpack.c.b16 %v1140, %v1137
        %v1474 = vpack.c.b16 %v1144, %v1141
        %v1475 = vpack.c.b16 %v1145, %v1142
        %v1476 = vpack.c.b16 %v1146, %v1143
        %v1477 = vpack.c.b16 %v1150, %v1147
        %v1478 = vpack.c.b16 %v1151, %v1148
        %v1479 = vpack.c.b16 %v1152, %v1149
        %v1480 = vpack.c.b16 %v1156, %v1153
        %v1481 = vpack.c.b16 %v1157, %v1154
        %v1482 = vpack.c.b16 %v1158, %v1155
        %v1483 = vpack.c.b16 %v1162, %v1159
        %v1484 = vpack.c.b16 %v1163, %v1160
        %v1485 = vpack.c.b16 %v1164, %v1161
        %v1486 = vpack.c.b16 %v1168, %v1165
        %v1487 = vpack.c.b16 %v1169, %v1166
        %v1488 = vpack.c.b16 %v1170, %v1167
        %v1489 = vpack.c.b16 %v1174, %v1171
        %v1490 = vpack.c.b16 %v1175, %v1172
        %v1491 = vpack.c.b16 %v1176, %v1173
        %v1492 = vpack.c.b16 %v1180, %v1177
        %v1493 = vpack.c.b16 %v1181, %v1178
        %v1494 = vpack.c.b16 %v1182, %v1179
        %v1495 = vpack.c.b16 %v1186, %v1183
        %v1496 = vpack.c.b16 %v1187, %v1184
        %v1497 = vpack.c.b16 %v1188, %v1185
        %v1498 = vpack.c.b16 %v1192, %v1189
        %v1499 = vpack.c.b16 %v1193, %v1190
        %v1500 = vpack.c.b16 %v1194, %v1191
        %v1501 = vpack.c.b16 %v1198, %v1195
        %v1502 = vpack.c.b16 %v1199, %v1196
        %v1503 = vpack.c.b16 %v1200, %v1197
        %v1504 = vpack.c.b16 %v1204, %v1201
        %v1505 = vpack.c.b16 %v1205, %v1202
        %v1506 = vpack.c.b16 %v1206, %v1203
        %v1507 = vpack.c.b16 %v1210, %v1207
        %v1508 = vpack.c.b16 %v1211, %v1208
        %v1509 = vpack.c.b16 %v1212, %v1209
        %v1510 = vpack.c.b16 %v1216, %v1213
        %v1511 = vpack.c.b16 %v1217, %v1214
        %v1512 = vpack.c.b16 %v1218, %v1215
        %v1513 = vpack.c.b16 %v1222, %v1219
        %v1514 = vpack.c.b16 %v1223, %v1220
        %v1515 = vpack.c.b16 %v1224, %v1221
        %v1516 = vpack.c.b16 %v1228, %v1225
        %v1517 = vpack.c.b16 %v1229, %v1226
        %v1518 = vpack.c.b16 %v1230, %v1227
        %v1519 = vpack.c.b16 %v1234, %v1231
        %v1520 = vpack.c.b16 %v1235, %v1232
        %v1521 = vpack.c.b16 %v1236, %v1233
        %v1522 = vpack.c.b16 %v1240, %v1237
        %v1523 = vpack.c.b16 %v1241, %v1238
        %v1524 = vpack.c.b16 %v1242, %v1239
        %v1525 = vpack.c.b16 %v1246, %v1243
        %v1526 = vpack.c.b16 %v1247, %v1244
        %v1527 = vpack.c.b16 %v1248, %v1245
        %v1528 = vpack.c.b16 %v1252, %v1249
        %v1529 = vpack.c.b16 %v1253, %v1250
        %v1530 = vpack.c.b16 %v1254, %v1251
        %v1531 = vpack.c.b16 %v1258, %v1255
        %v1532 = vpack.c.b16 %v1259, %v1256
        %v1533 = vpack.c.b16 %v1260, %v1257
        %v1534 = vpack.c.b16 %v1264, %v1261
        %v1535 = vpack.c.b16 %v1265, %v1262
        %v1536 = vpack.c.b16 %v1266, %v1263
        %v1537 = vpack.c.b16 %v1270, %v1267
        %v1538 = vpack.c.b16 %v1271, %v1268
        %v1539 = vpack.c.b16 %v1272, %v1269
        %v1540 = vpack.c.b16 %v1276, %v1273
        %v1541 = vpack.c.b16 %v1277, %v1274
        %v1542 = vpack.c.b16 %v1278, %v1275
        %v1543 = vpack.c.b16 %v1282, %v1279
        %v1544 = vpack.c.b16 %v1283, %v1280
        %v1545 = vpack.c.b16 %v1284, %v1281
        %v1546 = vpack.c.b16 %v1288, %v1285
        %v1547 = vpack.c.b16 %v1289, %v1286
        %v1548 = vpack.c.b16 %v1290, %v1287
        %v1549 = vpack.c.b16 %v1294, %v1291
        %v1550 = vpack.c.b16 %v1295, %v1292
        %v1551 = vpack.c.b16 %v1296, %v1293
        %v1552 = vpack.c.b16 %v1300, %v1297
        %v1553 = vpack.c.b16 %v1301, %v1298
        %v1554 = vpack.c.b16 %v1302, %v1299
        %v1555 = vpack.c.b16 %v1306, %v1303
        %v1556 = vpack.c.b16 %v1307, %v1304
        %v1557 = vpack.c.b16 %v1308, %v1305
        %v1558 = vpack.c.b16 %v1312, %v1309
        %v1559 = vpack.c.b16 %v1313, %v1310
        %v1560 = vpack.c.b16 %v1314, %v1311
        %v1561 = vpack.c.b16 %v1318, %v1315
        %v1562 = vpack.c.b16 %v1319, %v1316
        %v1563 = vpack.c.b16 %v1320, %v1317
        %v1564 = vpack.c.b16 %v1324, %v1321
        %v1565 = vpack.c.b16 %v1325, %v1322
        %v1566 = vpack.c.b16 %v1326, %v1323
        %v1567 = vpack.c.b16 %v1330, %v1327
        %v1568 = vpack.c.b16 %v1331, %v1328
        %v1569 = vpack.c.b16 %v1332, %v1329
        %v1570 = vpack.c.b16 %v1336, %v1333
        %v1571 = vpack.c.b16 %v1337, %v1334
        %v1572 = vpack.c.b16 %v1338, %v1335
        %v1573 = vpack.c.b16 %v1342, %v1339
        %v1574 = vpack.c.b16 %v1343, %v1340
        %v1575 = vpack.c.b16 %v1344, %v1341
        %v1576 = vpack.c.b16 %v1348, %v1345
        %v1577 = vpack.c.b16 %v1349, %v1346
        %v1578 = vpack.c.b16 %v1350, %v1347
        %v1579 = vpack.c.b16 %v1354, %v1351
        %v1580 = vpack.c.b16 %v1355, %v1352
        %v1581 = vpack.c.b16 %v1356, %v1353
        %v1582 = vpack.c.b16 %v1360, %v1357
        %v1583 = vpack.c.b16 %v1361, %v1358
        %v1584 = vpack.c.b16 %v1362, %v1359
        %v1585 = vpack.c.b16 %v1366, %v1363
        %v1586 = vpack.c.b16 %v1367, %v1364
        %v1587 = vpack.c.b16 %v1368, %v1365
        %v1588 = vpack.c.b16 %v1372, %v1369
        %v1589 = vpack.c.b16 %v1373, %v1370
        %v1590 = vpack.c.b16 %v1374, %v1371
        %v1591 = vpack.c.b16 %v1378, %v1375
        %v1592 = vpack.c.b16 %v1379, %v1376
        %v1593 = vpack.c.b16 %v1380, %v1377
        %v1594 = vpack.c.b16 %v1384, %v1381
        %v1595 = vpack.c.b16 %v1385, %v1382
        %v1596 = vpack.c.b16 %v1386, %v1383
        %v1597 = vpack.c.b16 %v1390, %v1387
        %v1598 = vpack.c.b16 %v1391, %v1388
        %v1599 = vpack.c.b16 %v1392, %v1389
        %v1600 = vpack.c.b16 %v1396, %v1393
        %v1601 = vpack.c.b16 %v1397, %v1394
        %v1602 = vpack.c.b16 %v1398, %v1395
        %v1603 = vpack.c.b16 %v1402, %v1399
        %v1604 = vpack.c.b16 %v1403, %v1400
        %v1605 = vpack.c.b16 %v1404, %v1401
        %v1606 = vpack.c.b16 %v1408, %v1405
        %v1607 = vpack.c.b16 %v1409, %v1406
        %v1608 = vpack.c.b16 %v1410, %v1407
        %v1609 = vpack.c.b16 %v1414, %v1411
        %v1610 = vpack.c.b16 %v1415, %v1412
        %v1611 = vpack.c.b16 %v1416, %v1413
        %v1612 = vpack.c.b16 %v1420, %v1417
        %v1613 = vpack.c.b16 %v1421, %v1418
        %v1614 = vpack.c.b16 %v1422, %v1419
        %v1784 = vunpack.c.l.b16 %v742
        %v1785 = vunpack.c.l.b16 %v743
        %v1786 = vunpack.c.l.b16 %v744
        %v1787 = vunpack.c.l.b16 %v745
        %v1788 = vunpack.c.l.b16 %v746
        %v1789 = vunpack.c.l.b16 %v747
        %v1790 = vunpack.c.l.b16 %v748
        %v1791 = vunpack.c.l.b16 %v749
        %v1792 = vunpack.c.l.b16 %v750
        %v1793 = vunpack.c.l.b16 %v751
        %v1794 = vunpack.c.l.b16 %v752
        %v1795 = vunpack.c.l.b16 %v753
        %v1796 = vunpack.c.l.b16 %v754
        %v1797 = vunpack.c.l.b16 %v755
        %v1798 = vunpack.c.l.b16 %v756
        %v1799 = vunpack.c.l.b16 %v757
        %v1800 = vunpack.c.l.b16 %v758
        %v1801 = vunpack.c.l.b16 %v759
        %v1802 = vunpack.c.l.b16 %v760
        %v1803 = vunpack.c.l.b16 %v761
        %v1804 = vunpack.c.l.b16 %v762
        %v1805 = vunpack.c.l.b16 %v763
        %v1806 = vunpack.c.l.b16 %v764
        %v1807 = vunpack.c.l.b16 %v765
        %v1808 = vunpack.c.l.b16 %v766
        %v1809 = vunpack.c.l.b16 %v767
        %v1810 = vunpack.c.l.b16 %v768
        %v1811 = vunpack.c.l.b16 %v769
        %v1812 = vunpack.c.l.b16 %v770
        %v1813 = vunpack.c.l.b16 %v771
        %v1814 = vunpack.c.l.b16 %v772
        %v1815 = vunpack.c.l.b16 %v773
        %v1816 = vunpack.c.l.b16 %v774
        %v1817 = vunpack.c.l.b16 %v775
        %v1818 = vunpack.c.l.b16 %v776
        %v1819 = vunpack.c.l.b16 %v777
        %v1820 = vunpack.c.l.b16 %v778
        %v1821 = vunpack.c.l.b16 %v779
        %v1822 = vunpack.c.l.b16 %v780
        %v1823 = vunpack.c.l.b16 %v781
        %v1824 = vunpack.c.l.b16 %v782
        %v1825 = vpack.c.b16 %v1785, %v1784
        %v1826 = vpack.c.b16 %v1787, %v1786
        %v1827 = vpack.c.b16 %v1789, %v1788
        %v1828 = vpack.c.b16 %v1791, %v1790
        %v1829 = vpack.c.b16 %v1793, %v1792
        %v1830 = vpack.c.b16 %v1795, %v1794
        %v1831 = vpack.c.b16 %v1797, %v1796
        %v1832 = vpack.c.b16 %v1799, %v1798
        %v1833 = vpack.c.b16 %v1801, %v1800
        %v1834 = vpack.c.b16 %v1803, %v1802
        %v1835 = vpack.c.b16 %v1805, %v1804
        %v1836 = vpack.c.b16 %v1807, %v1806
        %v1837 = vpack.c.b16 %v1809, %v1808
        %v1838 = vpack.c.b16 %v1811, %v1810
        %v1839 = vpack.c.b16 %v1813, %v1812
        %v1840 = vpack.c.b16 %v1815, %v1814
        %v1841 = vpack.c.b16 %v1817, %v1816
        %v1842 = vpack.c.b16 %v1819, %v1818
        %v1843 = vpack.c.b16 %v1821, %v1820
        %v1844 = vpack.c.b16 %v1823, %v1822
        %v1845 = vpack.c.b16 %v1824, %v1824
        %vm1866 = vcmask 556032
        %v1868 = vsel %vm1866, %v1425, 0
        %v1871 = vsel %vm1866, %v1428, 0
        %v1874 = vsel %vm1866, %v1431, 0
        %v1877 = vsel %vm1866, %v1434, 0
        %v1880 = vsel %vm1866, %v1437, 0
        %v1883 = vsel %vm1866, %v1440, 0
        %v1886 = vsel %vm1866, %v1443, 0
        %v1889 = vsel %vm1866, %v1446, 0
        %v1892 = vsel %vm1866, %v1449, 0
        %v1895 = vsel %vm1866, %v1452, 0
        %v1898 = vsel %vm1866, %v1455, 0
        %v1901 = vsel %vm1866, %v1458, 0
        %v1904 = vsel %vm1866, %v1461, 0
        %v1907 = vsel %vm1866, %v1464, 0
        %v1910 = vsel %vm1866, %v1467, 0
        %v1913 = vsel %vm1866, %v1470, 0
        %v1916 = vsel %vm1866, %v1473, 0
        %v1919 = vsel %vm1866, %v1476, 0
        %v1922 = vsel %vm1866, %v1479, 0
        %v1925 = vsel %vm1866, %v1482, 0
        %v1928 = vsel %vm1866, %v1485, 0
        %v1931 = vsel %vm1866, %v1488, 0
        %v1934 = vsel %vm1866, %v1491, 0
        %v1937 = vsel %vm1866, %v1494, 0
        %v1940 = vsel %vm1866, %v1497, 0
        %v1943 = vsel %vm1866, %v1500, 0
        %v1946 = vsel %vm1866, %v1503, 0
        %v1949 = vsel %vm1866, %v1506, 0
        %v1952 = vsel %vm1866, %v1509, 0
        %v1955 = vsel %vm1866, %v1512, 0
        %v1958 = vsel %vm1866, %v1515, 0
        %v1961 = vsel %vm1866, %v1518, 0
        %v1964 = vsel %vm1866, %v1521, 0
        %v1967 = vsel %vm1866, %v1524, 0
        %v1970 = vsel %vm1866, %v1527, 0
        %v1973 = vsel %vm1866, %v1530, 0
        %v1976 = vsel %vm1866, %v1533, 0
        %v1979 = vsel %vm1866, %v1536, 0
        %v1982 = vsel %vm1866, %v1539, 0
        %v1985 = vsel %vm1866, %v1542, 0
        %v1988 = vsel %vm1866, %v1545, 0
        %v1991 = vsel %vm1866, %v1548, 0
        %v1994 = vsel %vm1866, %v1551, 0
        %v1997 = vsel %vm1866, %v1554, 0
        %v2000 = vsel %vm1866, %v1557, 0
        %v2003 = vsel %vm1866, %v1560, 0
        %v2006 = vsel %vm1866, %v1563, 0
        %v2009 = vsel %vm1866, %v1566, 0
        %v2012 = vsel %vm1866, %v1569, 0
        %v2015 = vsel %vm1866, %v1572, 0
        %v2018 = vsel %vm1866, %v1575, 0
        %v2021 = vsel %vm1866, %v1578, 0
        %v2024 = vsel %vm1866, %v1581, 0
        %v2027 = vsel %vm1866, %v1584, 0
        %v2030 = vsel %vm1866, %v1587, 0
        %v2033 = vsel %vm1866, %v1590, 0
        %v2036 = vsel %vm1866, %v1593, 0
        %v2039 = vsel %vm1866, %v1596, 0
        %v2042 = vsel %vm1866, %v1599, 0
        %v2045 = vsel %vm1866, %v1602, 0
        %v2048 = vsel %vm1866, %v1605, 0
        %v2051 = vsel %vm1866, %v1608, 0
        %v2054 = vsel %vm1866, %v1611, 0
        %v2057 = vsel %vm1866, %v1614, 0
        %vm2059 = vcmask 1041408
        %v2061 = vsel %vm2059, %v1845, 0
        %2063 = vmatpush.bf16.msra.mxu0 %v1832
        %2064 = vmatpush.bf16.msra.mxu0 %v1831
        %2065 = vmatpush.bf16.msra.mxu0 %v1830
        %2066 = vmatpush.bf16.msra.mxu0 %v1829
        %2067 = vmatpush.bf16.msra.mxu0 %v1828
        %2068 = vmatpush.bf16.msra.mxu0 %v1827
        %2069 = vmatpush.bf16.msra.mxu0 %v1826
        %2070 = vmatpush.bf16.msra.mxu0 %v1825
        %2071 = vmatmul.bf16.gmra.mxu0 %v1423
        %v2072 = vpop.f32.mrf.mxu0
        %v2073 = vadd.f32 0.0, %v2072
        %v2074 = vpop.f32.mrf.mxu0
        %v2075 = vadd.f32 0.0, %v2074
        %2076 = vmatmul.bf16.gmra.mxu0 %v1426
        %v2077 = vpop.f32.mrf.mxu0
        %v2078 = vadd.f32 0.0, %v2077
        %v2079 = vpop.f32.mrf.mxu0
        %v2080 = vadd.f32 0.0, %v2079
        %2081 = vmatmul.bf16.gmra.mxu0 %v1429
        %v2082 = vpop.f32.mrf.mxu0
        %v2083 = vadd.f32 0.0, %v2082
        %v2084 = vpop.f32.mrf.mxu0
        %v2085 = vadd.f32 0.0, %v2084
        %2086 = vmatmul.bf16.gmra.mxu0 %v1432
        %v2087 = vpop.f32.mrf.mxu0
        %v2088 = vadd.f32 0.0, %v2087
        %v2089 = vpop.f32.mrf.mxu0
        %v2090 = vadd.f32 0.0, %v2089
        %2091 = vmatmul.bf16.gmra.mxu0 %v1435
        %v2092 = vpop.f32.mrf.mxu0
        %v2093 = vadd.f32 0.0, %v2092
        %v2094 = vpop.f32.mrf.mxu0
        %v2095 = vadd.f32 0.0, %v2094
        %2096 = vmatmul.bf16.gmra.mxu0 %v1438
        %v2097 = vpop.f32.mrf.mxu0
        %v2098 = vadd.f32 0.0, %v2097
        %v2099 = vpop.f32.mrf.mxu0
        %v2100 = vadd.f32 0.0, %v2099
        %2101 = vmatmul.bf16.gmra.mxu0 %v1441
        %v2102 = vpop.f32.mrf.mxu0
        %v2103 = vadd.f32 0.0, %v2102
        %v2104 = vpop.f32.mrf.mxu0
        %v2105 = vadd.f32 0.0, %v2104
        %2106 = vmatmul.bf16.gmra.mxu0 %v1444
        %v2107 = vpop.f32.mrf.mxu0
        %v2108 = vadd.f32 0.0, %v2107
        %v2109 = vpop.f32.mrf.mxu0
        %v2110 = vadd.f32 0.0, %v2109
        %2111 = vmatmul.bf16.gmra.mxu0 %v1447
        %v2112 = vpop.f32.mrf.mxu0
        %v2113 = vadd.f32 0.0, %v2112
        %v2114 = vpop.f32.mrf.mxu0
        %v2115 = vadd.f32 0.0, %v2114
        %2116 = vmatmul.bf16.gmra.mxu0 %v1450
        %v2117 = vpop.f32.mrf.mxu0
        %v2118 = vadd.f32 0.0, %v2117
        %v2119 = vpop.f32.mrf.mxu0
        %v2120 = vadd.f32 0.0, %v2119
        %2121 = vmatmul.bf16.gmra.mxu0 %v1453
        %v2122 = vpop.f32.mrf.mxu0
        %v2123 = vadd.f32 0.0, %v2122
        %v2124 = vpop.f32.mrf.mxu0
        %v2125 = vadd.f32 0.0, %v2124
        %2126 = vmatmul.bf16.gmra.mxu0 %v1456
        %v2127 = vpop.f32.mrf.mxu0
        %v2128 = vadd.f32 0.0, %v2127
        %v2129 = vpop.f32.mrf.mxu0
        %v2130 = vadd.f32 0.0, %v2129
        %2131 = vmatmul.bf16.gmra.mxu0 %v1459
        %v2132 = vpop.f32.mrf.mxu0
        %v2133 = vadd.f32 0.0, %v2132
        %v2134 = vpop.f32.mrf.mxu0
        %v2135 = vadd.f32 0.0, %v2134
        %2136 = vmatmul.bf16.gmra.mxu0 %v1462
        %v2137 = vpop.f32.mrf.mxu0
        %v2138 = vadd.f32 0.0, %v2137
        %v2139 = vpop.f32.mrf.mxu0
        %v2140 = vadd.f32 0.0, %v2139
        %2141 = vmatmul.bf16.gmra.mxu0 %v1465
        %v2142 = vpop.f32.mrf.mxu0
        %v2143 = vadd.f32 0.0, %v2142
        %v2144 = vpop.f32.mrf.mxu0
        %v2145 = vadd.f32 0.0, %v2144
        %2146 = vmatmul.bf16.gmra.mxu0 %v1468
        %v2147 = vpop.f32.mrf.mxu0
        %v2148 = vadd.f32 0.0, %v2147
        %v2149 = vpop.f32.mrf.mxu0
        %v2150 = vadd.f32 0.0, %v2149
        %2151 = vmatmul.bf16.gmra.mxu0 %v1471
        %v2152 = vpop.f32.mrf.mxu0
        %v2153 = vadd.f32 0.0, %v2152
        %v2154 = vpop.f32.mrf.mxu0
        %v2155 = vadd.f32 0.0, %v2154
        %2156 = vmatmul.bf16.gmra.mxu0 %v1474
        %v2157 = vpop.f32.mrf.mxu0
        %v2158 = vadd.f32 0.0, %v2157
        %v2159 = vpop.f32.mrf.mxu0
        %v2160 = vadd.f32 0.0, %v2159
        %2161 = vmatmul.bf16.gmra.mxu0 %v1477
        %v2162 = vpop.f32.mrf.mxu0
        %v2163 = vadd.f32 0.0, %v2162
        %v2164 = vpop.f32.mrf.mxu0
        %v2165 = vadd.f32 0.0, %v2164
        %2166 = vmatmul.bf16.gmra.mxu0 %v1480
        %v2167 = vpop.f32.mrf.mxu0
        %v2168 = vadd.f32 0.0, %v2167
        %v2169 = vpop.f32.mrf.mxu0
        %v2170 = vadd.f32 0.0, %v2169
        %2171 = vmatmul.bf16.gmra.mxu0 %v1483
        %v2172 = vpop.f32.mrf.mxu0
        %v2173 = vadd.f32 0.0, %v2172
        %v2174 = vpop.f32.mrf.mxu0
        %v2175 = vadd.f32 0.0, %v2174
        %2176 = vmatmul.bf16.gmra.mxu0 %v1486
        %v2177 = vpop.f32.mrf.mxu0
        %v2178 = vadd.f32 0.0, %v2177
        %v2179 = vpop.f32.mrf.mxu0
        %v2180 = vadd.f32 0.0, %v2179
        %2181 = vmatmul.bf16.gmra.mxu0 %v1489
        %v2182 = vpop.f32.mrf.mxu0
        %v2183 = vadd.f32 0.0, %v2182
        %v2184 = vpop.f32.mrf.mxu0
        %v2185 = vadd.f32 0.0, %v2184
        %2186 = vmatmul.bf16.gmra.mxu0 %v1492
        %v2187 = vpop.f32.mrf.mxu0
        %v2188 = vadd.f32 0.0, %v2187
        %v2189 = vpop.f32.mrf.mxu0
        %v2190 = vadd.f32 0.0, %v2189
        %2191 = vmatmul.bf16.gmra.mxu0 %v1495
        %v2192 = vpop.f32.mrf.mxu0
        %v2193 = vadd.f32 0.0, %v2192
        %v2194 = vpop.f32.mrf.mxu0
        %v2195 = vadd.f32 0.0, %v2194
        %2196 = vmatmul.bf16.gmra.mxu0 %v1498
        %v2197 = vpop.f32.mrf.mxu0
        %v2198 = vadd.f32 0.0, %v2197
        %v2199 = vpop.f32.mrf.mxu0
        %v2200 = vadd.f32 0.0, %v2199
        %2201 = vmatmul.bf16.gmra.mxu0 %v1501
        %v2202 = vpop.f32.mrf.mxu0
        %v2203 = vadd.f32 0.0, %v2202
        %v2204 = vpop.f32.mrf.mxu0
        %v2205 = vadd.f32 0.0, %v2204
        %2206 = vmatmul.bf16.gmra.mxu0 %v1504
        %v2207 = vpop.f32.mrf.mxu0
        %v2208 = vadd.f32 0.0, %v2207
        %v2209 = vpop.f32.mrf.mxu0
        %v2210 = vadd.f32 0.0, %v2209
        %2211 = vmatmul.bf16.gmra.mxu0 %v1507
        %v2212 = vpop.f32.mrf.mxu0
        %v2213 = vadd.f32 0.0, %v2212
        %v2214 = vpop.f32.mrf.mxu0
        %v2215 = vadd.f32 0.0, %v2214
        %2216 = vmatmul.bf16.gmra.mxu0 %v1510
        %v2217 = vpop.f32.mrf.mxu0
        %v2218 = vadd.f32 0.0, %v2217
        %v2219 = vpop.f32.mrf.mxu0
        %v2220 = vadd.f32 0.0, %v2219
        %2221 = vmatmul.bf16.gmra.mxu0 %v1513
        %v2222 = vpop.f32.mrf.mxu0
        %v2223 = vadd.f32 0.0, %v2222
        %v2224 = vpop.f32.mrf.mxu0
        %v2225 = vadd.f32 0.0, %v2224
        %2226 = vmatmul.bf16.gmra.mxu0 %v1516
        %v2227 = vpop.f32.mrf.mxu0
        %v2228 = vadd.f32 0.0, %v2227
        %v2229 = vpop.f32.mrf.mxu0
        %v2230 = vadd.f32 0.0, %v2229
        %2231 = vmatmul.bf16.gmra.mxu0 %v1519
        %v2232 = vpop.f32.mrf.mxu0
        %v2233 = vadd.f32 0.0, %v2232
        %v2234 = vpop.f32.mrf.mxu0
        %v2235 = vadd.f32 0.0, %v2234
        %2236 = vmatmul.bf16.gmra.mxu0 %v1522
        %v2237 = vpop.f32.mrf.mxu0
        %v2238 = vadd.f32 0.0, %v2237
        %v2239 = vpop.f32.mrf.mxu0
        %v2240 = vadd.f32 0.0, %v2239
        %2241 = vmatmul.bf16.gmra.mxu0 %v1525
        %v2242 = vpop.f32.mrf.mxu0
        %v2243 = vadd.f32 0.0, %v2242
        %v2244 = vpop.f32.mrf.mxu0
        %v2245 = vadd.f32 0.0, %v2244
        %2246 = vmatmul.bf16.gmra.mxu0 %v1528
        %v2247 = vpop.f32.mrf.mxu0
        %v2248 = vadd.f32 0.0, %v2247
        %v2249 = vpop.f32.mrf.mxu0
        %v2250 = vadd.f32 0.0, %v2249
        %2251 = vmatmul.bf16.gmra.mxu0 %v1531
        %v2252 = vpop.f32.mrf.mxu0
        %v2253 = vadd.f32 0.0, %v2252
        %v2254 = vpop.f32.mrf.mxu0
        %v2255 = vadd.f32 0.0, %v2254
        %2256 = vmatmul.bf16.gmra.mxu0 %v1534
        %v2257 = vpop.f32.mrf.mxu0
        %v2258 = vadd.f32 0.0, %v2257
        %v2259 = vpop.f32.mrf.mxu0
        %v2260 = vadd.f32 0.0, %v2259
        %2261 = vmatmul.bf16.gmra.mxu0 %v1537
        %v2262 = vpop.f32.mrf.mxu0
        %v2263 = vadd.f32 0.0, %v2262
        %v2264 = vpop.f32.mrf.mxu0
        %v2265 = vadd.f32 0.0, %v2264
        %2266 = vmatmul.bf16.gmra.mxu0 %v1540
        %v2267 = vpop.f32.mrf.mxu0
        %v2268 = vadd.f32 0.0, %v2267
        %v2269 = vpop.f32.mrf.mxu0
        %v2270 = vadd.f32 0.0, %v2269
        %2271 = vmatmul.bf16.gmra.mxu0 %v1543
        %v2272 = vpop.f32.mrf.mxu0
        %v2273 = vadd.f32 0.0, %v2272
        %v2274 = vpop.f32.mrf.mxu0
        %v2275 = vadd.f32 0.0, %v2274
        %2276 = vmatmul.bf16.gmra.mxu0 %v1546
        %v2277 = vpop.f32.mrf.mxu0
        %v2278 = vadd.f32 0.0, %v2277
        %v2279 = vpop.f32.mrf.mxu0
        %v2280 = vadd.f32 0.0, %v2279
        %2281 = vmatmul.bf16.gmra.mxu0 %v1549
        %v2282 = vpop.f32.mrf.mxu0
        %v2283 = vadd.f32 0.0, %v2282
        %v2284 = vpop.f32.mrf.mxu0
        %v2285 = vadd.f32 0.0, %v2284
        %2286 = vmatmul.bf16.gmra.mxu0 %v1552
        %v2287 = vpop.f32.mrf.mxu0
        %v2288 = vadd.f32 0.0, %v2287
        %v2289 = vpop.f32.mrf.mxu0
        %v2290 = vadd.f32 0.0, %v2289
        %2291 = vmatmul.bf16.gmra.mxu0 %v1555
        %v2292 = vpop.f32.mrf.mxu0
        %v2293 = vadd.f32 0.0, %v2292
        %v2294 = vpop.f32.mrf.mxu0
        %v2295 = vadd.f32 0.0, %v2294
        %2296 = vmatmul.bf16.gmra.mxu0 %v1558
        %v2297 = vpop.f32.mrf.mxu0
        %v2298 = vadd.f32 0.0, %v2297
        %v2299 = vpop.f32.mrf.mxu0
        %v2300 = vadd.f32 0.0, %v2299
        %2301 = vmatmul.bf16.gmra.mxu0 %v1561
        %v2302 = vpop.f32.mrf.mxu0
        %v2303 = vadd.f32 0.0, %v2302
        %v2304 = vpop.f32.mrf.mxu0
        %v2305 = vadd.f32 0.0, %v2304
        %2306 = vmatmul.bf16.gmra.mxu0 %v1564
        %v2307 = vpop.f32.mrf.mxu0
        %v2308 = vadd.f32 0.0, %v2307
        %v2309 = vpop.f32.mrf.mxu0
        %v2310 = vadd.f32 0.0, %v2309
        %2311 = vmatmul.bf16.gmra.mxu0 %v1567
        %v2312 = vpop.f32.mrf.mxu0
        %v2313 = vadd.f32 0.0, %v2312
        %v2314 = vpop.f32.mrf.mxu0
        %v2315 = vadd.f32 0.0, %v2314
        %2316 = vmatmul.bf16.gmra.mxu0 %v1570
        %v2317 = vpop.f32.mrf.mxu0
        %v2318 = vadd.f32 0.0, %v2317
        %v2319 = vpop.f32.mrf.mxu0
        %v2320 = vadd.f32 0.0, %v2319
        %2321 = vmatmul.bf16.gmra.mxu0 %v1573
        %v2322 = vpop.f32.mrf.mxu0
        %v2323 = vadd.f32 0.0, %v2322
        %v2324 = vpop.f32.mrf.mxu0
        %v2325 = vadd.f32 0.0, %v2324
        %2326 = vmatmul.bf16.gmra.mxu0 %v1576
        %v2327 = vpop.f32.mrf.mxu0
        %v2328 = vadd.f32 0.0, %v2327
        %v2329 = vpop.f32.mrf.mxu0
        %v2330 = vadd.f32 0.0, %v2329
        %2331 = vmatmul.bf16.gmra.mxu0 %v1579
        %v2332 = vpop.f32.mrf.mxu0
        %v2333 = vadd.f32 0.0, %v2332
        %v2334 = vpop.f32.mrf.mxu0
        %v2335 = vadd.f32 0.0, %v2334
        %2336 = vmatmul.bf16.gmra.mxu0 %v1582
        %v2337 = vpop.f32.mrf.mxu0
        %v2338 = vadd.f32 0.0, %v2337
        %v2339 = vpop.f32.mrf.mxu0
        %v2340 = vadd.f32 0.0, %v2339
        %2341 = vmatmul.bf16.gmra.mxu0 %v1585
        %v2342 = vpop.f32.mrf.mxu0
        %v2343 = vadd.f32 0.0, %v2342
        %v2344 = vpop.f32.mrf.mxu0
        %v2345 = vadd.f32 0.0, %v2344
        %2346 = vmatmul.bf16.gmra.mxu0 %v1588
        %v2347 = vpop.f32.mrf.mxu0
        %v2348 = vadd.f32 0.0, %v2347
        %v2349 = vpop.f32.mrf.mxu0
        %v2350 = vadd.f32 0.0, %v2349
        %2351 = vmatmul.bf16.gmra.mxu0 %v1591
        %v2352 = vpop.f32.mrf.mxu0
        %v2353 = vadd.f32 0.0, %v2352
        %v2354 = vpop.f32.mrf.mxu0
        %v2355 = vadd.f32 0.0, %v2354
        %2356 = vmatmul.bf16.gmra.mxu0 %v1594
        %v2357 = vpop.f32.mrf.mxu0
        %v2358 = vadd.f32 0.0, %v2357
        %v2359 = vpop.f32.mrf.mxu0
        %v2360 = vadd.f32 0.0, %v2359
        %2361 = vmatmul.bf16.gmra.mxu0 %v1597
        %v2362 = vpop.f32.mrf.mxu0
        %v2363 = vadd.f32 0.0, %v2362
        %v2364 = vpop.f32.mrf.mxu0
        %v2365 = vadd.f32 0.0, %v2364
        %2366 = vmatmul.bf16.gmra.mxu0 %v1600
        %v2367 = vpop.f32.mrf.mxu0
        %v2368 = vadd.f32 0.0, %v2367
        %v2369 = vpop.f32.mrf.mxu0
        %v2370 = vadd.f32 0.0, %v2369
        %2371 = vmatmul.bf16.gmra.mxu0 %v1603
        %v2372 = vpop.f32.mrf.mxu0
        %v2373 = vadd.f32 0.0, %v2372
        %v2374 = vpop.f32.mrf.mxu0
        %v2375 = vadd.f32 0.0, %v2374
        %2376 = vmatmul.bf16.gmra.mxu0 %v1606
        %v2377 = vpop.f32.mrf.mxu0
        %v2378 = vadd.f32 0.0, %v2377
        %v2379 = vpop.f32.mrf.mxu0
        %v2380 = vadd.f32 0.0, %v2379
        %2381 = vmatmul.bf16.gmra.mxu0 %v1609
        %v2382 = vpop.f32.mrf.mxu0
        %v2383 = vadd.f32 0.0, %v2382
        %v2384 = vpop.f32.mrf.mxu0
        %v2385 = vadd.f32 0.0, %v2384
        %2386 = vmatmul.bf16.gmra.mxu0 %v1612
        %v2387 = vpop.f32.mrf.mxu0
        %v2388 = vadd.f32 0.0, %v2387
        %v2389 = vpop.f32.mrf.mxu0
        %v2390 = vadd.f32 0.0, %v2389
        %2391 = vdwg.mxu0
        %2392 = vmatpush.bf16.msra.mxu0 %v1840
        %2393 = vmatpush.bf16.msra.mxu0 %v1839
        %2394 = vmatpush.bf16.msra.mxu0 %v1838
        %2395 = vmatpush.bf16.msra.mxu0 %v1837
        %2396 = vmatpush.bf16.msra.mxu0 %v1836
        %2397 = vmatpush.bf16.msra.mxu0 %v1835
        %2398 = vmatpush.bf16.msra.mxu0 %v1834
        %2399 = vmatpush.bf16.msra.mxu0 %v1833
        %2400 = vmatmul.bf16.gmra.mxu0 %v1424
        %v2401 = vpop.f32.mrf.mxu0
        %v2402 = vadd.f32 %v2073, %v2401
        %v2403 = vpop.f32.mrf.mxu0
        %v2404 = vadd.f32 %v2075, %v2403
        %2405 = vmatmul.bf16.gmra.mxu0 %v1427
        %v2406 = vpop.f32.mrf.mxu0
        %v2407 = vadd.f32 %v2078, %v2406
        %v2408 = vpop.f32.mrf.mxu0
        %v2409 = vadd.f32 %v2080, %v2408
        %2410 = vmatmul.bf16.gmra.mxu0 %v1430
        %v2411 = vpop.f32.mrf.mxu0
        %v2412 = vadd.f32 %v2083, %v2411
        %v2413 = vpop.f32.mrf.mxu0
        %v2414 = vadd.f32 %v2085, %v2413
        %2415 = vmatmul.bf16.gmra.mxu0 %v1433
        %v2416 = vpop.f32.mrf.mxu0
        %v2417 = vadd.f32 %v2088, %v2416
        %v2418 = vpop.f32.mrf.mxu0
        %v2419 = vadd.f32 %v2090, %v2418
        %2420 = vmatmul.bf16.gmra.mxu0 %v1436
        %v2421 = vpop.f32.mrf.mxu0
        %v2422 = vadd.f32 %v2093, %v2421
        %v2423 = vpop.f32.mrf.mxu0
        %v2424 = vadd.f32 %v2095, %v2423
        %2425 = vmatmul.bf16.gmra.mxu0 %v1439
        %v2426 = vpop.f32.mrf.mxu0
        %v2427 = vadd.f32 %v2098, %v2426
        %v2428 = vpop.f32.mrf.mxu0
        %v2429 = vadd.f32 %v2100, %v2428
        %2430 = vmatmul.bf16.gmra.mxu0 %v1442
        %v2431 = vpop.f32.mrf.mxu0
        %v2432 = vadd.f32 %v2103, %v2431
        %v2433 = vpop.f32.mrf.mxu0
        %v2434 = vadd.f32 %v2105, %v2433
        %2435 = vmatmul.bf16.gmra.mxu0 %v1445
        %v2436 = vpop.f32.mrf.mxu0
        %v2437 = vadd.f32 %v2108, %v2436
        %v2438 = vpop.f32.mrf.mxu0
        %v2439 = vadd.f32 %v2110, %v2438
        %2440 = vmatmul.bf16.gmra.mxu0 %v1448
        %v2441 = vpop.f32.mrf.mxu0
        %v2442 = vadd.f32 %v2113, %v2441
        %v2443 = vpop.f32.mrf.mxu0
        %v2444 = vadd.f32 %v2115, %v2443
        %2445 = vmatmul.bf16.gmra.mxu0 %v1451
        %v2446 = vpop.f32.mrf.mxu0
        %v2447 = vadd.f32 %v2118, %v2446
        %v2448 = vpop.f32.mrf.mxu0
        %v2449 = vadd.f32 %v2120, %v2448
        %2450 = vmatmul.bf16.gmra.mxu0 %v1454
        %v2451 = vpop.f32.mrf.mxu0
        %v2452 = vadd.f32 %v2123, %v2451
        %v2453 = vpop.f32.mrf.mxu0
        %v2454 = vadd.f32 %v2125, %v2453
        %2455 = vmatmul.bf16.gmra.mxu0 %v1457
        %v2456 = vpop.f32.mrf.mxu0
        %v2457 = vadd.f32 %v2128, %v2456
        %v2458 = vpop.f32.mrf.mxu0
        %v2459 = vadd.f32 %v2130, %v2458
        %2460 = vmatmul.bf16.gmra.mxu0 %v1460
        %v2461 = vpop.f32.mrf.mxu0
        %v2462 = vadd.f32 %v2133, %v2461
        %v2463 = vpop.f32.mrf.mxu0
        %v2464 = vadd.f32 %v2135, %v2463
        %2465 = vmatmul.bf16.gmra.mxu0 %v1463
        %v2466 = vpop.f32.mrf.mxu0
        %v2467 = vadd.f32 %v2138, %v2466
        %v2468 = vpop.f32.mrf.mxu0
        %v2469 = vadd.f32 %v2140, %v2468
        %2470 = vmatmul.bf16.gmra.mxu0 %v1466
        %v2471 = vpop.f32.mrf.mxu0
        %v2472 = vadd.f32 %v2143, %v2471
        %v2473 = vpop.f32.mrf.mxu0
        %v2474 = vadd.f32 %v2145, %v2473
        %2475 = vmatmul.bf16.gmra.mxu0 %v1469
        %v2476 = vpop.f32.mrf.mxu0
        %v2477 = vadd.f32 %v2148, %v2476
        %v2478 = vpop.f32.mrf.mxu0
        %v2479 = vadd.f32 %v2150, %v2478
        %2480 = vmatmul.bf16.gmra.mxu0 %v1472
        %v2481 = vpop.f32.mrf.mxu0
        %v2482 = vadd.f32 %v2153, %v2481
        %v2483 = vpop.f32.mrf.mxu0
        %v2484 = vadd.f32 %v2155, %v2483
        %2485 = vmatmul.bf16.gmra.mxu0 %v1475
        %v2486 = vpop.f32.mrf.mxu0
        %v2487 = vadd.f32 %v2158, %v2486
        %v2488 = vpop.f32.mrf.mxu0
        %v2489 = vadd.f32 %v2160, %v2488
        %2490 = vmatmul.bf16.gmra.mxu0 %v1478
        %v2491 = vpop.f32.mrf.mxu0
        %v2492 = vadd.f32 %v2163, %v2491
        %v2493 = vpop.f32.mrf.mxu0
        %v2494 = vadd.f32 %v2165, %v2493
        %2495 = vmatmul.bf16.gmra.mxu0 %v1481
        %v2496 = vpop.f32.mrf.mxu0
        %v2497 = vadd.f32 %v2168, %v2496
        %v2498 = vpop.f32.mrf.mxu0
        %v2499 = vadd.f32 %v2170, %v2498
        %2500 = vmatmul.bf16.gmra.mxu0 %v1484
        %v2501 = vpop.f32.mrf.mxu0
        %v2502 = vadd.f32 %v2173, %v2501
        %v2503 = vpop.f32.mrf.mxu0
        %v2504 = vadd.f32 %v2175, %v2503
        %2505 = vmatmul.bf16.gmra.mxu0 %v1487
        %v2506 = vpop.f32.mrf.mxu0
        %v2507 = vadd.f32 %v2178, %v2506
        %v2508 = vpop.f32.mrf.mxu0
        %v2509 = vadd.f32 %v2180, %v2508
        %2510 = vmatmul.bf16.gmra.mxu0 %v1490
        %v2511 = vpop.f32.mrf.mxu0
        %v2512 = vadd.f32 %v2183, %v2511
        %v2513 = vpop.f32.mrf.mxu0
        %v2514 = vadd.f32 %v2185, %v2513
        %2515 = vmatmul.bf16.gmra.mxu0 %v1493
        %v2516 = vpop.f32.mrf.mxu0
        %v2517 = vadd.f32 %v2188, %v2516
        %v2518 = vpop.f32.mrf.mxu0
        %v2519 = vadd.f32 %v2190, %v2518
        %2520 = vmatmul.bf16.gmra.mxu0 %v1496
        %v2521 = vpop.f32.mrf.mxu0
        %v2522 = vadd.f32 %v2193, %v2521
        %v2523 = vpop.f32.mrf.mxu0
        %v2524 = vadd.f32 %v2195, %v2523
        %2525 = vmatmul.bf16.gmra.mxu0 %v1499
        %v2526 = vpop.f32.mrf.mxu0
        %v2527 = vadd.f32 %v2198, %v2526
        %v2528 = vpop.f32.mrf.mxu0
        %v2529 = vadd.f32 %v2200, %v2528
        %2530 = vmatmul.bf16.gmra.mxu0 %v1502
        %v2531 = vpop.f32.mrf.mxu0
        %v2532 = vadd.f32 %v2203, %v2531
        %v2533 = vpop.f32.mrf.mxu0
        %v2534 = vadd.f32 %v2205, %v2533
        %2535 = vmatmul.bf16.gmra.mxu0 %v1505
        %v2536 = vpop.f32.mrf.mxu0
        %v2537 = vadd.f32 %v2208, %v2536
        %v2538 = vpop.f32.mrf.mxu0
        %v2539 = vadd.f32 %v2210, %v2538
        %2540 = vmatmul.bf16.gmra.mxu0 %v1508
        %v2541 = vpop.f32.mrf.mxu0
        %v2542 = vadd.f32 %v2213, %v2541
        %v2543 = vpop.f32.mrf.mxu0
        %v2544 = vadd.f32 %v2215, %v2543
        %2545 = vmatmul.bf16.gmra.mxu0 %v1511
        %v2546 = vpop.f32.mrf.mxu0
        %v2547 = vadd.f32 %v2218, %v2546
        %v2548 = vpop.f32.mrf.mxu0
        %v2549 = vadd.f32 %v2220, %v2548
        %2550 = vmatmul.bf16.gmra.mxu0 %v1514
        %v2551 = vpop.f32.mrf.mxu0
        %v2552 = vadd.f32 %v2223, %v2551
        %v2553 = vpop.f32.mrf.mxu0
        %v2554 = vadd.f32 %v2225, %v2553
        %2555 = vmatmul.bf16.gmra.mxu0 %v1517
        %v2556 = vpop.f32.mrf.mxu0
        %v2557 = vadd.f32 %v2228, %v2556
        %v2558 = vpop.f32.mrf.mxu0
        %v2559 = vadd.f32 %v2230, %v2558
        %2560 = vmatmul.bf16.gmra.mxu0 %v1520
        %v2561 = vpop.f32.mrf.mxu0
        %v2562 = vadd.f32 %v2233, %v2561
        %v2563 = vpop.f32.mrf.mxu0
        %v2564 = vadd.f32 %v2235, %v2563
        %2565 = vmatmul.bf16.gmra.mxu0 %v1523
        %v2566 = vpop.f32.mrf.mxu0
        %v2567 = vadd.f32 %v2238, %v2566
        %v2568 = vpop.f32.mrf.mxu0
        %v2569 = vadd.f32 %v2240, %v2568
        %2570 = vmatmul.bf16.gmra.mxu0 %v1526
        %v2571 = vpop.f32.mrf.mxu0
        %v2572 = vadd.f32 %v2243, %v2571
        %v2573 = vpop.f32.mrf.mxu0
        %v2574 = vadd.f32 %v2245, %v2573
        %2575 = vmatmul.bf16.gmra.mxu0 %v1529
        %v2576 = vpop.f32.mrf.mxu0
        %v2577 = vadd.f32 %v2248, %v2576
        %v2578 = vpop.f32.mrf.mxu0
        %v2579 = vadd.f32 %v2250, %v2578
        %2580 = vmatmul.bf16.gmra.mxu0 %v1532
        %v2581 = vpop.f32.mrf.mxu0
        %v2582 = vadd.f32 %v2253, %v2581
        %v2583 = vpop.f32.mrf.mxu0
        %v2584 = vadd.f32 %v2255, %v2583
        %2585 = vmatmul.bf16.gmra.mxu0 %v1535
        %v2586 = vpop.f32.mrf.mxu0
        %v2587 = vadd.f32 %v2258, %v2586
        %v2588 = vpop.f32.mrf.mxu0
        %v2589 = vadd.f32 %v2260, %v2588
        %2590 = vmatmul.bf16.gmra.mxu0 %v1538
        %v2591 = vpop.f32.mrf.mxu0
        %v2592 = vadd.f32 %v2263, %v2591
        %v2593 = vpop.f32.mrf.mxu0
        %v2594 = vadd.f32 %v2265, %v2593
        %2595 = vmatmul.bf16.gmra.mxu0 %v1541
        %v2596 = vpop.f32.mrf.mxu0
        %v2597 = vadd.f32 %v2268, %v2596
        %v2598 = vpop.f32.mrf.mxu0
        %v2599 = vadd.f32 %v2270, %v2598
        %2600 = vmatmul.bf16.gmra.mxu0 %v1544
        %v2601 = vpop.f32.mrf.mxu0
        %v2602 = vadd.f32 %v2273, %v2601
        %v2603 = vpop.f32.mrf.mxu0
        %v2604 = vadd.f32 %v2275, %v2603
        %2605 = vmatmul.bf16.gmra.mxu0 %v1547
        %v2606 = vpop.f32.mrf.mxu0
        %v2607 = vadd.f32 %v2278, %v2606
        %v2608 = vpop.f32.mrf.mxu0
        %v2609 = vadd.f32 %v2280, %v2608
        %2610 = vmatmul.bf16.gmra.mxu0 %v1550
        %v2611 = vpop.f32.mrf.mxu0
        %v2612 = vadd.f32 %v2283, %v2611
        %v2613 = vpop.f32.mrf.mxu0
        %v2614 = vadd.f32 %v2285, %v2613
        %2615 = vmatmul.bf16.gmra.mxu0 %v1553
        %v2616 = vpop.f32.mrf.mxu0
        %v2617 = vadd.f32 %v2288, %v2616
        %v2618 = vpop.f32.mrf.mxu0
        %v2619 = vadd.f32 %v2290, %v2618
        %2620 = vmatmul.bf16.gmra.mxu0 %v1556
        %v2621 = vpop.f32.mrf.mxu0
        %v2622 = vadd.f32 %v2293, %v2621
        %v2623 = vpop.f32.mrf.mxu0
        %v2624 = vadd.f32 %v2295, %v2623
        %2625 = vmatmul.bf16.gmra.mxu0 %v1559
        %v2626 = vpop.f32.mrf.mxu0
        %v2627 = vadd.f32 %v2298, %v2626
        %v2628 = vpop.f32.mrf.mxu0
        %v2629 = vadd.f32 %v2300, %v2628
        %2630 = vmatmul.bf16.gmra.mxu0 %v1562
        %v2631 = vpop.f32.mrf.mxu0
        %v2632 = vadd.f32 %v2303, %v2631
        %v2633 = vpop.f32.mrf.mxu0
        %v2634 = vadd.f32 %v2305, %v2633
        %2635 = vmatmul.bf16.gmra.mxu0 %v1565
        %v2636 = vpop.f32.mrf.mxu0
        %v2637 = vadd.f32 %v2308, %v2636
        %v2638 = vpop.f32.mrf.mxu0
        %v2639 = vadd.f32 %v2310, %v2638
        %2640 = vmatmul.bf16.gmra.mxu0 %v1568
        %v2641 = vpop.f32.mrf.mxu0
        %v2642 = vadd.f32 %v2313, %v2641
        %v2643 = vpop.f32.mrf.mxu0
        %v2644 = vadd.f32 %v2315, %v2643
        %2645 = vmatmul.bf16.gmra.mxu0 %v1571
        %v2646 = vpop.f32.mrf.mxu0
        %v2647 = vadd.f32 %v2318, %v2646
        %v2648 = vpop.f32.mrf.mxu0
        %v2649 = vadd.f32 %v2320, %v2648
        %2650 = vmatmul.bf16.gmra.mxu0 %v1574
        %v2651 = vpop.f32.mrf.mxu0
        %v2652 = vadd.f32 %v2323, %v2651
        %v2653 = vpop.f32.mrf.mxu0
        %v2654 = vadd.f32 %v2325, %v2653
        %2655 = vmatmul.bf16.gmra.mxu0 %v1577
        %v2656 = vpop.f32.mrf.mxu0
        %v2657 = vadd.f32 %v2328, %v2656
        %v2658 = vpop.f32.mrf.mxu0
        %v2659 = vadd.f32 %v2330, %v2658
        %2660 = vmatmul.bf16.gmra.mxu0 %v1580
        %v2661 = vpop.f32.mrf.mxu0
        %v2662 = vadd.f32 %v2333, %v2661
        %v2663 = vpop.f32.mrf.mxu0
        %v2664 = vadd.f32 %v2335, %v2663
        %2665 = vmatmul.bf16.gmra.mxu0 %v1583
        %v2666 = vpop.f32.mrf.mxu0
        %v2667 = vadd.f32 %v2338, %v2666
        %v2668 = vpop.f32.mrf.mxu0
        %v2669 = vadd.f32 %v2340, %v2668
        %2670 = vmatmul.bf16.gmra.mxu0 %v1586
        %v2671 = vpop.f32.mrf.mxu0
        %v2672 = vadd.f32 %v2343, %v2671
        %v2673 = vpop.f32.mrf.mxu0
        %v2674 = vadd.f32 %v2345, %v2673
        %2675 = vmatmul.bf16.gmra.mxu0 %v1589
        %v2676 = vpop.f32.mrf.mxu0
        %v2677 = vadd.f32 %v2348, %v2676
        %v2678 = vpop.f32.mrf.mxu0
        %v2679 = vadd.f32 %v2350, %v2678
        %2680 = vmatmul.bf16.gmra.mxu0 %v1592
        %v2681 = vpop.f32.mrf.mxu0
        %v2682 = vadd.f32 %v2353, %v2681
        %v2683 = vpop.f32.mrf.mxu0
        %v2684 = vadd.f32 %v2355, %v2683
        %2685 = vmatmul.bf16.gmra.mxu0 %v1595
        %v2686 = vpop.f32.mrf.mxu0
        %v2687 = vadd.f32 %v2358, %v2686
        %v2688 = vpop.f32.mrf.mxu0
        %v2689 = vadd.f32 %v2360, %v2688
        %2690 = vmatmul.bf16.gmra.mxu0 %v1598
        %v2691 = vpop.f32.mrf.mxu0
        %v2692 = vadd.f32 %v2363, %v2691
        %v2693 = vpop.f32.mrf.mxu0
        %v2694 = vadd.f32 %v2365, %v2693
        %2695 = vmatmul.bf16.gmra.mxu0 %v1601
        %v2696 = vpop.f32.mrf.mxu0
        %v2697 = vadd.f32 %v2368, %v2696
        %v2698 = vpop.f32.mrf.mxu0
        %v2699 = vadd.f32 %v2370, %v2698
        %2700 = vmatmul.bf16.gmra.mxu0 %v1604
        %v2701 = vpop.f32.mrf.mxu0
        %v2702 = vadd.f32 %v2373, %v2701
        %v2703 = vpop.f32.mrf.mxu0
        %v2704 = vadd.f32 %v2375, %v2703
        %2705 = vmatmul.bf16.gmra.mxu0 %v1607
        %v2706 = vpop.f32.mrf.mxu0
        %v2707 = vadd.f32 %v2378, %v2706
        %v2708 = vpop.f32.mrf.mxu0
        %v2709 = vadd.f32 %v2380, %v2708
        %2710 = vmatmul.bf16.gmra.mxu0 %v1610
        %v2711 = vpop.f32.mrf.mxu0
        %v2712 = vadd.f32 %v2383, %v2711
        %v2713 = vpop.f32.mrf.mxu0
        %v2714 = vadd.f32 %v2385, %v2713
        %2715 = vmatmul.bf16.gmra.mxu0 %v1613
        %v2716 = vpop.f32.mrf.mxu0
        %v2717 = vadd.f32 %v2388, %v2716
        %v2718 = vpop.f32.mrf.mxu0
        %v2719 = vadd.f32 %v2390, %v2718
        %2720 = vdwg.mxu0
        %2721 = vmatpush.bf16.msra.mxu0 0
        %2722 = vmatpush.bf16.msra.mxu0 0
        %2723 = vmatpush.bf16.msra.mxu0 0
        %2724 = vmatpush.bf16.msra.mxu0 %v2061
        %2725 = vmatpush.bf16.msra.mxu0 %v1844
        %2726 = vmatpush.bf16.msra.mxu0 %v1843
        %2727 = vmatpush.bf16.msra.mxu0 %v1842
        %2728 = vmatpush.bf16.msra.mxu0 %v1841
        %2729 = vmatmul.bf16.gmra.mxu0 %v1868
        %v2730 = vpop.f32.mrf.mxu0
        %v2731 = vadd.f32 %v2402, %v2730
        %v2732 = vpop.f32.mrf.mxu0
        %v2733 = vadd.f32 %v2404, %v2732
        %2734 = vmatmul.bf16.gmra.mxu0 %v1871
        %v2735 = vpop.f32.mrf.mxu0
        %v2736 = vadd.f32 %v2407, %v2735
        %v2737 = vpop.f32.mrf.mxu0
        %v2738 = vadd.f32 %v2409, %v2737
        %2739 = vmatmul.bf16.gmra.mxu0 %v1874
        %v2740 = vpop.f32.mrf.mxu0
        %v2741 = vadd.f32 %v2412, %v2740
        %v2742 = vpop.f32.mrf.mxu0
        %v2743 = vadd.f32 %v2414, %v2742
        %2744 = vmatmul.bf16.gmra.mxu0 %v1877
        %v2745 = vpop.f32.mrf.mxu0
        %v2746 = vadd.f32 %v2417, %v2745
        %v2747 = vpop.f32.mrf.mxu0
        %v2748 = vadd.f32 %v2419, %v2747
        %2749 = vmatmul.bf16.gmra.mxu0 %v1880
        %v2750 = vpop.f32.mrf.mxu0
        %v2751 = vadd.f32 %v2422, %v2750
        %v2752 = vpop.f32.mrf.mxu0
        %v2753 = vadd.f32 %v2424, %v2752
        %2754 = vmatmul.bf16.gmra.mxu0 %v1883
        %v2755 = vpop.f32.mrf.mxu0
        %v2756 = vadd.f32 %v2427, %v2755
        %v2757 = vpop.f32.mrf.mxu0
        %v2758 = vadd.f32 %v2429, %v2757
        %2759 = vmatmul.bf16.gmra.mxu0 %v1886
        %v2760 = vpop.f32.mrf.mxu0
        %v2761 = vadd.f32 %v2432, %v2760
        %v2762 = vpop.f32.mrf.mxu0
        %v2763 = vadd.f32 %v2434, %v2762
        %2764 = vmatmul.bf16.gmra.mxu0 %v1889
        %v2765 = vpop.f32.mrf.mxu0
        %v2766 = vadd.f32 %v2437, %v2765
        %v2767 = vpop.f32.mrf.mxu0
        %v2768 = vadd.f32 %v2439, %v2767
        %2769 = vmatmul.bf16.gmra.mxu0 %v1892
        %v2770 = vpop.f32.mrf.mxu0
        %v2771 = vadd.f32 %v2442, %v2770
        %v2772 = vpop.f32.mrf.mxu0
        %v2773 = vadd.f32 %v2444, %v2772
        %2774 = vmatmul.bf16.gmra.mxu0 %v1895
        %v2775 = vpop.f32.mrf.mxu0
        %v2776 = vadd.f32 %v2447, %v2775
        %v2777 = vpop.f32.mrf.mxu0
        %v2778 = vadd.f32 %v2449, %v2777
        %2779 = vmatmul.bf16.gmra.mxu0 %v1898
        %v2780 = vpop.f32.mrf.mxu0
        %v2781 = vadd.f32 %v2452, %v2780
        %v2782 = vpop.f32.mrf.mxu0
        %v2783 = vadd.f32 %v2454, %v2782
        %2784 = vmatmul.bf16.gmra.mxu0 %v1901
        %v2785 = vpop.f32.mrf.mxu0
        %v2786 = vadd.f32 %v2457, %v2785
        %v2787 = vpop.f32.mrf.mxu0
        %v2788 = vadd.f32 %v2459, %v2787
        %2789 = vmatmul.bf16.gmra.mxu0 %v1904
        %v2790 = vpop.f32.mrf.mxu0
        %v2791 = vadd.f32 %v2462, %v2790
        %v2792 = vpop.f32.mrf.mxu0
        %v2793 = vadd.f32 %v2464, %v2792
        %2794 = vmatmul.bf16.gmra.mxu0 %v1907
        %v2795 = vpop.f32.mrf.mxu0
        %v2796 = vadd.f32 %v2467, %v2795
        %v2797 = vpop.f32.mrf.mxu0
        %v2798 = vadd.f32 %v2469, %v2797
        %2799 = vmatmul.bf16.gmra.mxu0 %v1910
        %v2800 = vpop.f32.mrf.mxu0
        %v2801 = vadd.f32 %v2472, %v2800
        %v2802 = vpop.f32.mrf.mxu0
        %v2803 = vadd.f32 %v2474, %v2802
        %2804 = vmatmul.bf16.gmra.mxu0 %v1913
        %v2805 = vpop.f32.mrf.mxu0
        %v2806 = vadd.f32 %v2477, %v2805
        %v2807 = vpop.f32.mrf.mxu0
        %v2808 = vadd.f32 %v2479, %v2807
        %2809 = vmatmul.bf16.gmra.mxu0 %v1916
        %v2810 = vpop.f32.mrf.mxu0
        %v2811 = vadd.f32 %v2482, %v2810
        %v2812 = vpop.f32.mrf.mxu0
        %v2813 = vadd.f32 %v2484, %v2812
        %2814 = vmatmul.bf16.gmra.mxu0 %v1919
        %v2815 = vpop.f32.mrf.mxu0
        %v2816 = vadd.f32 %v2487, %v2815
        %v2817 = vpop.f32.mrf.mxu0
        %v2818 = vadd.f32 %v2489, %v2817
        %2819 = vmatmul.bf16.gmra.mxu0 %v1922
        %v2820 = vpop.f32.mrf.mxu0
        %v2821 = vadd.f32 %v2492, %v2820
        %v2822 = vpop.f32.mrf.mxu0
        %v2823 = vadd.f32 %v2494, %v2822
        %2824 = vmatmul.bf16.gmra.mxu0 %v1925
        %v2825 = vpop.f32.mrf.mxu0
        %v2826 = vadd.f32 %v2497, %v2825
        %v2827 = vpop.f32.mrf.mxu0
        %v2828 = vadd.f32 %v2499, %v2827
        %2829 = vmatmul.bf16.gmra.mxu0 %v1928
        %v2830 = vpop.f32.mrf.mxu0
        %v2831 = vadd.f32 %v2502, %v2830
        %v2832 = vpop.f32.mrf.mxu0
        %v2833 = vadd.f32 %v2504, %v2832
        %2834 = vmatmul.bf16.gmra.mxu0 %v1931
        %v2835 = vpop.f32.mrf.mxu0
        %v2836 = vadd.f32 %v2507, %v2835
        %v2837 = vpop.f32.mrf.mxu0
        %v2838 = vadd.f32 %v2509, %v2837
        %2839 = vmatmul.bf16.gmra.mxu0 %v1934
        %v2840 = vpop.f32.mrf.mxu0
        %v2841 = vadd.f32 %v2512, %v2840
        %v2842 = vpop.f32.mrf.mxu0
        %v2843 = vadd.f32 %v2514, %v2842
        %2844 = vmatmul.bf16.gmra.mxu0 %v1937
        %v2845 = vpop.f32.mrf.mxu0
        %v2846 = vadd.f32 %v2517, %v2845
        %v2847 = vpop.f32.mrf.mxu0
        %v2848 = vadd.f32 %v2519, %v2847
        %2849 = vmatmul.bf16.gmra.mxu0 %v1940
        %v2850 = vpop.f32.mrf.mxu0
        %v2851 = vadd.f32 %v2522, %v2850
        %v2852 = vpop.f32.mrf.mxu0
        %v2853 = vadd.f32 %v2524, %v2852
        %2854 = vmatmul.bf16.gmra.mxu0 %v1943
        %v2855 = vpop.f32.mrf.mxu0
        %v2856 = vadd.f32 %v2527, %v2855
        %v2857 = vpop.f32.mrf.mxu0
        %v2858 = vadd.f32 %v2529, %v2857
        %2859 = vmatmul.bf16.gmra.mxu0 %v1946
        %v2860 = vpop.f32.mrf.mxu0
        %v2861 = vadd.f32 %v2532, %v2860
        %v2862 = vpop.f32.mrf.mxu0
        %v2863 = vadd.f32 %v2534, %v2862
        %2864 = vmatmul.bf16.gmra.mxu0 %v1949
        %v2865 = vpop.f32.mrf.mxu0
        %v2866 = vadd.f32 %v2537, %v2865
        %v2867 = vpop.f32.mrf.mxu0
        %v2868 = vadd.f32 %v2539, %v2867
        %2869 = vmatmul.bf16.gmra.mxu0 %v1952
        %v2870 = vpop.f32.mrf.mxu0
        %v2871 = vadd.f32 %v2542, %v2870
        %v2872 = vpop.f32.mrf.mxu0
        %v2873 = vadd.f32 %v2544, %v2872
        %2874 = vmatmul.bf16.gmra.mxu0 %v1955
        %v2875 = vpop.f32.mrf.mxu0
        %v2876 = vadd.f32 %v2547, %v2875
        %v2877 = vpop.f32.mrf.mxu0
        %v2878 = vadd.f32 %v2549, %v2877
        %2879 = vmatmul.bf16.gmra.mxu0 %v1958
        %v2880 = vpop.f32.mrf.mxu0
        %v2881 = vadd.f32 %v2552, %v2880
        %v2882 = vpop.f32.mrf.mxu0
        %v2883 = vadd.f32 %v2554, %v2882
        %2884 = vmatmul.bf16.gmra.mxu0 %v1961
        %v2885 = vpop.f32.mrf.mxu0
        %v2886 = vadd.f32 %v2557, %v2885
        %v2887 = vpop.f32.mrf.mxu0
        %v2888 = vadd.f32 %v2559, %v2887
        %2889 = vmatmul.bf16.gmra.mxu0 %v1964
        %v2890 = vpop.f32.mrf.mxu0
        %v2891 = vadd.f32 %v2562, %v2890
        %v2892 = vpop.f32.mrf.mxu0
        %v2893 = vadd.f32 %v2564, %v2892
        %2894 = vmatmul.bf16.gmra.mxu0 %v1967
        %v2895 = vpop.f32.mrf.mxu0
        %v2896 = vadd.f32 %v2567, %v2895
        %v2897 = vpop.f32.mrf.mxu0
        %v2898 = vadd.f32 %v2569, %v2897
        %2899 = vmatmul.bf16.gmra.mxu0 %v1970
        %v2900 = vpop.f32.mrf.mxu0
        %v2901 = vadd.f32 %v2572, %v2900
        %v2902 = vpop.f32.mrf.mxu0
        %v2903 = vadd.f32 %v2574, %v2902
        %2904 = vmatmul.bf16.gmra.mxu0 %v1973
        %v2905 = vpop.f32.mrf.mxu0
        %v2906 = vadd.f32 %v2577, %v2905
        %v2907 = vpop.f32.mrf.mxu0
        %v2908 = vadd.f32 %v2579, %v2907
        %2909 = vmatmul.bf16.gmra.mxu0 %v1976
        %v2910 = vpop.f32.mrf.mxu0
        %v2911 = vadd.f32 %v2582, %v2910
        %v2912 = vpop.f32.mrf.mxu0
        %v2913 = vadd.f32 %v2584, %v2912
        %2914 = vmatmul.bf16.gmra.mxu0 %v1979
        %v2915 = vpop.f32.mrf.mxu0
        %v2916 = vadd.f32 %v2587, %v2915
        %v2917 = vpop.f32.mrf.mxu0
        %v2918 = vadd.f32 %v2589, %v2917
        %2919 = vmatmul.bf16.gmra.mxu0 %v1982
        %v2920 = vpop.f32.mrf.mxu0
        %v2921 = vadd.f32 %v2592, %v2920
        %v2922 = vpop.f32.mrf.mxu0
        %v2923 = vadd.f32 %v2594, %v2922
        %2924 = vmatmul.bf16.gmra.mxu0 %v1985
        %v2925 = vpop.f32.mrf.mxu0
        %v2926 = vadd.f32 %v2597, %v2925
        %v2927 = vpop.f32.mrf.mxu0
        %v2928 = vadd.f32 %v2599, %v2927
        %2929 = vmatmul.bf16.gmra.mxu0 %v1988
        %v2930 = vpop.f32.mrf.mxu0
        %v2931 = vadd.f32 %v2602, %v2930
        %v2932 = vpop.f32.mrf.mxu0
        %v2933 = vadd.f32 %v2604, %v2932
        %2934 = vmatmul.bf16.gmra.mxu0 %v1991
        %v2935 = vpop.f32.mrf.mxu0
        %v2936 = vadd.f32 %v2607, %v2935
        %v2937 = vpop.f32.mrf.mxu0
        %v2938 = vadd.f32 %v2609, %v2937
        %2939 = vmatmul.bf16.gmra.mxu0 %v1994
        %v2940 = vpop.f32.mrf.mxu0
        %v2941 = vadd.f32 %v2612, %v2940
        %v2942 = vpop.f32.mrf.mxu0
        %v2943 = vadd.f32 %v2614, %v2942
        %2944 = vmatmul.bf16.gmra.mxu0 %v1997
        %v2945 = vpop.f32.mrf.mxu0
        %v2946 = vadd.f32 %v2617, %v2945
        %v2947 = vpop.f32.mrf.mxu0
        %v2948 = vadd.f32 %v2619, %v2947
        %2949 = vmatmul.bf16.gmra.mxu0 %v2000
        %v2950 = vpop.f32.mrf.mxu0
        %v2951 = vadd.f32 %v2622, %v2950
        %v2952 = vpop.f32.mrf.mxu0
        %v2953 = vadd.f32 %v2624, %v2952
        %2954 = vmatmul.bf16.gmra.mxu0 %v2003
        %v2955 = vpop.f32.mrf.mxu0
        %v2956 = vadd.f32 %v2627, %v2955
        %v2957 = vpop.f32.mrf.mxu0
        %v2958 = vadd.f32 %v2629, %v2957
        %2959 = vmatmul.bf16.gmra.mxu0 %v2006
        %v2960 = vpop.f32.mrf.mxu0
        %v2961 = vadd.f32 %v2632, %v2960
        %v2962 = vpop.f32.mrf.mxu0
        %v2963 = vadd.f32 %v2634, %v2962
        %2964 = vmatmul.bf16.gmra.mxu0 %v2009
        %v2965 = vpop.f32.mrf.mxu0
        %v2966 = vadd.f32 %v2637, %v2965
        %v2967 = vpop.f32.mrf.mxu0
        %v2968 = vadd.f32 %v2639, %v2967
        %2969 = vmatmul.bf16.gmra.mxu0 %v2012
        %v2970 = vpop.f32.mrf.mxu0
        %v2971 = vadd.f32 %v2642, %v2970
        %v2972 = vpop.f32.mrf.mxu0
        %v2973 = vadd.f32 %v2644, %v2972
        %2974 = vmatmul.bf16.gmra.mxu0 %v2015
        %v2975 = vpop.f32.mrf.mxu0
        %v2976 = vadd.f32 %v2647, %v2975
        %v2977 = vpop.f32.mrf.mxu0
        %v2978 = vadd.f32 %v2649, %v2977
        %2979 = vmatmul.bf16.gmra.mxu0 %v2018
        %v2980 = vpop.f32.mrf.mxu0
        %v2981 = vadd.f32 %v2652, %v2980
        %v2982 = vpop.f32.mrf.mxu0
        %v2983 = vadd.f32 %v2654, %v2982
        %2984 = vmatmul.bf16.gmra.mxu0 %v2021
        %v2985 = vpop.f32.mrf.mxu0
        %v2986 = vadd.f32 %v2657, %v2985
        %v2987 = vpop.f32.mrf.mxu0
        %v2988 = vadd.f32 %v2659, %v2987
        %2989 = vmatmul.bf16.gmra.mxu0 %v2024
        %v2990 = vpop.f32.mrf.mxu0
        %v2991 = vadd.f32 %v2662, %v2990
        %v2992 = vpop.f32.mrf.mxu0
        %v2993 = vadd.f32 %v2664, %v2992
        %2994 = vmatmul.bf16.gmra.mxu0 %v2027
        %v2995 = vpop.f32.mrf.mxu0
        %v2996 = vadd.f32 %v2667, %v2995
        %v2997 = vpop.f32.mrf.mxu0
        %v2998 = vadd.f32 %v2669, %v2997
        %2999 = vmatmul.bf16.gmra.mxu0 %v2030
        %v3000 = vpop.f32.mrf.mxu0
        %v3001 = vadd.f32 %v2672, %v3000
        %v3002 = vpop.f32.mrf.mxu0
        %v3003 = vadd.f32 %v2674, %v3002
        %3004 = vmatmul.bf16.gmra.mxu0 %v2033
        %v3005 = vpop.f32.mrf.mxu0
        %v3006 = vadd.f32 %v2677, %v3005
        %v3007 = vpop.f32.mrf.mxu0
        %v3008 = vadd.f32 %v2679, %v3007
        %3009 = vmatmul.bf16.gmra.mxu0 %v2036
        %v3010 = vpop.f32.mrf.mxu0
        %v3011 = vadd.f32 %v2682, %v3010
        %v3012 = vpop.f32.mrf.mxu0
        %v3013 = vadd.f32 %v2684, %v3012
        %3014 = vmatmul.bf16.gmra.mxu0 %v2039
        %v3015 = vpop.f32.mrf.mxu0
        %v3016 = vadd.f32 %v2687, %v3015
        %v3017 = vpop.f32.mrf.mxu0
        %v3018 = vadd.f32 %v2689, %v3017
        %3019 = vmatmul.bf16.gmra.mxu0 %v2042
        %v3020 = vpop.f32.mrf.mxu0
        %v3021 = vadd.f32 %v2692, %v3020
        %v3022 = vpop.f32.mrf.mxu0
        %v3023 = vadd.f32 %v2694, %v3022
        %3024 = vmatmul.bf16.gmra.mxu0 %v2045
        %v3025 = vpop.f32.mrf.mxu0
        %v3026 = vadd.f32 %v2697, %v3025
        %v3027 = vpop.f32.mrf.mxu0
        %v3028 = vadd.f32 %v2699, %v3027
        %3029 = vmatmul.bf16.gmra.mxu0 %v2048
        %v3030 = vpop.f32.mrf.mxu0
        %v3031 = vadd.f32 %v2702, %v3030
        %v3032 = vpop.f32.mrf.mxu0
        %v3033 = vadd.f32 %v2704, %v3032
        %3034 = vmatmul.bf16.gmra.mxu0 %v2051
        %v3035 = vpop.f32.mrf.mxu0
        %v3036 = vadd.f32 %v2707, %v3035
        %v3037 = vpop.f32.mrf.mxu0
        %v3038 = vadd.f32 %v2709, %v3037
        %3039 = vmatmul.bf16.gmra.mxu0 %v2054
        %v3040 = vpop.f32.mrf.mxu0
        %v3041 = vadd.f32 %v2712, %v3040
        %v3042 = vpop.f32.mrf.mxu0
        %v3043 = vadd.f32 %v2714, %v3042
        %3044 = vmatmul.bf16.gmra.mxu0 %v2057
        %v3045 = vpop.f32.mrf.mxu0
        %v3046 = vadd.f32 %v2717, %v3045
        %v3047 = vpop.f32.mrf.mxu0
        %v3048 = vadd.f32 %v2719, %v3047
        %3049 = vdwg.mxu0
        %v3050 = vadd.f32 %v358, %v2731
        %v3051 = vadd.f32 %v359, %v2733
        %v3052 = vadd.f32 %v360, %v2736
        %v3053 = vadd.f32 %v361, %v2738
        %v3054 = vadd.f32 %v362, %v2741
        %v3055 = vadd.f32 %v363, %v2743
        %v3056 = vadd.f32 %v364, %v2746
        %v3057 = vadd.f32 %v365, %v2748
        %v3058 = vadd.f32 %v366, %v2751
        %v3059 = vadd.f32 %v367, %v2753
        %v3060 = vadd.f32 %v368, %v2756
        %v3061 = vadd.f32 %v369, %v2758
        %v3062 = vadd.f32 %v370, %v2761
        %v3063 = vadd.f32 %v371, %v2763
        %v3064 = vadd.f32 %v372, %v2766
        %v3065 = vadd.f32 %v373, %v2768
        %v3066 = vadd.f32 %v374, %v2771
        %v3067 = vadd.f32 %v375, %v2773
        %v3068 = vadd.f32 %v376, %v2776
        %v3069 = vadd.f32 %v377, %v2778
        %v3070 = vadd.f32 %v378, %v2781
        %v3071 = vadd.f32 %v379, %v2783
        %v3072 = vadd.f32 %v380, %v2786
        %v3073 = vadd.f32 %v381, %v2788
        %v3074 = vadd.f32 %v382, %v2791
        %v3075 = vadd.f32 %v383, %v2793
        %v3076 = vadd.f32 %v384, %v2796
        %v3077 = vadd.f32 %v385, %v2798
        %v3078 = vadd.f32 %v386, %v2801
        %v3079 = vadd.f32 %v387, %v2803
        %v3080 = vadd.f32 %v388, %v2806
        %v3081 = vadd.f32 %v389, %v2808
        %v3082 = vadd.f32 %v390, %v2811
        %v3083 = vadd.f32 %v391, %v2813
        %v3084 = vadd.f32 %v392, %v2816
        %v3085 = vadd.f32 %v393, %v2818
        %v3086 = vadd.f32 %v394, %v2821
        %v3087 = vadd.f32 %v395, %v2823
        %v3088 = vadd.f32 %v396, %v2826
        %v3089 = vadd.f32 %v397, %v2828
        %v3090 = vadd.f32 %v398, %v2831
        %v3091 = vadd.f32 %v399, %v2833
        %v3092 = vadd.f32 %v400, %v2836
        %v3093 = vadd.f32 %v401, %v2838
        %v3094 = vadd.f32 %v402, %v2841
        %v3095 = vadd.f32 %v403, %v2843
        %v3096 = vadd.f32 %v404, %v2846
        %v3097 = vadd.f32 %v405, %v2848
        %v3098 = vadd.f32 %v406, %v2851
        %v3099 = vadd.f32 %v407, %v2853
        %v3100 = vadd.f32 %v408, %v2856
        %v3101 = vadd.f32 %v409, %v2858
        %v3102 = vadd.f32 %v410, %v2861
        %v3103 = vadd.f32 %v411, %v2863
        %v3104 = vadd.f32 %v412, %v2866
        %v3105 = vadd.f32 %v413, %v2868
        %v3106 = vadd.f32 %v414, %v2871
        %v3107 = vadd.f32 %v415, %v2873
        %v3108 = vadd.f32 %v416, %v2876
        %v3109 = vadd.f32 %v417, %v2878
        %v3110 = vadd.f32 %v418, %v2881
        %v3111 = vadd.f32 %v419, %v2883
        %v3112 = vadd.f32 %v420, %v2886
        %v3113 = vadd.f32 %v421, %v2888
        %v3114 = vadd.f32 %v422, %v2891
        %v3115 = vadd.f32 %v423, %v2893
        %v3116 = vadd.f32 %v424, %v2896
        %v3117 = vadd.f32 %v425, %v2898
        %v3118 = vadd.f32 %v426, %v2901
        %v3119 = vadd.f32 %v427, %v2903
        %v3120 = vadd.f32 %v428, %v2906
        %v3121 = vadd.f32 %v429, %v2908
        %v3122 = vadd.f32 %v430, %v2911
        %v3123 = vadd.f32 %v431, %v2913
        %v3124 = vadd.f32 %v432, %v2916
        %v3125 = vadd.f32 %v433, %v2918
        %v3126 = vadd.f32 %v434, %v2921
        %v3127 = vadd.f32 %v435, %v2923
        %v3128 = vadd.f32 %v436, %v2926
        %v3129 = vadd.f32 %v437, %v2928
        %v3130 = vadd.f32 %v438, %v2931
        %v3131 = vadd.f32 %v439, %v2933
        %v3132 = vadd.f32 %v440, %v2936
        %v3133 = vadd.f32 %v441, %v2938
        %v3134 = vadd.f32 %v442, %v2941
        %v3135 = vadd.f32 %v443, %v2943
        %v3136 = vadd.f32 %v444, %v2946
        %v3137 = vadd.f32 %v445, %v2948
        %v3138 = vadd.f32 %v446, %v2951
        %v3139 = vadd.f32 %v447, %v2953
        %v3140 = vadd.f32 %v448, %v2956
        %v3141 = vadd.f32 %v449, %v2958
        %v3142 = vadd.f32 %v450, %v2961
        %v3143 = vadd.f32 %v451, %v2963
        %v3144 = vadd.f32 %v452, %v2966
        %v3145 = vadd.f32 %v453, %v2968
        %v3146 = vadd.f32 %v454, %v2971
        %v3147 = vadd.f32 %v455, %v2973
        %v3148 = vadd.f32 %v456, %v2976
        %v3149 = vadd.f32 %v457, %v2978
        %v3150 = vadd.f32 %v458, %v2981
        %v3151 = vadd.f32 %v459, %v2983
        %v3152 = vadd.f32 %v460, %v2986
        %v3153 = vadd.f32 %v461, %v2988
        %v3154 = vadd.f32 %v462, %v2991
        %v3155 = vadd.f32 %v463, %v2993
        %v3156 = vadd.f32 %v464, %v2996
        %v3157 = vadd.f32 %v465, %v2998
        %v3158 = vadd.f32 %v466, %v3001
        %v3159 = vadd.f32 %v467, %v3003
        %v3160 = vadd.f32 %v468, %v3006
        %v3161 = vadd.f32 %v469, %v3008
        %v3162 = vadd.f32 %v470, %v3011
        %v3163 = vadd.f32 %v471, %v3013
        %v3164 = vadd.f32 %v472, %v3016
        %v3165 = vadd.f32 %v473, %v3018
        %v3166 = vadd.f32 %v474, %v3021
        %v3167 = vadd.f32 %v475, %v3023
        %v3168 = vadd.f32 %v476, %v3026
        %v3169 = vadd.f32 %v477, %v3028
        %v3170 = vadd.f32 %v478, %v3031
        %v3171 = vadd.f32 %v479, %v3033
        %v3172 = vadd.f32 %v480, %v3036
        %v3173 = vadd.f32 %v481, %v3038
        %v3174 = vadd.f32 %v482, %v3041
        %v3175 = vadd.f32 %v483, %v3043
        %v3176 = vadd.f32 %v484, %v3046
        %v3177 = vadd.f32 %v485, %v3048
        %3178 = vst [vmem:[#allocation2] sm:$0xff] %v3050
        %3179 = vst [vmem:[#allocation2 + $0x8] sm:$0xff] %v3051
        %3180 = vst [vmem:[#allocation2 + $0x10] sm:$0xff] %v3052
        %3181 = vst [vmem:[#allocation2 + $0x18] sm:$0xff] %v3053
        %3182 = vst [vmem:[#allocation2 + $0x20] sm:$0xff] %v3054
        %3183 = vst [vmem:[#allocation2 + $0x28] sm:$0xff] %v3055
        %3184 = vst [vmem:[#allocation2 + $0x30] sm:$0xff] %v3056
        %3185 = vst [vmem:[#allocation2 + $0x38] sm:$0xff] %v3057
        %3186 = vst [vmem:[#allocation2 + $0x40] sm:$0xff] %v3058
        %3187 = vst [vmem:[#allocation2 + $0x48] sm:$0xff] %v3059
        %3188 = vst [vmem:[#allocation2 + $0x50] sm:$0xff] %v3060
        %3189 = vst [vmem:[#allocation2 + $0x58] sm:$0xff] %v3061
        %3190 = vst [vmem:[#allocation2 + $0x60] sm:$0xff] %v3062
        %3191 = vst [vmem:[#allocation2 + $0x68] sm:$0xff] %v3063
        %3192 = vst [vmem:[#allocation2 + $0x70] sm:$0xff] %v3064
        %3193 = vst [vmem:[#allocation2 + $0x78] sm:$0xff] %v3065
        %3194 = vst [vmem:[#allocation2 + $0x80] sm:$0xff] %v3066
        %3195 = vst [vmem:[#allocation2 + $0x88] sm:$0xff] %v3067
        %3196 = vst [vmem:[#allocation2 + $0x90] sm:$0xff] %v3068
        %3197 = vst [vmem:[#allocation2 + $0x98] sm:$0xff] %v3069
        %3198 = vst [vmem:[#allocation2 + $0xa0] sm:$0xff] %v3070
        %3199 = vst [vmem:[#allocation2 + $0xa8] sm:$0xff] %v3071
        %3200 = vst [vmem:[#allocation2 + $0xb0] sm:$0xff] %v3072
        %3201 = vst [vmem:[#allocation2 + $0xb8] sm:$0xff] %v3073
        %3202 = vst [vmem:[#allocation2 + $0xc0] sm:$0xff] %v3074
        %3203 = vst [vmem:[#allocation2 + $0xc8] sm:$0xff] %v3075
        %3204 = vst [vmem:[#allocation2 + $0xd0] sm:$0xff] %v3076
        %3205 = vst [vmem:[#allocation2 + $0xd8] sm:$0xff] %v3077
        %3206 = vst [vmem:[#allocation2 + $0xe0] sm:$0xff] %v3078
        %3207 = vst [vmem:[#allocation2 + $0xe8] sm:$0xff] %v3079
        %3208 = vst [vmem:[#allocation2 + $0xf0] sm:$0xff] %v3080
        %3209 = vst [vmem:[#allocation2 + $0xf8] sm:$0xff] %v3081
        %3210 = vst [vmem:[#allocation2 + $0x100] sm:$0xff] %v3082
        %3211 = vst [vmem:[#allocation2 + $0x108] sm:$0xff] %v3083
        %3212 = vst [vmem:[#allocation2 + $0x110] sm:$0xff] %v3084
        %3213 = vst [vmem:[#allocation2 + $0x118] sm:$0xff] %v3085
        %3214 = vst [vmem:[#allocation2 + $0x120] sm:$0xff] %v3086
        %3215 = vst [vmem:[#allocation2 + $0x128] sm:$0xff] %v3087
        %3216 = vst [vmem:[#allocation2 + $0x130] sm:$0xff] %v3088
        %3217 = vst [vmem:[#allocation2 + $0x138] sm:$0xff] %v3089
        %3218 = vst [vmem:[#allocation2 + $0x140] sm:$0xff] %v3090
        %3219 = vst [vmem:[#allocation2 + $0x148] sm:$0xff] %v3091
        %3220 = vst [vmem:[#allocation2 + $0x150] sm:$0xff] %v3092
        %3221 = vst [vmem:[#allocation2 + $0x158] sm:$0xff] %v3093
        %3222 = vst [vmem:[#allocation2 + $0x160] sm:$0xff] %v3094
        %3223 = vst [vmem:[#allocation2 + $0x168] sm:$0xff] %v3095
        %3224 = vst [vmem:[#allocation2 + $0x170] sm:$0xff] %v3096
        %3225 = vst [vmem:[#allocation2 + $0x178] sm:$0xff] %v3097
        %3226 = vst [vmem:[#allocation2 + $0x180] sm:$0xff] %v3098
        %3227 = vst [vmem:[#allocation2 + $0x188] sm:$0xff] %v3099
        %3228 = vst [vmem:[#allocation2 + $0x190] sm:$0xff] %v3100
        %3229 = vst [vmem:[#allocation2 + $0x198] sm:$0xff] %v3101
        %3230 = vst [vmem:[#allocation2 + $0x1a0] sm:$0xff] %v3102
        %3231 = vst [vmem:[#allocation2 + $0x1a8] sm:$0xff] %v3103
        %3232 = vst [vmem:[#allocation2 + $0x1b0] sm:$0xff] %v3104
        %3233 = vst [vmem:[#allocation2 + $0x1b8] sm:$0xff] %v3105
        %3234 = vst [vmem:[#allocation2 + $0x1c0] sm:$0xff] %v3106
        %3235 = vst [vmem:[#allocation2 + $0x1c8] sm:$0xff] %v3107
        %3236 = vst [vmem:[#allocation2 + $0x1d0] sm:$0xff] %v3108
        %3237 = vst [vmem:[#allocation2 + $0x1d8] sm:$0xff] %v3109
        %3238 = vst [vmem:[#allocation2 + $0x1e0] sm:$0xff] %v3110
        %3239 = vst [vmem:[#allocation2 + $0x1e8] sm:$0xff] %v3111
        %3240 = vst [vmem:[#allocation2 + $0x1f0] sm:$0xff] %v3112
        %3241 = vst [vmem:[#allocation2 + $0x1f8] sm:$0xff] %v3113
        %3242 = vst [vmem:[#allocation2 + $0x200] sm:$0xff] %v3114
        %3243 = vst [vmem:[#allocation2 + $0x208] sm:$0xff] %v3115
        %3244 = vst [vmem:[#allocation2 + $0x210] sm:$0xff] %v3116
        %3245 = vst [vmem:[#allocation2 + $0x218] sm:$0xff] %v3117
        %3246 = vst [vmem:[#allocation2 + $0x220] sm:$0xff] %v3118
        %3247 = vst [vmem:[#allocation2 + $0x228] sm:$0xff] %v3119
        %3248 = vst [vmem:[#allocation2 + $0x230] sm:$0xff] %v3120
        %3249 = vst [vmem:[#allocation2 + $0x238] sm:$0xff] %v3121
        %3250 = vst [vmem:[#allocation2 + $0x240] sm:$0xff] %v3122
        %3251 = vst [vmem:[#allocation2 + $0x248] sm:$0xff] %v3123
        %3252 = vst [vmem:[#allocation2 + $0x250] sm:$0xff] %v3124
        %3253 = vst [vmem:[#allocation2 + $0x258] sm:$0xff] %v3125
        %3254 = vst [vmem:[#allocation2 + $0x260] sm:$0xff] %v3126
        %3255 = vst [vmem:[#allocation2 + $0x268] sm:$0xff] %v3127
        %3256 = vst [vmem:[#allocation2 + $0x270] sm:$0xff] %v3128
        %3257 = vst [vmem:[#allocation2 + $0x278] sm:$0xff] %v3129
        %3258 = vst [vmem:[#allocation2 + $0x280] sm:$0xff] %v3130
        %3259 = vst [vmem:[#allocation2 + $0x288] sm:$0xff] %v3131
        %3260 = vst [vmem:[#allocation2 + $0x290] sm:$0xff] %v3132
        %3261 = vst [vmem:[#allocation2 + $0x298] sm:$0xff] %v3133
        %3262 = vst [vmem:[#allocation2 + $0x2a0] sm:$0xff] %v3134
        %3263 = vst [vmem:[#allocation2 + $0x2a8] sm:$0xff] %v3135
        %3264 = vst [vmem:[#allocation2 + $0x2b0] sm:$0xff] %v3136
        %3265 = vst [vmem:[#allocation2 + $0x2b8] sm:$0xff] %v3137
        %3266 = vst [vmem:[#allocation2 + $0x2c0] sm:$0xff] %v3138
        %3267 = vst [vmem:[#allocation2 + $0x2c8] sm:$0xff] %v3139
        %3268 = vst [vmem:[#allocation2 + $0x2d0] sm:$0xff] %v3140
        %3269 = vst [vmem:[#allocation2 + $0x2d8] sm:$0xff] %v3141
        %3270 = vst [vmem:[#allocation2 + $0x2e0] sm:$0xff] %v3142
        %3271 = vst [vmem:[#allocation2 + $0x2e8] sm:$0xff] %v3143
        %3272 = vst [vmem:[#allocation2 + $0x2f0] sm:$0xff] %v3144
        %3273 = vst [vmem:[#allocation2 + $0x2f8] sm:$0xff] %v3145
        %3274 = vst [vmem:[#allocation2 + $0x300] sm:$0xff] %v3146
        %3275 = vst [vmem:[#allocation2 + $0x308] sm:$0xff] %v3147
        %3276 = vst [vmem:[#allocation2 + $0x310] sm:$0xff] %v3148
        %3277 = vst [vmem:[#allocation2 + $0x318] sm:$0xff] %v3149
        %3278 = vst [vmem:[#allocation2 + $0x320] sm:$0xff] %v3150
        %3279 = vst [vmem:[#allocation2 + $0x328] sm:$0xff] %v3151
        %3280 = vst [vmem:[#allocation2 + $0x330] sm:$0xff] %v3152
        %3281 = vst [vmem:[#allocation2 + $0x338] sm:$0xff] %v3153
        %3282 = vst [vmem:[#allocation2 + $0x340] sm:$0xff] %v3154
        %3283 = vst [vmem:[#allocation2 + $0x348] sm:$0xff] %v3155
        %3284 = vst [vmem:[#allocation2 + $0x350] sm:$0xff] %v3156
        %3285 = vst [vmem:[#allocation2 + $0x358] sm:$0xff] %v3157
        %3286 = vst [vmem:[#allocation2 + $0x360] sm:$0xff] %v3158
        %3287 = vst [vmem:[#allocation2 + $0x368] sm:$0xff] %v3159
        %3288 = vst [vmem:[#allocation2 + $0x370] sm:$0xff] %v3160
        %3289 = vst [vmem:[#allocation2 + $0x378] sm:$0xff] %v3161
        %3290 = vst [vmem:[#allocation2 + $0x380] sm:$0xff] %v3162
        %3291 = vst [vmem:[#allocation2 + $0x388] sm:$0xff] %v3163
        %3292 = vst [vmem:[#allocation2 + $0x390] sm:$0xff] %v3164
        %3293 = vst [vmem:[#allocation2 + $0x398] sm:$0xff] %v3165
        %3294 = vst [vmem:[#allocation2 + $0x3a0] sm:$0xff] %v3166
        %3295 = vst [vmem:[#allocation2 + $0x3a8] sm:$0xff] %v3167
        %3296 = vst [vmem:[#allocation2 + $0x3b0] sm:$0xff] %v3168
        %3297 = vst [vmem:[#allocation2 + $0x3b8] sm:$0xff] %v3169
        %3298 = vst [vmem:[#allocation2 + $0x3c0] sm:$0xff] %v3170
        %3299 = vst [vmem:[#allocation2 + $0x3c8] sm:$0xff] %v3171
        %3300 = vst [vmem:[#allocation2 + $0x3d0] sm:$0xff] %v3172
        %3301 = vst [vmem:[#allocation2 + $0x3d8] sm:$0xff] %v3173
        %3302 = vst [vmem:[#allocation2 + $0x3e0] sm:$0xff] %v3174
        %3303 = vst [vmem:[#allocation2 + $0x3e8] sm:$0xff] %v3175
        %3304 = vst [vmem:[#allocation2 + $0x3f0] sm:$0xff] %v3176
        %3305 = vst [vmem:[#allocation2 + $0x3f8] sm:$0xff] %v3177
        // Predicated region
        $region37: #{fused_matmul_shift.1} parent=31 // pred_check
          %p3306 = pneg %p226
        $region38: #{fused_matmul_shift.1} parent=31 // pred_check_branch
          %3308 = sbr.rel (%p3306) target = $region40
        $region39: #{fused_matmul_shift.1} parent=31 // pred_region
          %v3309 = vld [vmem:[#allocation2] sm:$0xff]
          %v3310 = vld [vmem:[#allocation2 + $0x8] sm:$0xff]
          %v3311 = vld [vmem:[#allocation2 + $0x10] sm:$0xff]
          %v3312 = vld [vmem:[#allocation2 + $0x18] sm:$0xff]
          %v3313 = vld [vmem:[#allocation2 + $0x20] sm:$0xff]
          %v3314 = vld [vmem:[#allocation2 + $0x28] sm:$0xff]
          %v3315 = vld [vmem:[#allocation2 + $0x30] sm:$0xff]
          %v3316 = vld [vmem:[#allocation2 + $0x38] sm:$0xff]
          %v3317 = vld [vmem:[#allocation2 + $0x40] sm:$0xff]
          %v3318 = vld [vmem:[#allocation2 + $0x48] sm:$0xff]
          %v3319 = vld [vmem:[#allocation2 + $0x50] sm:$0xff]
          %v3320 = vld [vmem:[#allocation2 + $0x58] sm:$0xff]
          %v3321 = vld [vmem:[#allocation2 + $0x60] sm:$0xff]
          %v3322 = vld [vmem:[#allocation2 + $0x68] sm:$0xff]
          %v3323 = vld [vmem:[#allocation2 + $0x70] sm:$0xff]
          %v3324 = vld [vmem:[#allocation2 + $0x78] sm:$0xff]
          %v3325 = vld [vmem:[#allocation2 + $0x80] sm:$0xff]
          %v3326 = vld [vmem:[#allocation2 + $0x88] sm:$0xff]
          %v3327 = vld [vmem:[#allocation2 + $0x90] sm:$0xff]
          %v3328 = vld [vmem:[#allocation2 + $0x98] sm:$0xff]
          %v3329 = vld [vmem:[#allocation2 + $0xa0] sm:$0xff]
          %v3330 = vld [vmem:[#allocation2 + $0xa8] sm:$0xff]
          %v3331 = vld [vmem:[#allocation2 + $0xb0] sm:$0xff]
          %v3332 = vld [vmem:[#allocation2 + $0xb8] sm:$0xff]
          %v3333 = vld [vmem:[#allocation2 + $0xc0] sm:$0xff]
          %v3334 = vld [vmem:[#allocation2 + $0xc8] sm:$0xff]
          %v3335 = vld [vmem:[#allocation2 + $0xd0] sm:$0xff]
          %v3336 = vld [vmem:[#allocation2 + $0xd8] sm:$0xff]
          %v3337 = vld [vmem:[#allocation2 + $0xe0] sm:$0xff]
          %v3338 = vld [vmem:[#allocation2 + $0xe8] sm:$0xff]
          %v3339 = vld [vmem:[#allocation2 + $0xf0] sm:$0xff]
          %v3340 = vld [vmem:[#allocation2 + $0xf8] sm:$0xff]
          %v3341 = vld [vmem:[#allocation2 + $0x100] sm:$0xff]
          %v3342 = vld [vmem:[#allocation2 + $0x108] sm:$0xff]
          %v3343 = vld [vmem:[#allocation2 + $0x110] sm:$0xff]
          %v3344 = vld [vmem:[#allocation2 + $0x118] sm:$0xff]
          %v3345 = vld [vmem:[#allocation2 + $0x120] sm:$0xff]
          %v3346 = vld [vmem:[#allocation2 + $0x128] sm:$0xff]
          %v3347 = vld [vmem:[#allocation2 + $0x130] sm:$0xff]
          %v3348 = vld [vmem:[#allocation2 + $0x138] sm:$0xff]
          %v3349 = vld [vmem:[#allocation2 + $0x140] sm:$0xff]
          %v3350 = vld [vmem:[#allocation2 + $0x148] sm:$0xff]
          %v3351 = vld [vmem:[#allocation2 + $0x150] sm:$0xff]
          %v3352 = vld [vmem:[#allocation2 + $0x158] sm:$0xff]
          %v3353 = vld [vmem:[#allocation2 + $0x160] sm:$0xff]
          %v3354 = vld [vmem:[#allocation2 + $0x168] sm:$0xff]
          %v3355 = vld [vmem:[#allocation2 + $0x170] sm:$0xff]
          %v3356 = vld [vmem:[#allocation2 + $0x178] sm:$0xff]
          %v3357 = vld [vmem:[#allocation2 + $0x180] sm:$0xff]
          %v3358 = vld [vmem:[#allocation2 + $0x188] sm:$0xff]
          %v3359 = vld [vmem:[#allocation2 + $0x190] sm:$0xff]
          %v3360 = vld [vmem:[#allocation2 + $0x198] sm:$0xff]
          %v3361 = vld [vmem:[#allocation2 + $0x1a0] sm:$0xff]
          %v3362 = vld [vmem:[#allocation2 + $0x1a8] sm:$0xff]
          %v3363 = vld [vmem:[#allocation2 + $0x1b0] sm:$0xff]
          %v3364 = vld [vmem:[#allocation2 + $0x1b8] sm:$0xff]
          %v3365 = vld [vmem:[#allocation2 + $0x1c0] sm:$0xff]
          %v3366 = vld [vmem:[#allocation2 + $0x1c8] sm:$0xff]
          %v3367 = vld [vmem:[#allocation2 + $0x1d0] sm:$0xff]
          %v3368 = vld [vmem:[#allocation2 + $0x1d8] sm:$0xff]
          %v3369 = vld [vmem:[#allocation2 + $0x1e0] sm:$0xff]
          %v3370 = vld [vmem:[#allocation2 + $0x1e8] sm:$0xff]
          %v3371 = vld [vmem:[#allocation2 + $0x1f0] sm:$0xff]
          %v3372 = vld [vmem:[#allocation2 + $0x1f8] sm:$0xff]
          %v3373 = vld [vmem:[#allocation2 + $0x200] sm:$0xff]
          %v3374 = vld [vmem:[#allocation2 + $0x208] sm:$0xff]
          %v3375 = vld [vmem:[#allocation2 + $0x210] sm:$0xff]
          %v3376 = vld [vmem:[#allocation2 + $0x218] sm:$0xff]
          %v3377 = vld [vmem:[#allocation2 + $0x220] sm:$0xff]
          %v3378 = vld [vmem:[#allocation2 + $0x228] sm:$0xff]
          %v3379 = vld [vmem:[#allocation2 + $0x230] sm:$0xff]
          %v3380 = vld [vmem:[#allocation2 + $0x238] sm:$0xff]
          %v3381 = vld [vmem:[#allocation2 + $0x240] sm:$0xff]
          %v3382 = vld [vmem:[#allocation2 + $0x248] sm:$0xff]
          %v3383 = vld [vmem:[#allocation2 + $0x250] sm:$0xff]
          %v3384 = vld [vmem:[#allocation2 + $0x258] sm:$0xff]
          %v3385 = vld [vmem:[#allocation2 + $0x260] sm:$0xff]
          %v3386 = vld [vmem:[#allocation2 + $0x268] sm:$0xff]
          %v3387 = vld [vmem:[#allocation2 + $0x270] sm:$0xff]
          %v3388 = vld [vmem:[#allocation2 + $0x278] sm:$0xff]
          %v3389 = vld [vmem:[#allocation2 + $0x280] sm:$0xff]
          %v3390 = vld [vmem:[#allocation2 + $0x288] sm:$0xff]
          %v3391 = vld [vmem:[#allocation2 + $0x290] sm:$0xff]
          %v3392 = vld [vmem:[#allocation2 + $0x298] sm:$0xff]
          %v3393 = vld [vmem:[#allocation2 + $0x2a0] sm:$0xff]
          %v3394 = vld [vmem:[#allocation2 + $0x2a8] sm:$0xff]
          %v3395 = vld [vmem:[#allocation2 + $0x2b0] sm:$0xff]
          %v3396 = vld [vmem:[#allocation2 + $0x2b8] sm:$0xff]
          %v3397 = vld [vmem:[#allocation2 + $0x2c0] sm:$0xff]
          %v3398 = vld [vmem:[#allocation2 + $0x2c8] sm:$0xff]
          %v3399 = vld [vmem:[#allocation2 + $0x2d0] sm:$0xff]
          %v3400 = vld [vmem:[#allocation2 + $0x2d8] sm:$0xff]
          %v3401 = vld [vmem:[#allocation2 + $0x2e0] sm:$0xff]
          %v3402 = vld [vmem:[#allocation2 + $0x2e8] sm:$0xff]
          %v3403 = vld [vmem:[#allocation2 + $0x2f0] sm:$0xff]
          %v3404 = vld [vmem:[#allocation2 + $0x2f8] sm:$0xff]
          %v3405 = vld [vmem:[#allocation2 + $0x300] sm:$0xff]
          %v3406 = vld [vmem:[#allocation2 + $0x308] sm:$0xff]
          %v3407 = vld [vmem:[#allocation2 + $0x310] sm:$0xff]
          %v3408 = vld [vmem:[#allocation2 + $0x318] sm:$0xff]
          %v3409 = vld [vmem:[#allocation2 + $0x320] sm:$0xff]
          %v3410 = vld [vmem:[#allocation2 + $0x328] sm:$0xff]
          %v3411 = vld [vmem:[#allocation2 + $0x330] sm:$0xff]
          %v3412 = vld [vmem:[#allocation2 + $0x338] sm:$0xff]
          %v3413 = vld [vmem:[#allocation2 + $0x340] sm:$0xff]
          %v3414 = vld [vmem:[#allocation2 + $0x348] sm:$0xff]
          %v3415 = vld [vmem:[#allocation2 + $0x350] sm:$0xff]
          %v3416 = vld [vmem:[#allocation2 + $0x358] sm:$0xff]
          %v3417 = vld [vmem:[#allocation2 + $0x360] sm:$0xff]
          %v3418 = vld [vmem:[#allocation2 + $0x368] sm:$0xff]
          %v3419 = vld [vmem:[#allocation2 + $0x370] sm:$0xff]
          %v3420 = vld [vmem:[#allocation2 + $0x378] sm:$0xff]
          %v3421 = vld [vmem:[#allocation2 + $0x380] sm:$0xff]
          %v3422 = vld [vmem:[#allocation2 + $0x388] sm:$0xff]
          %v3423 = vld [vmem:[#allocation2 + $0x390] sm:$0xff]
          %v3424 = vld [vmem:[#allocation2 + $0x398] sm:$0xff]
          %v3425 = vld [vmem:[#allocation2 + $0x3a0] sm:$0xff]
          %v3426 = vld [vmem:[#allocation2 + $0x3a8] sm:$0xff]
          %v3427 = vld [vmem:[#allocation2 + $0x3b0] sm:$0xff]
          %v3428 = vld [vmem:[#allocation2 + $0x3b8] sm:$0xff]
          %v3429 = vld [vmem:[#allocation2 + $0x3c0] sm:$0xff]
          %v3430 = vld [vmem:[#allocation2 + $0x3c8] sm:$0xff]
          %v3431 = vld [vmem:[#allocation2 + $0x3d0] sm:$0xff]
          %v3432 = vld [vmem:[#allocation2 + $0x3d8] sm:$0xff]
          %v3433 = vld [vmem:[#allocation2 + $0x3e0] sm:$0xff]
          %v3434 = vld [vmem:[#allocation2 + $0x3e8] sm:$0xff]
          %v3435 = vld [vmem:[#allocation2 + $0x3f0] sm:$0xff]
          %v3436 = vld [vmem:[#allocation2 + $0x3f8] sm:$0xff]
          %v3437 = vld [vmem:[%s2] sm:$0x1]
          %v3439 = vperm.slane %v3437, 0
          %v3441 = vadd.f32 %v3309, %v3439
          %v3442 = vadd.f32 %v3310, %v3439
          %v3443 = vadd.f32 %v3311, %v3439
          %v3444 = vadd.f32 %v3312, %v3439
          %v3445 = vadd.f32 %v3313, %v3439
          %v3446 = vadd.f32 %v3314, %v3439
          %v3447 = vadd.f32 %v3315, %v3439
          %v3448 = vadd.f32 %v3316, %v3439
          %v3449 = vadd.f32 %v3317, %v3439
          %v3450 = vadd.f32 %v3318, %v3439
          %v3451 = vadd.f32 %v3319, %v3439
          %v3452 = vadd.f32 %v3320, %v3439
          %v3453 = vadd.f32 %v3321, %v3439
          %v3454 = vadd.f32 %v3322, %v3439
          %v3455 = vadd.f32 %v3323, %v3439
          %v3456 = vadd.f32 %v3324, %v3439
          %v3457 = vadd.f32 %v3325, %v3439
          %v3458 = vadd.f32 %v3326, %v3439
          %v3459 = vadd.f32 %v3327, %v3439
          %v3460 = vadd.f32 %v3328, %v3439
          %v3461 = vadd.f32 %v3329, %v3439
          %v3462 = vadd.f32 %v3330, %v3439
          %v3463 = vadd.f32 %v3331, %v3439
          %v3464 = vadd.f32 %v3332, %v3439
          %v3465 = vadd.f32 %v3333, %v3439
          %v3466 = vadd.f32 %v3334, %v3439
          %v3467 = vadd.f32 %v3335, %v3439
          %v3468 = vadd.f32 %v3336, %v3439
          %v3469 = vadd.f32 %v3337, %v3439
          %v3470 = vadd.f32 %v3338, %v3439
          %v3471 = vadd.f32 %v3339, %v3439
          %v3472 = vadd.f32 %v3340, %v3439
          %v3473 = vadd.f32 %v3341, %v3439
          %v3474 = vadd.f32 %v3342, %v3439
          %v3475 = vadd.f32 %v3343, %v3439
          %v3476 = vadd.f32 %v3344, %v3439
          %v3477 = vadd.f32 %v3345, %v3439
          %v3478 = vadd.f32 %v3346, %v3439
          %v3479 = vadd.f32 %v3347, %v3439
          %v3480 = vadd.f32 %v3348, %v3439
          %v3481 = vadd.f32 %v3349, %v3439
          %v3482 = vadd.f32 %v3350, %v3439
          %v3483 = vadd.f32 %v3351, %v3439
          %v3484 = vadd.f32 %v3352, %v3439
          %v3485 = vadd.f32 %v3353, %v3439
          %v3486 = vadd.f32 %v3354, %v3439
          %v3487 = vadd.f32 %v3355, %v3439
          %v3488 = vadd.f32 %v3356, %v3439
          %v3489 = vadd.f32 %v3357, %v3439
          %v3490 = vadd.f32 %v3358, %v3439
          %v3491 = vadd.f32 %v3359, %v3439
          %v3492 = vadd.f32 %v3360, %v3439
          %v3493 = vadd.f32 %v3361, %v3439
          %v3494 = vadd.f32 %v3362, %v3439
          %v3495 = vadd.f32 %v3363, %v3439
          %v3496 = vadd.f32 %v3364, %v3439
          %v3497 = vadd.f32 %v3365, %v3439
          %v3498 = vadd.f32 %v3366, %v3439
          %v3499 = vadd.f32 %v3367, %v3439
          %v3500 = vadd.f32 %v3368, %v3439
          %v3501 = vadd.f32 %v3369, %v3439
          %v3502 = vadd.f32 %v3370, %v3439
          %v3503 = vadd.f32 %v3371, %v3439
          %v3504 = vadd.f32 %v3372, %v3439
          %v3505 = vadd.f32 %v3373, %v3439
          %v3506 = vadd.f32 %v3374, %v3439
          %v3507 = vadd.f32 %v3375, %v3439
          %v3508 = vadd.f32 %v3376, %v3439
          %v3509 = vadd.f32 %v3377, %v3439
          %v3510 = vadd.f32 %v3378, %v3439
          %v3511 = vadd.f32 %v3379, %v3439
          %v3512 = vadd.f32 %v3380, %v3439
          %v3513 = vadd.f32 %v3381, %v3439
          %v3514 = vadd.f32 %v3382, %v3439
          %v3515 = vadd.f32 %v3383, %v3439
          %v3516 = vadd.f32 %v3384, %v3439
          %v3517 = vadd.f32 %v3385, %v3439
          %v3518 = vadd.f32 %v3386, %v3439
          %v3519 = vadd.f32 %v3387, %v3439
          %v3520 = vadd.f32 %v3388, %v3439
          %v3521 = vadd.f32 %v3389, %v3439
          %v3522 = vadd.f32 %v3390, %v3439
          %v3523 = vadd.f32 %v3391, %v3439
          %v3524 = vadd.f32 %v3392, %v3439
          %v3525 = vadd.f32 %v3393, %v3439
          %v3526 = vadd.f32 %v3394, %v3439
          %v3527 = vadd.f32 %v3395, %v3439
          %v3528 = vadd.f32 %v3396, %v3439
          %v3529 = vadd.f32 %v3397, %v3439
          %v3530 = vadd.f32 %v3398, %v3439
          %v3531 = vadd.f32 %v3399, %v3439
          %v3532 = vadd.f32 %v3400, %v3439
          %v3533 = vadd.f32 %v3401, %v3439
          %v3534 = vadd.f32 %v3402, %v3439
          %v3535 = vadd.f32 %v3403, %v3439
          %v3536 = vadd.f32 %v3404, %v3439
          %v3537 = vadd.f32 %v3405, %v3439
          %v3538 = vadd.f32 %v3406, %v3439
          %v3539 = vadd.f32 %v3407, %v3439
          %v3540 = vadd.f32 %v3408, %v3439
          %v3541 = vadd.f32 %v3409, %v3439
          %v3542 = vadd.f32 %v3410, %v3439
          %v3543 = vadd.f32 %v3411, %v3439
          %v3544 = vadd.f32 %v3412, %v3439
          %v3545 = vadd.f32 %v3413, %v3439
          %v3546 = vadd.f32 %v3414, %v3439
          %v3547 = vadd.f32 %v3415, %v3439
          %v3548 = vadd.f32 %v3416, %v3439
          %v3549 = vadd.f32 %v3417, %v3439
          %v3550 = vadd.f32 %v3418, %v3439
          %v3551 = vadd.f32 %v3419, %v3439
          %v3552 = vadd.f32 %v3420, %v3439
          %v3553 = vadd.f32 %v3421, %v3439
          %v3554 = vadd.f32 %v3422, %v3439
          %v3555 = vadd.f32 %v3423, %v3439
          %v3556 = vadd.f32 %v3424, %v3439
          %v3557 = vadd.f32 %v3425, %v3439
          %v3558 = vadd.f32 %v3426, %v3439
          %v3559 = vadd.f32 %v3427, %v3439
          %v3560 = vadd.f32 %v3428, %v3439
          %v3561 = vadd.f32 %v3429, %v3439
          %v3562 = vadd.f32 %v3430, %v3439
          %v3563 = vadd.f32 %v3431, %v3439
          %v3564 = vadd.f32 %v3432, %v3439
          %v3565 = vadd.f32 %v3433, %v3439
          %v3566 = vadd.f32 %v3434, %v3439
          %v3567 = vadd.f32 %v3435, %v3439
          %v3568 = vadd.f32 %v3436, %v3439
          %v3569 = vmax.f32 %v3441, 0.0
          %v3570 = vmax.f32 %v3442, 0.0
          %v3571 = vmax.f32 %v3443, 0.0
          %v3572 = vmax.f32 %v3444, 0.0
          %v3573 = vmax.f32 %v3445, 0.0
          %v3574 = vmax.f32 %v3446, 0.0
          %v3575 = vmax.f32 %v3447, 0.0
          %v3576 = vmax.f32 %v3448, 0.0
          %v3577 = vmax.f32 %v3449, 0.0
          %v3578 = vmax.f32 %v3450, 0.0
          %v3579 = vmax.f32 %v3451, 0.0
          %v3580 = vmax.f32 %v3452, 0.0
          %v3581 = vmax.f32 %v3453, 0.0
          %v3582 = vmax.f32 %v3454, 0.0
          %v3583 = vmax.f32 %v3455, 0.0
          %v3584 = vmax.f32 %v3456, 0.0
          %v3585 = vmax.f32 %v3457, 0.0
          %v3586 = vmax.f32 %v3458, 0.0
          %v3587 = vmax.f32 %v3459, 0.0
          %v3588 = vmax.f32 %v3460, 0.0
          %v3589 = vmax.f32 %v3461, 0.0
          %v3590 = vmax.f32 %v3462, 0.0
          %v3591 = vmax.f32 %v3463, 0.0
          %v3592 = vmax.f32 %v3464, 0.0
          %v3593 = vmax.f32 %v3465, 0.0
          %v3594 = vmax.f32 %v3466, 0.0
          %v3595 = vmax.f32 %v3467, 0.0
          %v3596 = vmax.f32 %v3468, 0.0
          %v3597 = vmax.f32 %v3469, 0.0
          %v3598 = vmax.f32 %v3470, 0.0
          %v3599 = vmax.f32 %v3471, 0.0
          %v3600 = vmax.f32 %v3472, 0.0
          %v3601 = vmax.f32 %v3473, 0.0
          %v3602 = vmax.f32 %v3474, 0.0
          %v3603 = vmax.f32 %v3475, 0.0
          %v3604 = vmax.f32 %v3476, 0.0
          %v3605 = vmax.f32 %v3477, 0.0
          %v3606 = vmax.f32 %v3478, 0.0
          %v3607 = vmax.f32 %v3479, 0.0
          %v3608 = vmax.f32 %v3480, 0.0
          %v3609 = vmax.f32 %v3481, 0.0
          %v3610 = vmax.f32 %v3482, 0.0
          %v3611 = vmax.f32 %v3483, 0.0
          %v3612 = vmax.f32 %v3484, 0.0
          %v3613 = vmax.f32 %v3485, 0.0
          %v3614 = vmax.f32 %v3486, 0.0
          %v3615 = vmax.f32 %v3487, 0.0
          %v3616 = vmax.f32 %v3488, 0.0
          %v3617 = vmax.f32 %v3489, 0.0
          %v3618 = vmax.f32 %v3490, 0.0
          %v3619 = vmax.f32 %v3491, 0.0
          %v3620 = vmax.f32 %v3492, 0.0
          %v3621 = vmax.f32 %v3493, 0.0
          %v3622 = vmax.f32 %v3494, 0.0
          %v3623 = vmax.f32 %v3495, 0.0
          %v3624 = vmax.f32 %v3496, 0.0
          %v3625 = vmax.f32 %v3497, 0.0
          %v3626 = vmax.f32 %v3498, 0.0
          %v3627 = vmax.f32 %v3499, 0.0
          %v3628 = vmax.f32 %v3500, 0.0
          %v3629 = vmax.f32 %v3501, 0.0
          %v3630 = vmax.f32 %v3502, 0.0
          %v3631 = vmax.f32 %v3503, 0.0
          %v3632 = vmax.f32 %v3504, 0.0
          %v3633 = vmax.f32 %v3505, 0.0
          %v3634 = vmax.f32 %v3506, 0.0
          %v3635 = vmax.f32 %v3507, 0.0
          %v3636 = vmax.f32 %v3508, 0.0
          %v3637 = vmax.f32 %v3509, 0.0
          %v3638 = vmax.f32 %v3510, 0.0
          %v3639 = vmax.f32 %v3511, 0.0
          %v3640 = vmax.f32 %v3512, 0.0
          %v3641 = vmax.f32 %v3513, 0.0
          %v3642 = vmax.f32 %v3514, 0.0
          %v3643 = vmax.f32 %v3515, 0.0
          %v3644 = vmax.f32 %v3516, 0.0
          %v3645 = vmax.f32 %v3517, 0.0
          %v3646 = vmax.f32 %v3518, 0.0
          %v3647 = vmax.f32 %v3519, 0.0
          %v3648 = vmax.f32 %v3520, 0.0
          %v3649 = vmax.f32 %v3521, 0.0
          %v3650 = vmax.f32 %v3522, 0.0
          %v3651 = vmax.f32 %v3523, 0.0
          %v3652 = vmax.f32 %v3524, 0.0
          %v3653 = vmax.f32 %v3525, 0.0
          %v3654 = vmax.f32 %v3526, 0.0
          %v3655 = vmax.f32 %v3527, 0.0
          %v3656 = vmax.f32 %v3528, 0.0
          %v3657 = vmax.f32 %v3529, 0.0
          %v3658 = vmax.f32 %v3530, 0.0
          %v3659 = vmax.f32 %v3531, 0.0
          %v3660 = vmax.f32 %v3532, 0.0
          %v3661 = vmax.f32 %v3533, 0.0
          %v3662 = vmax.f32 %v3534, 0.0
          %v3663 = vmax.f32 %v3535, 0.0
          %v3664 = vmax.f32 %v3536, 0.0
          %v3665 = vmax.f32 %v3537, 0.0
          %v3666 = vmax.f32 %v3538, 0.0
          %v3667 = vmax.f32 %v3539, 0.0
          %v3668 = vmax.f32 %v3540, 0.0
          %v3669 = vmax.f32 %v3541, 0.0
          %v3670 = vmax.f32 %v3542, 0.0
          %v3671 = vmax.f32 %v3543, 0.0
          %v3672 = vmax.f32 %v3544, 0.0
          %v3673 = vmax.f32 %v3545, 0.0
          %v3674 = vmax.f32 %v3546, 0.0
          %v3675 = vmax.f32 %v3547, 0.0
          %v3676 = vmax.f32 %v3548, 0.0
          %v3677 = vmax.f32 %v3549, 0.0
          %v3678 = vmax.f32 %v3550, 0.0
          %v3679 = vmax.f32 %v3551, 0.0
          %v3680 = vmax.f32 %v3552, 0.0
          %v3681 = vmax.f32 %v3553, 0.0
          %v3682 = vmax.f32 %v3554, 0.0
          %v3683 = vmax.f32 %v3555, 0.0
          %v3684 = vmax.f32 %v3556, 0.0
          %v3685 = vmax.f32 %v3557, 0.0
          %v3686 = vmax.f32 %v3558, 0.0
          %v3687 = vmax.f32 %v3559, 0.0
          %v3688 = vmax.f32 %v3560, 0.0
          %v3689 = vmax.f32 %v3561, 0.0
          %v3690 = vmax.f32 %v3562, 0.0
          %v3691 = vmax.f32 %v3563, 0.0
          %v3692 = vmax.f32 %v3564, 0.0
          %v3693 = vmax.f32 %v3565, 0.0
          %v3694 = vmax.f32 %v3566, 0.0
          %v3695 = vmax.f32 %v3567, 0.0
          %v3696 = vmax.f32 %v3568, 0.0
          %v3697 = vpack.c.bf16 %v3569, %v3569
          %v3698 = vpack.c.bf16 %v3570, %v3570
          %v3699 = vpack.c.bf16 %v3571, %v3571
          %v3700 = vpack.c.bf16 %v3572, %v3572
          %v3701 = vpack.c.bf16 %v3573, %v3573
          %v3702 = vpack.c.bf16 %v3574, %v3574
          %v3703 = vpack.c.bf16 %v3575, %v3575
          %v3704 = vpack.c.bf16 %v3576, %v3576
          %v3705 = vpack.c.bf16 %v3577, %v3577
          %v3706 = vpack.c.bf16 %v3578, %v3578
          %v3707 = vpack.c.bf16 %v3579, %v3579
          %v3708 = vpack.c.bf16 %v3580, %v3580
          %v3709 = vpack.c.bf16 %v3581, %v3581
          %v3710 = vpack.c.bf16 %v3582, %v3582
          %v3711 = vpack.c.bf16 %v3583, %v3583
          %v3712 = vpack.c.bf16 %v3584, %v3584
          %v3713 = vpack.c.bf16 %v3585, %v3585
          %v3714 = vpack.c.bf16 %v3586, %v3586
          %v3715 = vpack.c.bf16 %v3587, %v3587
          %v3716 = vpack.c.bf16 %v3588, %v3588
          %v3717 = vpack.c.bf16 %v3589, %v3589
          %v3718 = vpack.c.bf16 %v3590, %v3590
          %v3719 = vpack.c.bf16 %v3591, %v3591
          %v3720 = vpack.c.bf16 %v3592, %v3592
          %v3721 = vpack.c.bf16 %v3593, %v3593
          %v3722 = vpack.c.bf16 %v3594, %v3594
          %v3723 = vpack.c.bf16 %v3595, %v3595
          %v3724 = vpack.c.bf16 %v3596, %v3596
          %v3725 = vpack.c.bf16 %v3597, %v3597
          %v3726 = vpack.c.bf16 %v3598, %v3598
          %v3727 = vpack.c.bf16 %v3599, %v3599
          %v3728 = vpack.c.bf16 %v3600, %v3600
          %v3729 = vpack.c.bf16 %v3601, %v3601
          %v3730 = vpack.c.bf16 %v3602, %v3602
          %v3731 = vpack.c.bf16 %v3603, %v3603
          %v3732 = vpack.c.bf16 %v3604, %v3604
          %v3733 = vpack.c.bf16 %v3605, %v3605
          %v3734 = vpack.c.bf16 %v3606, %v3606
          %v3735 = vpack.c.bf16 %v3607, %v3607
          %v3736 = vpack.c.bf16 %v3608, %v3608
          %v3737 = vpack.c.bf16 %v3609, %v3609
          %v3738 = vpack.c.bf16 %v3610, %v3610
          %v3739 = vpack.c.bf16 %v3611, %v3611
          %v3740 = vpack.c.bf16 %v3612, %v3612
          %v3741 = vpack.c.bf16 %v3613, %v3613
          %v3742 = vpack.c.bf16 %v3614, %v3614
          %v3743 = vpack.c.bf16 %v3615, %v3615
          %v3744 = vpack.c.bf16 %v3616, %v3616
          %v3745 = vpack.c.bf16 %v3617, %v3617
          %v3746 = vpack.c.bf16 %v3618, %v3618
          %v3747 = vpack.c.bf16 %v3619, %v3619
          %v3748 = vpack.c.bf16 %v3620, %v3620
          %v3749 = vpack.c.bf16 %v3621, %v3621
          %v3750 = vpack.c.bf16 %v3622, %v3622
          %v3751 = vpack.c.bf16 %v3623, %v3623
          %v3752 = vpack.c.bf16 %v3624, %v3624
          %v3753 = vpack.c.bf16 %v3625, %v3625
          %v3754 = vpack.c.bf16 %v3626, %v3626
          %v3755 = vpack.c.bf16 %v3627, %v3627
          %v3756 = vpack.c.bf16 %v3628, %v3628
          %v3757 = vpack.c.bf16 %v3629, %v3629
          %v3758 = vpack.c.bf16 %v3630, %v3630
          %v3759 = vpack.c.bf16 %v3631, %v3631
          %v3760 = vpack.c.bf16 %v3632, %v3632
          %v3761 = vpack.c.bf16 %v3633, %v3633
          %v3762 = vpack.c.bf16 %v3634, %v3634
          %v3763 = vpack.c.bf16 %v3635, %v3635
          %v3764 = vpack.c.bf16 %v3636, %v3636
          %v3765 = vpack.c.bf16 %v3637, %v3637
          %v3766 = vpack.c.bf16 %v3638, %v3638
          %v3767 = vpack.c.bf16 %v3639, %v3639
          %v3768 = vpack.c.bf16 %v3640, %v3640
          %v3769 = vpack.c.bf16 %v3641, %v3641
          %v3770 = vpack.c.bf16 %v3642, %v3642
          %v3771 = vpack.c.bf16 %v3643, %v3643
          %v3772 = vpack.c.bf16 %v3644, %v3644
          %v3773 = vpack.c.bf16 %v3645, %v3645
          %v3774 = vpack.c.bf16 %v3646, %v3646
          %v3775 = vpack.c.bf16 %v3647, %v3647
          %v3776 = vpack.c.bf16 %v3648, %v3648
          %v3777 = vpack.c.bf16 %v3649, %v3649
          %v3778 = vpack.c.bf16 %v3650, %v3650
          %v3779 = vpack.c.bf16 %v3651, %v3651
          %v3780 = vpack.c.bf16 %v3652, %v3652
          %v3781 = vpack.c.bf16 %v3653, %v3653
          %v3782 = vpack.c.bf16 %v3654, %v3654
          %v3783 = vpack.c.bf16 %v3655, %v3655
          %v3784 = vpack.c.bf16 %v3656, %v3656
          %v3785 = vpack.c.bf16 %v3657, %v3657
          %v3786 = vpack.c.bf16 %v3658, %v3658
          %v3787 = vpack.c.bf16 %v3659, %v3659
          %v3788 = vpack.c.bf16 %v3660, %v3660
          %v3789 = vpack.c.bf16 %v3661, %v3661
          %v3790 = vpack.c.bf16 %v3662, %v3662
          %v3791 = vpack.c.bf16 %v3663, %v3663
          %v3792 = vpack.c.bf16 %v3664, %v3664
          %v3793 = vpack.c.bf16 %v3665, %v3665
          %v3794 = vpack.c.bf16 %v3666, %v3666
          %v3795 = vpack.c.bf16 %v3667, %v3667
          %v3796 = vpack.c.bf16 %v3668, %v3668
          %v3797 = vpack.c.bf16 %v3669, %v3669
          %v3798 = vpack.c.bf16 %v3670, %v3670
          %v3799 = vpack.c.bf16 %v3671, %v3671
          %v3800 = vpack.c.bf16 %v3672, %v3672
          %v3801 = vpack.c.bf16 %v3673, %v3673
          %v3802 = vpack.c.bf16 %v3674, %v3674
          %v3803 = vpack.c.bf16 %v3675, %v3675
          %v3804 = vpack.c.bf16 %v3676, %v3676
          %v3805 = vpack.c.bf16 %v3677, %v3677
          %v3806 = vpack.c.bf16 %v3678, %v3678
          %v3807 = vpack.c.bf16 %v3679, %v3679
          %v3808 = vpack.c.bf16 %v3680, %v3680
          %v3809 = vpack.c.bf16 %v3681, %v3681
          %v3810 = vpack.c.bf16 %v3682, %v3682
          %v3811 = vpack.c.bf16 %v3683, %v3683
          %v3812 = vpack.c.bf16 %v3684, %v3684
          %v3813 = vpack.c.bf16 %v3685, %v3685
          %v3814 = vpack.c.bf16 %v3686, %v3686
          %v3815 = vpack.c.bf16 %v3687, %v3687
          %v3816 = vpack.c.bf16 %v3688, %v3688
          %v3817 = vpack.c.bf16 %v3689, %v3689
          %v3818 = vpack.c.bf16 %v3690, %v3690
          %v3819 = vpack.c.bf16 %v3691, %v3691
          %v3820 = vpack.c.bf16 %v3692, %v3692
          %v3821 = vpack.c.bf16 %v3693, %v3693
          %v3822 = vpack.c.bf16 %v3694, %v3694
          %v3823 = vpack.c.bf16 %v3695, %v3695
          %v3824 = vpack.c.bf16 %v3696, %v3696
          %3825 = vst [vmem:[%s205] sm:$0xf] %v3697
          %3826 = vst [vmem:[%s205 + $0x4] sm:$0xf] %v3698
          %3827 = vst [vmem:[%s205 + $0x8] sm:$0xf] %v3699
          %3828 = vst [vmem:[%s205 + $0xc] sm:$0xf] %v3700
          %3829 = vst [vmem:[%s205 + $0x10] sm:$0xf] %v3701
          %3830 = vst [vmem:[%s205 + $0x14] sm:$0xf] %v3702
          %3831 = vst [vmem:[%s205 + $0x18] sm:$0xf] %v3703
          %3832 = vst [vmem:[%s205 + $0x1c] sm:$0xf] %v3704
          %3833 = vst [vmem:[%s205 + $0x20] sm:$0xf] %v3705
          %3834 = vst [vmem:[%s205 + $0x24] sm:$0xf] %v3706
          %3835 = vst [vmem:[%s205 + $0x28] sm:$0xf] %v3707
          %3836 = vst [vmem:[%s205 + $0x2c] sm:$0xf] %v3708
          %3837 = vst [vmem:[%s205 + $0x30] sm:$0xf] %v3709
          %3838 = vst [vmem:[%s205 + $0x34] sm:$0xf] %v3710
          %3839 = vst [vmem:[%s205 + $0x38] sm:$0xf] %v3711
          %3840 = vst [vmem:[%s205 + $0x3c] sm:$0xf] %v3712
          %3841 = vst [vmem:[%s205 + $0x40] sm:$0xf] %v3713
          %3842 = vst [vmem:[%s205 + $0x44] sm:$0xf] %v3714
          %3843 = vst [vmem:[%s205 + $0x48] sm:$0xf] %v3715
          %3844 = vst [vmem:[%s205 + $0x4c] sm:$0xf] %v3716
          %3845 = vst [vmem:[%s205 + $0x50] sm:$0xf] %v3717
          %3846 = vst [vmem:[%s205 + $0x54] sm:$0xf] %v3718
          %3847 = vst [vmem:[%s205 + $0x58] sm:$0xf] %v3719
          %3848 = vst [vmem:[%s205 + $0x5c] sm:$0xf] %v3720
          %3849 = vst [vmem:[%s205 + $0x60] sm:$0xf] %v3721
          %3850 = vst [vmem:[%s205 + $0x64] sm:$0xf] %v3722
          %3851 = vst [vmem:[%s205 + $0x68] sm:$0xf] %v3723
          %3852 = vst [vmem:[%s205 + $0x6c] sm:$0xf] %v3724
          %3853 = vst [vmem:[%s205 + $0x70] sm:$0xf] %v3725
          %3854 = vst [vmem:[%s205 + $0x74] sm:$0xf] %v3726
          %3855 = vst [vmem:[%s205 + $0x78] sm:$0xf] %v3727
          %3856 = vst [vmem:[%s205 + $0x7c] sm:$0xf] %v3728
          %3857 = vst [vmem:[%s205 + $0x80] sm:$0xf] %v3729
          %3858 = vst [vmem:[%s205 + $0x84] sm:$0xf] %v3730
          %3859 = vst [vmem:[%s205 + $0x88] sm:$0xf] %v3731
          %3860 = vst [vmem:[%s205 + $0x8c] sm:$0xf] %v3732
          %3861 = vst [vmem:[%s205 + $0x90] sm:$0xf] %v3733
          %3862 = vst [vmem:[%s205 + $0x94] sm:$0xf] %v3734
          %3863 = vst [vmem:[%s205 + $0x98] sm:$0xf] %v3735
          %3864 = vst [vmem:[%s205 + $0x9c] sm:$0xf] %v3736
          %3865 = vst [vmem:[%s205 + $0xa0] sm:$0xf] %v3737
          %3866 = vst [vmem:[%s205 + $0xa4] sm:$0xf] %v3738
          %3867 = vst [vmem:[%s205 + $0xa8] sm:$0xf] %v3739
          %3868 = vst [vmem:[%s205 + $0xac] sm:$0xf] %v3740
          %3869 = vst [vmem:[%s205 + $0xb0] sm:$0xf] %v3741
          %3870 = vst [vmem:[%s205 + $0xb4] sm:$0xf] %v3742
          %3871 = vst [vmem:[%s205 + $0xb8] sm:$0xf] %v3743
          %3872 = vst [vmem:[%s205 + $0xbc] sm:$0xf] %v3744
          %3873 = vst [vmem:[%s205 + $0xc0] sm:$0xf] %v3745
          %3874 = vst [vmem:[%s205 + $0xc4] sm:$0xf] %v3746
          %3875 = vst [vmem:[%s205 + $0xc8] sm:$0xf] %v3747
          %3876 = vst [vmem:[%s205 + $0xcc] sm:$0xf] %v3748
          %3877 = vst [vmem:[%s205 + $0xd0] sm:$0xf] %v3749
          %3878 = vst [vmem:[%s205 + $0xd4] sm:$0xf] %v3750
          %3879 = vst [vmem:[%s205 + $0xd8] sm:$0xf] %v3751
          %3880 = vst [vmem:[%s205 + $0xdc] sm:$0xf] %v3752
          %3881 = vst [vmem:[%s205 + $0xe0] sm:$0xf] %v3753
          %3882 = vst [vmem:[%s205 + $0xe4] sm:$0xf] %v3754
          %3883 = vst [vmem:[%s205 + $0xe8] sm:$0xf] %v3755
          %3884 = vst [vmem:[%s205 + $0xec] sm:$0xf] %v3756
          %3885 = vst [vmem:[%s205 + $0xf0] sm:$0xf] %v3757
          %3886 = vst [vmem:[%s205 + $0xf4] sm:$0xf] %v3758
          %3887 = vst [vmem:[%s205 + $0xf8] sm:$0xf] %v3759
          %3888 = vst [vmem:[%s205 + $0xfc] sm:$0xf] %v3760
          %3889 = vst [vmem:[%s205 + $0x100] sm:$0xf] %v3761
          %3890 = vst [vmem:[%s205 + $0x104] sm:$0xf] %v3762
          %3891 = vst [vmem:[%s205 + $0x108] sm:$0xf] %v3763
          %3892 = vst [vmem:[%s205 + $0x10c] sm:$0xf] %v3764
          %3893 = vst [vmem:[%s205 + $0x110] sm:$0xf] %v3765
          %3894 = vst [vmem:[%s205 + $0x114] sm:$0xf] %v3766
          %3895 = vst [vmem:[%s205 + $0x118] sm:$0xf] %v3767
          %3896 = vst [vmem:[%s205 + $0x11c] sm:$0xf] %v3768
          %3897 = vst [vmem:[%s205 + $0x120] sm:$0xf] %v3769
          %3898 = vst [vmem:[%s205 + $0x124] sm:$0xf] %v3770
          %3899 = vst [vmem:[%s205 + $0x128] sm:$0xf] %v3771
          %3900 = vst [vmem:[%s205 + $0x12c] sm:$0xf] %v3772
          %3901 = vst [vmem:[%s205 + $0x130] sm:$0xf] %v3773
          %3902 = vst [vmem:[%s205 + $0x134] sm:$0xf] %v3774
          %3903 = vst [vmem:[%s205 + $0x138] sm:$0xf] %v3775
          %3904 = vst [vmem:[%s205 + $0x13c] sm:$0xf] %v3776
          %3905 = vst [vmem:[%s205 + $0x140] sm:$0xf] %v3777
          %3906 = vst [vmem:[%s205 + $0x144] sm:$0xf] %v3778
          %3907 = vst [vmem:[%s205 + $0x148] sm:$0xf] %v3779
          %3908 = vst [vmem:[%s205 + $0x14c] sm:$0xf] %v3780
          %3909 = vst [vmem:[%s205 + $0x150] sm:$0xf] %v3781
          %3910 = vst [vmem:[%s205 + $0x154] sm:$0xf] %v3782
          %3911 = vst [vmem:[%s205 + $0x158] sm:$0xf] %v3783
          %3912 = vst [vmem:[%s205 + $0x15c] sm:$0xf] %v3784
          %3913 = vst [vmem:[%s205 + $0x160] sm:$0xf] %v3785
          %3914 = vst [vmem:[%s205 + $0x164] sm:$0xf] %v3786
          %3915 = vst [vmem:[%s205 + $0x168] sm:$0xf] %v3787
          %3916 = vst [vmem:[%s205 + $0x16c] sm:$0xf] %v3788
          %3917 = vst [vmem:[%s205 + $0x170] sm:$0xf] %v3789
          %3918 = vst [vmem:[%s205 + $0x174] sm:$0xf] %v3790
          %3919 = vst [vmem:[%s205 + $0x178] sm:$0xf] %v3791
          %3920 = vst [vmem:[%s205 + $0x17c] sm:$0xf] %v3792
          %3921 = vst [vmem:[%s205 + $0x180] sm:$0xf] %v3793
          %3922 = vst [vmem:[%s205 + $0x184] sm:$0xf] %v3794
          %3923 = vst [vmem:[%s205 + $0x188] sm:$0xf] %v3795
          %3924 = vst [vmem:[%s205 + $0x18c] sm:$0xf] %v3796
          %3925 = vst [vmem:[%s205 + $0x190] sm:$0xf] %v3797
          %3926 = vst [vmem:[%s205 + $0x194] sm:$0xf] %v3798
          %3927 = vst [vmem:[%s205 + $0x198] sm:$0xf] %v3799
          %3928 = vst [vmem:[%s205 + $0x19c] sm:$0xf] %v3800
          %3929 = vst [vmem:[%s205 + $0x1a0] sm:$0xf] %v3801
          %3930 = vst [vmem:[%s205 + $0x1a4] sm:$0xf] %v3802
          %3931 = vst [vmem:[%s205 + $0x1a8] sm:$0xf] %v3803
          %3932 = vst [vmem:[%s205 + $0x1ac] sm:$0xf] %v3804
          %3933 = vst [vmem:[%s205 + $0x1b0] sm:$0xf] %v3805
          %3934 = vst [vmem:[%s205 + $0x1b4] sm:$0xf] %v3806
          %3935 = vst [vmem:[%s205 + $0x1b8] sm:$0xf] %v3807
          %3936 = vst [vmem:[%s205 + $0x1bc] sm:$0xf] %v3808
          %3937 = vst [vmem:[%s205 + $0x1c0] sm:$0xf] %v3809
          %3938 = vst [vmem:[%s205 + $0x1c4] sm:$0xf] %v3810
          %3939 = vst [vmem:[%s205 + $0x1c8] sm:$0xf] %v3811
          %3940 = vst [vmem:[%s205 + $0x1cc] sm:$0xf] %v3812
          %3941 = vst [vmem:[%s205 + $0x1d0] sm:$0xf] %v3813
          %3942 = vst [vmem:[%s205 + $0x1d4] sm:$0xf] %v3814
          %3943 = vst [vmem:[%s205 + $0x1d8] sm:$0xf] %v3815
          %3944 = vst [vmem:[%s205 + $0x1dc] sm:$0xf] %v3816
          %3945 = vst [vmem:[%s205 + $0x1e0] sm:$0xf] %v3817
          %3946 = vst [vmem:[%s205 + $0x1e4] sm:$0xf] %v3818
          %3947 = vst [vmem:[%s205 + $0x1e8] sm:$0xf] %v3819
          %3948 = vst [vmem:[%s205 + $0x1ec] sm:$0xf] %v3820
          %3949 = vst [vmem:[%s205 + $0x1f0] sm:$0xf] %v3821
          %3950 = vst [vmem:[%s205 + $0x1f4] sm:$0xf] %v3822
          %3951 = vst [vmem:[%s205 + $0x1f8] sm:$0xf] %v3823
          %3952 = vst [vmem:[%s205 + $0x1fc] sm:$0xf] %v3824
        $region40: #{fused_matmul_shift.1} parent=31 // pred_fallthru
          _
        %s3953 = sand.u32 %s112, 1
        %s3954 = scalar_lea.sflag [#allocation4], %s3953
        %s3955 = sand.u32 %s112, 1
        %s3956 = smul.addr %s3955, 512
        %s3957 = scalar_lea.vmem [#allocation3], %s3956
        // Predicated region
        $region41: #{fused_matmul_shift.1} parent=31 // pred_check
          %p3958 = pneg %p122
        $region42: #{fused_matmul_shift.1} parent=31 // pred_check_branch
          %3960 = sbr.rel (%p3958) target = $region44
        $region43: #{fused_matmul_shift.1} parent=31 // pred_region
          %s3961 = smul.u32 128, %s21
          %3963 = vsyncadd %s3954, 0
          %s3964 = smul.addr %s3961, 4
          %s3965 = scalar_lea.hbm %s3, %s3964
          %s3966 = sshll.u32 %s3957, 4
          %s3967 = int_to_ptr.vmem [resolvable:$true] %s3966
          %s3968 = sshll.u32 %s3965, 4
          %s3969 = int_to_ptr.hbm [resolvable:$true] %s3968
          %3974 = dma.vmem_to_hbm [thread:$0]  %s3967, 8192, %s3969, %s3954, 64, 64, 4
        $region44: #{fused_matmul_shift.1} parent=31 // pred_fallthru
          _
      $region32: #{fused_matmul_shift.1} parent=5 // pred_fallthru
        _
      %p3975 = scmp.le.s32.totalorder 2, %s12
      // Predicated region
      $region45: #{fused_matmul_shift.1} parent=5 // pred_check
        %p3976 = pneg %p3975
      $region46: #{fused_matmul_shift.1} parent=5 // pred_check_branch
        %3978 = sbr.rel (%p3976) target = $region48
      $region47: #{fused_matmul_shift.1} parent=5 // pred_region
        %s3979 = ssub.s32 %s12, 2
        // Predicated region
        $region49: #{fused_matmul_shift.1} parent=47 // pred_check
          %p3980 = pneg %p128
        $region50: #{fused_matmul_shift.1} parent=47 // pred_check_branch
          %3982 = sbr.rel (%p3980) target = $region52
        $region51: #{fused_matmul_shift.1} parent=47 // pred_region
          %s3983 = sand.u32 %s113, 1
          %s3984 = scalar_lea.sflag [#allocation4], %s3983
          %s3985 = sand.u32 %s113, 1
          %s3986 = smul.addr %s3985, 512
          %s3987 = scalar_lea.vmem [#allocation3], %s3986
          %3989 = dma.done %s3984, 8192
        $region52: #{fused_matmul_shift.1} parent=47 // pred_fallthru
          _
      $region48: #{fused_matmul_shift.1} parent=5 // pred_fallthru
        _
    $region6: #{fused_matmul_shift.1} parent=1 // loop_footer
      %s16 = sadd.s32 1, %s12
    $region7: #{fused_matmul_shift.1} parent=1 // loop_footer_branch
      %11 = sbr.rel target = $region3
    $region8: #{fused_matmul_shift.1} parent=1 // loop_exit
      _
    %3990 = vsyncpa [#allocation4], 1
    %s3991 = scalar_lea.sflag [#allocation4], 1
    %3992 = vsyncpa %s3991, 1

</llo_original>
